<compile_context>
chip_gen: v6e
topology: v6e:2x2x1
jax: 0.10.0
libtpu: 0.0.40
codegen_flags: <defaults>
</compile_context>

<pallas_src>
import math
from functools import partial

import jax
import jax.numpy as jnp
from jax.experimental import pallas as pl
from jax.experimental.pallas import tpu as pltpu

# ----------------------- small deterministic config -----------------------
B, S = 2, 4                      # batch, number of timesteps (context length)
IMG_C, IMG_H, IMG_W = 3, 16, 16  # small stand-in for the (3, 1024, 768) frames
VIT_DIM = 64                     # stand-in for state_encoder.vit.embed_dim
N_EMBD = 32
N_HEAD = 4
N_LAYER = 2
VOCAB = 16
BLOCK_SIZE = 3 * S
MAX_TIMESTEP = 20
T_TRUE = 3 * S - 1               # token stream length (reward_conditioned, targets=None) = 11
HS = N_EMBD // N_HEAD            # true head size = 8

# lane/sublane-dense padded sizes
C_PAD = 128                      # n_embd padded to a full lane width
QKV_GRP = 128                    # Q / K / V each packed (all heads) into ONE 128-lane group
HID = 4 * N_EMBD                 # 128 -> already lane dense
VOCAB_PAD = 128
VIT_PAD = 128
T_PAD = 16                       # sequence padded to a sublane multiple
VIT_K = IMG_C * IMG_H * IMG_W    # 768


# ----------------------------- in-kernel math ------------------------------
def _gelu_tanh(x):
    # tanh-approx GELU (EUP tanh instead of a rational-erf VALU chain)
    return 0.5 * x * (1.0 + jnp.tanh(0.7978845608028654 * (x + 0.044715 * x * x * x)))


def _layernorm_masked(x, w, b, lane_msk, n_true, eps=1e-5):
    # LayerNorm over the first `n_true` lanes of a lane-padded tensor.
    # Relies on pad lanes of x being exactly zero (maintained by zero-padded weights).
    mu = jnp.sum(x, axis=-1, keepdims=True) * (1.0 / n_true)
    diff = jnp.where(lane_msk, x - mu, 0.0)
    var = jnp.sum(diff * diff, axis=-1, keepdims=True) * (1.0 / n_true)
    return diff * jax.lax.rsqrt(var + eps) * w + b


# --------------------- state encoder (ViT proxy + fc) kernel ----------------
def _state_encoder_kernel(x_ref, w_ref, b_ref, fcw_ref, fcb_ref, o_ref):
    # whole working set (~210 KiB) fits VMEM: no K-tiling, no accumulator scratch
    h = jnp.dot(x_ref[...], w_ref[...], preferred_element_type=jnp.float32) + b_ref[...]
    o_ref[...] = jnp.dot(h.astype(jnp.bfloat16), fcw_ref[...],
                         preferred_element_type=jnp.float32) + fcb_ref[...]


def state_encoder_pallas(flat_bf16, p):
    # flat_bf16: (B*S, VIT_K) -> (B*S, C_PAD)
    m = flat_bf16.shape[0]
    return pl.pallas_call(
        _state_encoder_kernel,
        out_shape=jax.ShapeDtypeStruct((m, C_PAD), jnp.float32),
        grid=(1,),
        in_specs=[
            pl.BlockSpec((m, VIT_K), lambda i: (0, 0)),
            pl.BlockSpec((VIT_K, VIT_PAD), lambda i: (0, 0)),
            pl.BlockSpec((1, VIT_PAD), lambda i: (0, 0)),
            pl.BlockSpec((VIT_PAD, C_PAD), lambda i: (0, 0)),
            pl.BlockSpec((1, C_PAD), lambda i: (0, 0)),
        ],
        out_specs=pl.BlockSpec((m, C_PAD), lambda i: (0, 0)),
    )(flat_bf16, p["vit_w"], p["vit_b"], p["fc_w"], p["fc_b"])


# ------------------ fused transformer stack + ln_f + head kernel ------------
def _gpt_fused_kernel(x0_ref, ln1w_ref, ln1b_ref, wqkv_ref, bqkv_ref, wo_ref, bo_ref,
                      ln2w_ref, ln2b_ref, w1_ref, b1_ref, w2_ref, b2_ref,
                      lnfw_ref, lnfb_ref, headw_ref,
                      logits_ref, x_scr,
                      *, n_head, hs, c_true, t_true, t_pad):
    l = pl.program_id(1)

    @pl.when(l == 0)
    def _():
        x_scr[...] = x0_ref[...]

    x = x_scr[...]                                    # (T_PAD, C_PAD) f32, this batch element

    # masks built once per grid step (JAX does not CSE iota/broadcast)
    lane = jax.lax.broadcasted_iota(jnp.int32, (t_pad, x.shape[-1]), 1)
    lane_msk = lane < c_true
    rows = jax.lax.broadcasted_iota(jnp.int32, (t_pad, t_pad), 0)
    cols = jax.lax.broadcasted_iota(jnp.int32, (t_pad, t_pad), 1)
    causal = jnp.logical_and(cols <= rows, cols < t_true)   # causal + seq-pad mask

    # ---------------- attention branch ----------------
    h = _layernorm_masked(x, ln1w_ref[0], ln1b_ref[0], lane_msk, c_true)
    qkv = jnp.dot(h.astype(jnp.bfloat16), wqkv_ref[0],
                  preferred_element_type=jnp.float32) + bqkv_ref[0]      # (T_PAD, 3*128)
    qkv = qkv.astype(jnp.bfloat16)                     # bound the live range early

    attn = jnp.zeros((t_pad, x.shape[-1]), jnp.float32)
    for hd in range(n_head):                           # HS-lane windows of the packed groups
        q = qkv[:, hd * hs:(hd + 1) * hs]                              # scale folded into wq
        k = qkv[:, QKV_GRP + hd * hs:QKV_GRP + (hd + 1) * hs]
        v = qkv[:, 2 * QKV_GRP + hd * hs:2 * QKV_GRP + (hd + 1) * hs]
        att = jax.lax.dot_general(q, k, (((1,), (1,)), ((), ())),
                                  preferred_element_type=jnp.float32)   # (T_PAD, T_PAD)
        att = jnp.where(causal, att, -jnp.inf)
        att = att - jnp.max(att, axis=-1, keepdims=True)
        e = jnp.exp(att)
        p = e * pl.reciprocal(jnp.sum(e, axis=-1, keepdims=True), approx=True)
        y = jnp.dot(p.astype(jnp.bfloat16), v, preferred_element_type=jnp.float32)
        # per-head accumulation against 8-row slices of wo (no head concat / relayout)
        attn = attn + jnp.dot(y.astype(jnp.bfloat16), wo_ref[0, hd * hs:(hd + 1) * hs, :],
                              preferred_element_type=jnp.float32)
    x = x + attn + bo_ref[0]                           # resid_drop = identity in eval

    # ---------------- MLP branch ----------------
    h2 = _layernorm_masked(x, ln2w_ref[0], ln2b_ref[0], lane_msk, c_true)
    m = jnp.dot(h2.astype(jnp.bfloat16), w1_ref[0], preferred_element_type=jnp.float32) + b1_ref[0]
    m = _gelu_tanh(m)
    m = jnp.dot(m.astype(jnp.bfloat16), w2_ref[0], preferred_element_type=jnp.float32) + b2_ref[0]
    x = x + m
    x_scr[...] = x                                     # carry activations across layers in VMEM

    # ---------------- final LN + lm-head over all rows (lane/sublane dense) --------------
    @pl.when(l == pl.num_programs(1) - 1)
    def _():
        hf = _layernorm_masked(x, lnfw_ref[...], lnfb_ref[...], lane_msk, c_true)
        logits_ref[...] = jnp.dot(hf.astype(jnp.bfloat16), headw_ref[...],
                                  preferred_element_type=jnp.float32)


def gpt_blocks_pallas(x0, p):
    bt = x0.shape[0]
    n_batch = bt // T_PAD
    lmap = lambda b, l: (l, 0, 0)
    cmap = lambda b, l: (0, 0)
    bmap = lambda b, l: (b, 0)
    in_specs = [
        pl.BlockSpec((T_PAD, C_PAD), bmap),                             # x0 (per-batch block)
        pl.BlockSpec((1, 1, C_PAD), lmap),                              # ln1_w
        pl.BlockSpec((1, 1, C_PAD), lmap),                              # ln1_b
        pl.BlockSpec((1, C_PAD, 3 * QKV_GRP), lmap),                    # wqkv
        pl.BlockSpec((1, 1, 3 * QKV_GRP), lmap),                        # bqkv
        pl.BlockSpec((1, QKV_GRP, C_PAD), lmap),                        # wo
        pl.BlockSpec((1, 1, C_PAD), lmap),                              # bo
        pl.BlockSpec((1, 1, C_PAD), lmap),                              # ln2_w
        pl.BlockSpec((1, 1, C_PAD), lmap),                              # ln2_b
        pl.BlockSpec((1, C_PAD, HID), lmap),                            # w1
        pl.BlockSpec((1, 1, HID), lmap),                                # b1
        pl.BlockSpec((1, HID, C_PAD), lmap),                            # w2
        pl.BlockSpec((1, 1, C_PAD), lmap),                              # b2
        pl.BlockSpec((1, C_PAD), cmap),                                 # lnf_w
        pl.BlockSpec((1, C_PAD), cmap),                                 # lnf_b
        pl.BlockSpec((C_PAD, VOCAB_PAD), cmap),                         # head_w
    ]
    return pl.pallas_call(
        partial(_gpt_fused_kernel, n_head=N_HEAD, hs=HS, c_true=N_EMBD,
                t_true=T_TRUE, t_pad=T_PAD),
        out_shape=jax.ShapeDtypeStruct((bt, VOCAB_PAD), jnp.float32),
        grid=(n_batch, N_LAYER),
        in_specs=in_specs,
        out_specs=pl.BlockSpec((T_PAD, VOCAB_PAD), bmap),
        scratch_shapes=[pltpu.VMEM((T_PAD, C_PAD), jnp.float32)],
        compiler_params=pltpu.CompilerParams(
            dimension_semantics=("parallel", "arbitrary")),
    )(x0, p["ln1_w"], p["ln1_b"], p["wqkv"], p["bqkv"], p["wo"], p["bo"],
      p["ln2_w"], p["ln2_b"], p["w1"], p["b1"], p["w2"], p["b2"],
      p["lnf_w"], p["lnf_b"], p["head_w"])


# ------------------------------- parameters --------------------------------
def init_params(key):
    kit = iter(jax.random.split(key, 32))

    def nrm(shape):
        return (0.02 * jax.random.normal(next(kit), shape)).astype(jnp.float32)

    def padded(a, shape):
        out = jnp.zeros(shape, jnp.float32)
        return out.at[tuple(slice(0, d) for d in a.shape)].set(a)

    p = {}
    # TODO(synk): external vit_pytorch ViT source not provided; the state encoder is a single
    # linear patch-embedding-style projection to VIT_DIM.
    p["vit_w"] = padded(nrm((VIT_K, VIT_DIM)), (VIT_K, VIT_PAD)).astype(jnp.bfloat16)
    p["vit_b"] = jnp.zeros((1, VIT_PAD), jnp.float32)
    p["fc_w"] = padded(nrm((VIT_DIM, N_EMBD)), (VIT_PAD, C_PAD)).astype(jnp.bfloat16)   # vitembedding_fc
    p["fc_b"] = jnp.zeros((1, C_PAD), jnp.float32)

    p["ret_w"] = padded(nrm((1, N_EMBD)), (1, C_PAD))             # ret_emb Linear(1, C)
    p["ret_b"] = jnp.zeros((1, C_PAD), jnp.float32)
    p["act_emb"] = padded(nrm((VOCAB, N_EMBD)), (VOCAB, C_PAD))   # action_embeddings
    # module zero-inits these; random here so the gather path is exercised
    p["pos_emb"] = padded(nrm((1, BLOCK_SIZE + 1, N_EMBD)), (1, BLOCK_SIZE + 1, C_PAD))
    p["global_pos_emb"] = padded(nrm((1, MAX_TIMESTEP + 1, N_EMBD)),
                                 (1, MAX_TIMESTEP + 1, C_PAD))

    p["lnf_w"] = padded(jnp.ones((1, N_EMBD), jnp.float32), (1, C_PAD))
    p["lnf_b"] = jnp.zeros((1, C_PAD), jnp.float32)
    p["head_w"] = padded(nrm((N_EMBD, VOCAB)), (C_PAD, VOCAB_PAD)).astype(jnp.bfloat16)

    scale = 1.0 / math.sqrt(HS)
    ln1_w, ln1_b, wqkv, bqkv, wo, bo = [], [], [], [], [], []
    ln2_w, ln2_b, w1, b1, w2, b2 = [], [], [], [], [], []
    for _ in range(N_LAYER):
        wq = nrm((N_EMBD, N_EMBD)) * scale            # 1/sqrt(hs) folded into Q columns
        wk, wv = nrm((N_EMBD, N_EMBD)), nrm((N_EMBD, N_EMBD))
        wproj = nrm((N_EMBD, N_EMBD))
        wfc1, wfc2 = nrm((N_EMBD, HID)), nrm((HID, N_EMBD))

        # fused QKV: all heads packed head-major into one 128-lane group per Q / K / V
        W = jnp.zeros((C_PAD, 3 * QKV_GRP), jnp.float32)
        W = W.at[:N_EMBD, 0:N_EMBD].set(wq)
        W = W.at[:N_EMBD, QKV_GRP:QKV_GRP + N_EMBD].set(wk)
        W = W.at[:N_EMBD, 2 * QKV_GRP:2 * QKV_GRP + N_EMBD].set(wv)
        wqkv.append(W.astype(jnp.bfloat16))
        bqkv.append(jnp.zeros((1, 3 * QKV_GRP), jnp.float32))

        wo.append(padded(wproj, (QKV_GRP, C_PAD)).astype(jnp.bfloat16))
        bo.append(jnp.zeros((1, C_PAD), jnp.float32))

        ln1_w.append(padded(jnp.ones((1, N_EMBD), jnp.float32), (1, C_PAD)))
        ln1_b.append(jnp.zeros((1, C_PAD), jnp.float32))
        ln2_w.append(padded(jnp.ones((1, N_EMBD), jnp.float32), (1, C_PAD)))
        ln2_b.append(jnp.zeros((1, C_PAD), jnp.float32))

        w1.append(padded(wfc1, (C_PAD, HID)).astype(jnp.bfloat16))
        b1.append(jnp.zeros((1, HID), jnp.float32))
        w2.append(padded(wfc2, (HID, C_PAD)).astype(jnp.bfloat16))
        b2.append(jnp.zeros((1, C_PAD), jnp.float32))

    stk = lambda xs: jnp.stack(xs, axis=0)
    p.update(ln1_w=stk(ln1_w), ln1_b=stk(ln1_b), wqkv=stk(wqkv), bqkv=stk(bqkv),
             wo=stk(wo), bo=stk(bo), ln2_w=stk(ln2_w), ln2_b=stk(ln2_b),
             w1=stk(w1), b1=stk(b1), w2=stk(w2), b2=stk(b2))
    return p


# --------------------------------- forward ---------------------------------
def gpt_forward(params, states, actions, rtgs, timesteps):
    bsz, s = states.shape[0], states.shape[1]

    # state encoder (ViT proxy) + vitembedding_fc -- single Pallas matmul kernel
    flat = states.reshape(bsz * s, -1).astype(jnp.bfloat16)
    state_emb = state_encoder_pallas(flat, params).reshape(bsz, s, C_PAD)

    # ret_emb = Tanh(Linear(1, C)(rtgs))  (K=1 matmul == broadcast; glue)
    rtg_emb = jnp.tanh(rtgs.astype(jnp.float32) * params["ret_w"] + params["ret_b"])

    # action_embeddings = Tanh(Embedding(actions))  (gather; glue)
    act_idx = actions.astype(jnp.int32)[..., 0]
    action_emb = jnp.tanh(jnp.take(params["act_emb"], act_idx, axis=0))

    # interleave (rtg, state, action[1:]) -> contiguous stack+reshape, drop last slot
    act_shift = jnp.concatenate([action_emb[:, 1:], jnp.zeros_like(action_emb[:, :1])], axis=1)
    tok = jnp.stack([rtg_emb, state_emb, act_shift], axis=2).reshape(bsz, 3 * s, C_PAD)
    tok = tok[:, :T_TRUE]

    # position embeddings: gather global_pos_emb at timesteps + local pos_emb
    ts = timesteps.astype(jnp.int32)[:, 0, 0]
    pos_global = jnp.take(params["global_pos_emb"][0], ts, axis=0)[:, None, :]
    pos = pos_global + params["pos_emb"][:, :T_TRUE, :]
    x = tok + pos                                    # self.drop(...) identity in eval

    # pad sequence to a sublane multiple; per-batch rows go on the sublane axis
    x0 = jnp.zeros((bsz, T_PAD, C_PAD), jnp.float32).at[:, :T_TRUE].set(x)
    x0 = x0.reshape(bsz * T_PAD, C_PAD)

    # fused: all transformer blocks + ln_f + lm-head (all rows); state-token rows 1::3
    # are selected by a strided slice on the lane-dense output
    out = gpt_blocks_pallas(x0, params)              # (B*T_PAD, VOCAB_PAD)
    logits = out.reshape(bsz, T_PAD, VOCAB_PAD)[:, 1:T_TRUE:3, :VOCAB]
    return logits, None                              # targets is None -> loss is None


# ----------------------------------- main -----------------------------------
if __name__ == "__main__":
    key = jax.random.PRNGKey(0)
    kp, ks, ka, kr, kt = jax.random.split(key, 5)
    params = init_params(kp)

    states = jax.random.normal(ks, (B, S, IMG_C, IMG_H, IMG_W), jnp.float32)
    actions = jax.random.randint(ka, (B, S, 1), 0, VOCAB)
    rtgs = jax.random.uniform(kr, (B, S, 1), jnp.float32)
    timesteps = jax.random.randint(kt, (B, 1, 1), 0, MAX_TIMESTEP + 1)

    logits, loss = jax.jit(gpt_forward)(params, states, actions, rtgs, timesteps)
    logits = jax.block_until_ready(logits)
    assert logits.shape == (B, S, VOCAB), logits.shape
    assert loss is None
    print("KERNEL_OK")
</pallas_src>

<mosaic_0001>
module attributes {stable_mosaic.version = 11 : i64} {
  func.func @_state_encoder_kernel(%arg0: i32, %arg1: memref<8x768xbf16, #tpu.memory_space<vmem>>, %arg2: memref<768x128xbf16, #tpu.memory_space<vmem>>, %arg3: memref<1x128xf32, #tpu.memory_space<vmem>>, %arg4: memref<128x128xbf16, #tpu.memory_space<vmem>>, %arg5: memref<1x128xf32, #tpu.memory_space<vmem>>, %arg6: memref<8x128xf32, #tpu.memory_space<vmem>>) attributes {dimension_semantics = [#tpu.dimension_semantics<arbitrary>], iteration_bounds = array<i64: 1>, scalar_prefetch = 0 : i64, scratch_operands = 0 : i64, tpu.core_type = #tpu.core_type<tc>, window_params = [{pipeline_mode = #tpu.pipeline_mode<synchronous>, transform_indices = @transform_0, window_bounds = array<i64: 8, 768>}, {pipeline_mode = #tpu.pipeline_mode<synchronous>, transform_indices = @transform_1, window_bounds = array<i64: 768, 128>}, {pipeline_mode = #tpu.pipeline_mode<synchronous>, transform_indices = @transform_2, window_bounds = array<i64: 1, 128>}, {pipeline_mode = #tpu.pipeline_mode<synchronous>, transform_indices = @transform_3, window_bounds = array<i64: 128, 128>}, {pipeline_mode = #tpu.pipeline_mode<synchronous>, transform_indices = @transform_4, window_bounds = array<i64: 1, 128>}, {pipeline_mode = #tpu.pipeline_mode<synchronous>, transform_indices = @transform_5, window_bounds = array<i64: 8, 128>}]} {
    %c0 = arith.constant 0 : index
    %c0_0 = arith.constant 0 : index
    %0 = vector.load %arg1[%c0, %c0_0] : memref<8x768xbf16, #tpu.memory_space<vmem>>, vector<8x768xbf16>
    %c0_1 = arith.constant 0 : index
    %c0_2 = arith.constant 0 : index
    %1 = vector.load %arg2[%c0_1, %c0_2] : memref<768x128xbf16, #tpu.memory_space<vmem>>, vector<768x128xbf16>
    %cst = arith.constant dense<0.000000e+00> : vector<8x128xf32>
    %2 = tpu.matmul %0, %1, %cst {dimension_numbers = #tpu.dot_dimension_numbers<[1], [0], [0], [1], [0, 0, 1, 1], [], []>} : vector<8x768xbf16>, vector<768x128xbf16>, vector<8x128xf32> -> vector<8x128xf32>
    %c0_3 = arith.constant 0 : index
    %c0_4 = arith.constant 0 : index
    %3 = vector.load %arg3[%c0_3, %c0_4] : memref<1x128xf32, #tpu.memory_space<vmem>>, vector<1x128xf32>
    %4 = vector.broadcast %3 : vector<1x128xf32> to vector<8x128xf32>
    %5 = arith.addf %2, %4 : vector<8x128xf32>
    %6 = arith.truncf %5 : vector<8x128xf32> to vector<8x128xbf16>
    %c0_5 = arith.constant 0 : index
    %c0_6 = arith.constant 0 : index
    %7 = vector.load %arg4[%c0_5, %c0_6] : memref<128x128xbf16, #tpu.memory_space<vmem>>, vector<128x128xbf16>
    %cst_7 = arith.constant dense<0.000000e+00> : vector<8x128xf32>
    %8 = tpu.matmul %6, %7, %cst_7 {dimension_numbers = #tpu.dot_dimension_numbers<[1], [0], [0], [1], [0, 0, 1, 1], [], []>} : vector<8x128xbf16>, vector<128x128xbf16>, vector<8x128xf32> -> vector<8x128xf32>
    %c0_8 = arith.constant 0 : index
    %c0_9 = arith.constant 0 : index
    %9 = vector.load %arg5[%c0_8, %c0_9] : memref<1x128xf32, #tpu.memory_space<vmem>>, vector<1x128xf32>
    %10 = vector.broadcast %9 : vector<1x128xf32> to vector<8x128xf32>
    %11 = arith.addf %8, %10 : vector<8x128xf32>
    %c0_10 = arith.constant 0 : index
    %c0_11 = arith.constant 0 : index
    %12 = vector.load %arg6[%c0_10, %c0_11] : memref<8x128xf32, #tpu.memory_space<vmem>>, vector<8x128xf32>
    tpu.vector_store %arg6[%c0_10, %c0_11], %11 {strides = array<i32>} : memref<8x128xf32, #tpu.memory_space<vmem>>, vector<8x128xf32>,
    return
  }
  func.func @transform_0(%arg0: i32) -> (i32, i32) {
    %c0_i32 = arith.constant 0 : i32
    %c0_i32_0 = arith.constant 0 : i32
    %c0_i32_1 = arith.constant 0 : i32
    return %c0_i32, %c0_i32_0 : i32, i32
  }
  func.func @transform_1(%arg0: i32) -> (i32, i32) {
    %c0_i32 = arith.constant 0 : i32
    %c0_i32_0 = arith.constant 0 : i32
    %c0_i32_1 = arith.constant 0 : i32
    return %c0_i32, %c0_i32_0 : i32, i32
  }
  func.func @transform_2(%arg0: i32) -> (i32, i32) {
    %c0_i32 = arith.constant 0 : i32
    %c0_i32_0 = arith.constant 0 : i32
    %c0_i32_1 = arith.constant 0 : i32
    return %c0_i32, %c0_i32_0 : i32, i32
  }
  func.func @transform_3(%arg0: i32) -> (i32, i32) {
    %c0_i32 = arith.constant 0 : i32
    %c0_i32_0 = arith.constant 0 : i32
    %c0_i32_1 = arith.constant 0 : i32
    return %c0_i32, %c0_i32_0 : i32, i32
  }
  func.func @transform_4(%arg0: i32) -> (i32, i32) {
    %c0_i32 = arith.constant 0 : i32
    %c0_i32_0 = arith.constant 0 : i32
    %c0_i32_1 = arith.constant 0 : i32
    return %c0_i32, %c0_i32_0 : i32, i32
  }
  func.func @transform_5(%arg0: i32) -> (i32, i32) {
    %c0_i32 = arith.constant 0 : i32
    %c0_i32_0 = arith.constant 0 : i32
    %c0_i32_1 = arith.constant 0 : i32
    return %c0_i32, %c0_i32_0 : i32, i32
  }
}

module attributes {stable_mosaic.version = 11 : i64} {
  func.func @_gpt_fused_kernel(%arg0: i32, %arg1: i32, %arg2: memref<16x128xf32, #tpu.memory_space<vmem>>, %arg3: memref<1x1x128xf32, #tpu.memory_space<vmem>>, %arg4: memref<1x1x128xf32, #tpu.memory_space<vmem>>, %arg5: memref<1x128x384xbf16, #tpu.memory_space<vmem>>, %arg6: memref<1x1x384xf32, #tpu.memory_space<vmem>>, %arg7: memref<1x128x128xbf16, #tpu.memory_space<vmem>>, %arg8: memref<1x1x128xf32, #tpu.memory_space<vmem>>, %arg9: memref<1x1x128xf32, #tpu.memory_space<vmem>>, %arg10: memref<1x1x128xf32, #tpu.memory_space<vmem>>, %arg11: memref<1x128x128xbf16, #tpu.memory_space<vmem>>, %arg12: memref<1x1x128xf32, #tpu.memory_space<vmem>>, %arg13: memref<1x128x128xbf16, #tpu.memory_space<vmem>>, %arg14: memref<1x1x128xf32, #tpu.memory_space<vmem>>, %arg15: memref<1x128xf32, #tpu.memory_space<vmem>>, %arg16: memref<1x128xf32, #tpu.memory_space<vmem>>, %arg17: memref<128x128xbf16, #tpu.memory_space<vmem>>, %arg18: memref<16x128xf32, #tpu.memory_space<vmem>>, %arg19: memref<16x128xf32, #tpu.memory_space<vmem>>) attributes {dimension_semantics = [#tpu.dimension_semantics<parallel>, #tpu.dimension_semantics<arbitrary>], iteration_bounds = array<i64: 2, 2>, scalar_prefetch = 0 : i64, scratch_operands = 1 : i64, tpu.core_type = #tpu.core_type<tc>, window_params = [{transform_indices = @transform_0, window_bounds = array<i64: 16, 128>}, {transform_indices = @transform_1, window_bounds = array<i64: 1, 1, 128>}, {transform_indices = @transform_2, window_bounds = array<i64: 1, 1, 128>}, {transform_indices = @transform_3, window_bounds = array<i64: 1, 128, 384>}, {transform_indices = @transform_4, window_bounds = array<i64: 1, 1, 384>}, {transform_indices = @transform_5, window_bounds = array<i64: 1, 128, 128>}, {transform_indices = @transform_6, window_bounds = array<i64: 1, 1, 128>}, {transform_indices = @transform_7, window_bounds = array<i64: 1, 1, 128>}, {transform_indices = @transform_8, window_bounds = array<i64: 1, 1, 128>}, {transform_indices = @transform_9, window_bounds = array<i64: 1, 128, 128>}, {transform_indices = @transform_10, window_bounds = array<i64: 1, 1, 128>}, {transform_indices = @transform_11, window_bounds = array<i64: 1, 128, 128>}, {transform_indices = @transform_12, window_bounds = array<i64: 1, 1, 128>}, {pipeline_mode = #tpu.pipeline_mode<synchronous>, transform_indices = @transform_13, window_bounds = array<i64: 1, 128>}, {pipeline_mode = #tpu.pipeline_mode<synchronous>, transform_indices = @transform_14, window_bounds = array<i64: 1, 128>}, {pipeline_mode = #tpu.pipeline_mode<synchronous>, transform_indices = @transform_15, window_bounds = array<i64: 128, 128>}, {transform_indices = @transform_16, window_bounds = array<i64: 16, 128>}]} {
    %c0_i32 = arith.constant 0 : i32
    %0 = arith.cmpi eq, %arg1, %c0_i32 : i32
    %1 = arith.extui %0 : i1 to i32
    %c0_i32_0 = arith.constant 0 : i32
    %2 = arith.cmpi ne, %1, %c0_i32_0 : i32
    scf.if %2 {
      %c0_90 = arith.constant 0 : index
      %c0_91 = arith.constant 0 : index
      %206 = vector.load %arg2[%c0_90, %c0_91] : memref<16x128xf32, #tpu.memory_space<vmem>>, vector<16x128xf32>
      %c0_92 = arith.constant 0 : index
      %c0_93 = arith.constant 0 : index
      %207 = vector.load %arg19[%c0_92, %c0_93] : memref<16x128xf32, #tpu.memory_space<vmem>>, vector<16x128xf32>
      tpu.vector_store %arg19[%c0_92, %c0_93], %206 {strides = array<i32>} : memref<16x128xf32, #tpu.memory_space<vmem>>, vector<16x128xf32>,
    } else {
    }
    %c0 = arith.constant 0 : index
    %c0_1 = arith.constant 0 : index
    %3 = vector.load %arg19[%c0, %c0_1] : memref<16x128xf32, #tpu.memory_space<vmem>>, vector<16x128xf32>
    %4 = tpu.iota {dimensions = array<i32: 1>} : vector<16x128xi32>
    %c32_i32 = arith.constant 32 : i32
    %5 = vector.broadcast %c32_i32 : i32 to vector<16x128xi32>
    %6 = arith.cmpi slt, %4, %5 : vector<16x128xi32>
    %7 = tpu.iota {dimensions = array<i32: 0>} : vector<16x16xi32>
    %8 = tpu.iota {dimensions = array<i32: 1>} : vector<16x16xi32>
    %9 = arith.cmpi sle, %8, %7 : vector<16x16xi32>
    %c11_i32 = arith.constant 11 : i32
    %10 = vector.broadcast %c11_i32 : i32 to vector<16x16xi32>
    %11 = arith.cmpi slt, %8, %10 : vector<16x16xi32>
    %12 = arith.andi %9, %11 : vector<16x16xi1>
    %c0_2 = arith.constant 0 : index
    %c0_3 = arith.constant 0 : index
    %c0_4 = arith.constant 0 : index
    %13 = vector.load %arg3[%c0_2, %c0_3, %c0_4] : memref<1x1x128xf32, #tpu.memory_space<vmem>>, vector<1x1x128xf32>
    %14 = vector.shape_cast %13 : vector<1x1x128xf32> to vector<1x128xf32>
    %c0_5 = arith.constant 0 : index
    %c0_6 = arith.constant 0 : index
    %c0_7 = arith.constant 0 : index
    %15 = vector.load %arg4[%c0_5, %c0_6, %c0_7] : memref<1x1x128xf32, #tpu.memory_space<vmem>>, vector<1x1x128xf32>
    %16 = vector.shape_cast %15 : vector<1x1x128xf32> to vector<1x128xf32>
    %cst = arith.constant dense<0.000000e+00> : vector<16xf32>
    %17 = vector.multi_reduction <add>, %3, %cst [1] : vector<16x128xf32> to vector<16xf32>
    %18 = vector.shape_cast %17 : vector<16xf32> to vector<16x1xf32>
    %cst_8 = arith.constant 3.125000e-02 : f32
    %19 = vector.broadcast %cst_8 : f32 to vector<16x1xf32>
    %20 = arith.mulf %18, %19 : vector<16x1xf32>
    %21 = vector.broadcast %20 : vector<16x1xf32> to vector<16x128xf32>
    %22 = arith.subf %3, %21 : vector<16x128xf32>
    %cst_9 = arith.constant 0.000000e+00 : f32
    %23 = vector.broadcast %cst_9 : f32 to vector<16x128xf32>
    %24 = arith.select %6, %22, %23 : vector<16x128xi1>, vector<16x128xf32>
    %25 = arith.mulf %24, %24 : vector<16x128xf32>
    %cst_10 = arith.constant dense<0.000000e+00> : vector<16xf32>
    %26 = vector.multi_reduction <add>, %25, %cst_10 [1] : vector<16x128xf32> to vector<16xf32>
    %27 = vector.shape_cast %26 : vector<16xf32> to vector<16x1xf32>
    %cst_11 = arith.constant 3.125000e-02 : f32
    %28 = vector.broadcast %cst_11 : f32 to vector<16x1xf32>
    %29 = arith.mulf %27, %28 : vector<16x1xf32>
    %cst_12 = arith.constant 9.99999974E-6 : f32
    %30 = vector.broadcast %cst_12 : f32 to vector<16x1xf32>
    %31 = arith.addf %29, %30 : vector<16x1xf32>
    %32 = math.rsqrt %31 : vector<16x1xf32>
    %33 = vector.broadcast %32 : vector<16x1xf32> to vector<16x128xf32>
    %34 = arith.mulf %24, %33 : vector<16x128xf32>
    %35 = vector.broadcast %14 : vector<1x128xf32> to vector<16x128xf32>
    %36 = arith.mulf %34, %35 : vector<16x128xf32>
    %37 = vector.broadcast %16 : vector<1x128xf32> to vector<16x128xf32>
    %38 = arith.addf %36, %37 : vector<16x128xf32>
    %39 = arith.truncf %38 : vector<16x128xf32> to vector<16x128xbf16>
    %c0_13 = arith.constant 0 : index
    %c0_14 = arith.constant 0 : index
    %c0_15 = arith.constant 0 : index
    %40 = vector.load %arg5[%c0_13, %c0_14, %c0_15] : memref<1x128x384xbf16, #tpu.memory_space<vmem>>, vector<1x128x384xbf16>
    %41 = vector.shape_cast %40 : vector<1x128x384xbf16> to vector<128x384xbf16>
    %cst_16 = arith.constant dense<0.000000e+00> : vector<16x384xf32>
    %42 = tpu.matmul %39, %41, %cst_16 {dimension_numbers = #tpu.dot_dimension_numbers<[1], [0], [0], [1], [0, 0, 1, 1], [], []>} : vector<16x128xbf16>, vector<128x384xbf16>, vector<16x384xf32> -> vector<16x384xf32>
    %c0_17 = arith.constant 0 : index
    %c0_18 = arith.constant 0 : index
    %c0_19 = arith.constant 0 : index
    %43 = vector.load %arg6[%c0_17, %c0_18, %c0_19] : memref<1x1x384xf32, #tpu.memory_space<vmem>>, vector<1x1x384xf32>
    %44 = vector.shape_cast %43 : vector<1x1x384xf32> to vector<1x384xf32>
    %45 = vector.broadcast %44 : vector<1x384xf32> to vector<16x384xf32>
    %46 = arith.addf %42, %45 : vector<16x384xf32>
    %47 = arith.truncf %46 : vector<16x384xf32> to vector<16x384xbf16>
    %cst_20 = arith.constant 0.000000e+00 : f32
    %48 = vector.broadcast %cst_20 : f32 to vector<16x128xf32>
    %49 = vector.extract_strided_slice %47 {offsets = [0, 0], sizes = [16, 8], strides = [1, 1]} : vector<16x384xbf16> to vector<16x8xbf16>
    %50 = vector.extract_strided_slice %47 {offsets = [0, 128], sizes = [16, 8], strides = [1, 1]} : vector<16x384xbf16> to vector<16x8xbf16>
    %51 = vector.extract_strided_slice %47 {offsets = [0, 256], sizes = [16, 8], strides = [1, 1]} : vector<16x384xbf16> to vector<16x8xbf16>
    %cst_21 = arith.constant dense<0.000000e+00> : vector<16x16xf32>
    %52 = tpu.matmul %49, %50, %cst_21 {dimension_numbers = #tpu.dot_dimension_numbers<[1], [1], [0], [0], [0, 0, 1, 0], [], []>} : vector<16x8xbf16>, vector<16x8xbf16>, vector<16x16xf32> -> vector<16x16xf32>
    %cst_22 = arith.constant 0xFF800000 : f32
    %53 = vector.broadcast %cst_22 : f32 to vector<16x16xf32>
    %54 = arith.select %12, %52, %53 : vector<16x16xi1>, vector<16x16xf32>
    %cst_23 = arith.constant dense<0xFF800000> : vector<16xf32>
    %55 = vector.multi_reduction <maximumf>, %54, %cst_23 [1] : vector<16x16xf32> to vector<16xf32>
    %56 = vector.shape_cast %55 : vector<16xf32> to vector<16x1xf32>
    %57 = vector.broadcast %56 : vector<16x1xf32> to vector<16x16xf32>
    %58 = arith.subf %54, %57 : vector<16x16xf32>
    %59 = math.exp %58 : vector<16x16xf32>
    %cst_24 = arith.constant dense<0.000000e+00> : vector<16xf32>
    %60 = vector.multi_reduction <add>, %59, %cst_24 [1] : vector<16x16xf32> to vector<16xf32>
    %61 = vector.shape_cast %60 : vector<16xf32> to vector<16x1xf32>
    %62 = tpu.reciprocal %61 {approx = true} : vector<16x1xf32> -> vector<16x1xf32>
    %63 = vector.broadcast %62 : vector<16x1xf32> to vector<16x16xf32>
    %64 = arith.mulf %59, %63 : vector<16x16xf32>
    %65 = arith.truncf %64 : vector<16x16xf32> to vector<16x16xbf16>
    %cst_25 = arith.constant dense<0.000000e+00> : vector<16x8xf32>
    %66 = tpu.matmul %65, %51, %cst_25 {dimension_numbers = #tpu.dot_dimension_numbers<[1], [0], [0], [1], [0, 0, 1, 1], [], []>} : vector<16x16xbf16>, vector<16x8xbf16>, vector<16x8xf32> -> vector<16x8xf32>
    %67 = arith.truncf %66 : vector<16x8xf32> to vector<16x8xbf16>
    %c0_26 = arith.constant 0 : index
    %c0_27 = arith.constant 0 : index
    %c0_28 = arith.constant 0 : index
    %68 = vector.load %arg7[%c0_26, %c0_27, %c0_28] : memref<1x128x128xbf16, #tpu.memory_space<vmem>>, vector<1x8x128xbf16>
    %69 = vector.shape_cast %68 : vector<1x8x128xbf16> to vector<8x128xbf16>
    %cst_29 = arith.constant dense<0.000000e+00> : vector<16x128xf32>
    %70 = tpu.matmul %67, %69, %cst_29 {dimension_numbers = #tpu.dot_dimension_numbers<[1], [0], [0], [1], [0, 0, 1, 1], [], []>} : vector<16x8xbf16>, vector<8x128xbf16>, vector<16x128xf32> -> vector<16x128xf32>
    %71 = arith.addf %48, %70 : vector<16x128xf32>
    %72 = vector.extract_strided_slice %47 {offsets = [0, 8], sizes = [16, 8], strides = [1, 1]} : vector<16x384xbf16> to vector<16x8xbf16>
    %73 = vector.extract_strided_slice %47 {offsets = [0, 136], sizes = [16, 8], strides = [1, 1]} : vector<16x384xbf16> to vector<16x8xbf16>
    %74 = vector.extract_strided_slice %47 {offsets = [0, 264], sizes = [16, 8], strides = [1, 1]} : vector<16x384xbf16> to vector<16x8xbf16>
    %cst_30 = arith.constant dense<0.000000e+00> : vector<16x16xf32>
    %75 = tpu.matmul %72, %73, %cst_30 {dimension_numbers = #tpu.dot_dimension_numbers<[1], [1], [0], [0], [0, 0, 1, 0], [], []>} : vector<16x8xbf16>, vector<16x8xbf16>, vector<16x16xf32> -> vector<16x16xf32>
    %cst_31 = arith.constant 0xFF800000 : f32
    %76 = vector.broadcast %cst_31 : f32 to vector<16x16xf32>
    %77 = arith.select %12, %75, %76 : vector<16x16xi1>, vector<16x16xf32>
    %cst_32 = arith.constant dense<0xFF800000> : vector<16xf32>
    %78 = vector.multi_reduction <maximumf>, %77, %cst_32 [1] : vector<16x16xf32> to vector<16xf32>
    %79 = vector.shape_cast %78 : vector<16xf32> to vector<16x1xf32>
    %80 = vector.broadcast %79 : vector<16x1xf32> to vector<16x16xf32>
    %81 = arith.subf %77, %80 : vector<16x16xf32>
    %82 = math.exp %81 : vector<16x16xf32>
    %cst_33 = arith.constant dense<0.000000e+00> : vector<16xf32>
    %83 = vector.multi_reduction <add>, %82, %cst_33 [1] : vector<16x16xf32> to vector<16xf32>
    %84 = vector.shape_cast %83 : vector<16xf32> to vector<16x1xf32>
    %85 = tpu.reciprocal %84 {approx = true} : vector<16x1xf32> -> vector<16x1xf32>
    %86 = vector.broadcast %85 : vector<16x1xf32> to vector<16x16xf32>
    %87 = arith.mulf %82, %86 : vector<16x16xf32>
    %88 = arith.truncf %87 : vector<16x16xf32> to vector<16x16xbf16>
    %cst_34 = arith.constant dense<0.000000e+00> : vector<16x8xf32>
    %89 = tpu.matmul %88, %74, %cst_34 {dimension_numbers = #tpu.dot_dimension_numbers<[1], [0], [0], [1], [0, 0, 1, 1], [], []>} : vector<16x16xbf16>, vector<16x8xbf16>, vector<16x8xf32> -> vector<16x8xf32>
    %90 = arith.truncf %89 : vector<16x8xf32> to vector<16x8xbf16>
    %c0_35 = arith.constant 0 : index
    %c8 = arith.constant 8 : index
    %c0_36 = arith.constant 0 : index
    %91 = vector.load %arg7[%c0_35, %c8, %c0_36] : memref<1x128x128xbf16, #tpu.memory_space<vmem>>, vector<1x8x128xbf16>
    %92 = vector.shape_cast %91 : vector<1x8x128xbf16> to vector<8x128xbf16>
    %cst_37 = arith.constant dense<0.000000e+00> : vector<16x128xf32>
    %93 = tpu.matmul %90, %92, %cst_37 {dimension_numbers = #tpu.dot_dimension_numbers<[1], [0], [0], [1], [0, 0, 1, 1], [], []>} : vector<16x8xbf16>, vector<8x128xbf16>, vector<16x128xf32> -> vector<16x128xf32>
    %94 = arith.addf %71, %93 : vector<16x128xf32>
    %95 = vector.extract_strided_slice %47 {offsets = [0, 16], sizes = [16, 8], strides = [1, 1]} : vector<16x384xbf16> to vector<16x8xbf16>
    %96 = vector.extract_strided_slice %47 {offsets = [0, 144], sizes = [16, 8], strides = [1, 1]} : vector<16x384xbf16> to vector<16x8xbf16>
    %97 = vector.extract_strided_slice %47 {offsets = [0, 272], sizes = [16, 8], strides = [1, 1]} : vector<16x384xbf16> to vector<16x8xbf16>
    %cst_38 = arith.constant dense<0.000000e+00> : vector<16x16xf32>
    %98 = tpu.matmul %95, %96, %cst_38 {dimension_numbers = #tpu.dot_dimension_numbers<[1], [1], [0], [0], [0, 0, 1, 0], [], []>} : vector<16x8xbf16>, vector<16x8xbf16>, vector<16x16xf32> -> vector<16x16xf32>
    %cst_39 = arith.constant 0xFF800000 : f32
    %99 = vector.broadcast %cst_39 : f32 to vector<16x16xf32>
    %100 = arith.select %12, %98, %99 : vector<16x16xi1>, vector<16x16xf32>
    %cst_40 = arith.constant dense<0xFF800000> : vector<16xf32>
    %101 = vector.multi_reduction <maximumf>, %100, %cst_40 [1] : vector<16x16xf32> to vector<16xf32>
    %102 = vector.shape_cast %101 : vector<16xf32> to vector<16x1xf32>
    %103 = vector.broadcast %102 : vector<16x1xf32> to vector<16x16xf32>
    %104 = arith.subf %100, %103 : vector<16x16xf32>
    %105 = math.exp %104 : vector<16x16xf32>
    %cst_41 = arith.constant dense<0.000000e+00> : vector<16xf32>
    %106 = vector.multi_reduction <add>, %105, %cst_41 [1] : vector<16x16xf32> to vector<16xf32>
    %107 = vector.shape_cast %106 : vector<16xf32> to vector<16x1xf32>
    %108 = tpu.reciprocal %107 {approx = true} : vector<16x1xf32> -> vector<16x1xf32>
    %109 = vector.broadcast %108 : vector<16x1xf32> to vector<16x16xf32>
    %110 = arith.mulf %105, %109 : vector<16x16xf32>
    %111 = arith.truncf %110 : vector<16x16xf32> to vector<16x16xbf16>
    %cst_42 = arith.constant dense<0.000000e+00> : vector<16x8xf32>
    %112 = tpu.matmul %111, %97, %cst_42 {dimension_numbers = #tpu.dot_dimension_numbers<[1], [0], [0], [1], [0, 0, 1, 1], [], []>} : vector<16x16xbf16>, vector<16x8xbf16>, vector<16x8xf32> -> vector<16x8xf32>
    %113 = arith.truncf %112 : vector<16x8xf32> to vector<16x8xbf16>
    %c0_43 = arith.constant 0 : index
    %c16 = arith.constant 16 : index
    %c0_44 = arith.constant 0 : index
    %114 = vector.load %arg7[%c0_43, %c16, %c0_44] : memref<1x128x128xbf16, #tpu.memory_space<vmem>>, vector<1x8x128xbf16>
    %115 = vector.shape_cast %114 : vector<1x8x128xbf16> to vector<8x128xbf16>
    %cst_45 = arith.constant dense<0.000000e+00> : vector<16x128xf32>
    %116 = tpu.matmul %113, %115, %cst_45 {dimension_numbers = #tpu.dot_dimension_numbers<[1], [0], [0], [1], [0, 0, 1, 1], [], []>} : vector<16x8xbf16>, vector<8x128xbf16>, vector<16x128xf32> -> vector<16x128xf32>
    %117 = arith.addf %94, %116 : vector<16x128xf32>
    %118 = vector.extract_strided_slice %47 {offsets = [0, 24], sizes = [16, 8], strides = [1, 1]} : vector<16x384xbf16> to vector<16x8xbf16>
    %119 = vector.extract_strided_slice %47 {offsets = [0, 152], sizes = [16, 8], strides = [1, 1]} : vector<16x384xbf16> to vector<16x8xbf16>
    %120 = vector.extract_strided_slice %47 {offsets = [0, 280], sizes = [16, 8], strides = [1, 1]} : vector<16x384xbf16> to vector<16x8xbf16>
    %cst_46 = arith.constant dense<0.000000e+00> : vector<16x16xf32>
    %121 = tpu.matmul %118, %119, %cst_46 {dimension_numbers = #tpu.dot_dimension_numbers<[1], [1], [0], [0], [0, 0, 1, 0], [], []>} : vector<16x8xbf16>, vector<16x8xbf16>, vector<16x16xf32> -> vector<16x16xf32>
    %cst_47 = arith.constant 0xFF800000 : f32
    %122 = vector.broadcast %cst_47 : f32 to vector<16x16xf32>
    %123 = arith.select %12, %121, %122 : vector<16x16xi1>, vector<16x16xf32>
    %cst_48 = arith.constant dense<0xFF800000> : vector<16xf32>
    %124 = vector.multi_reduction <maximumf>, %123, %cst_48 [1] : vector<16x16xf32> to vector<16xf32>
    %125 = vector.shape_cast %124 : vector<16xf32> to vector<16x1xf32>
    %126 = vector.broadcast %125 : vector<16x1xf32> to vector<16x16xf32>
    %127 = arith.subf %123, %126 : vector<16x16xf32>
    %128 = math.exp %127 : vector<16x16xf32>
    %cst_49 = arith.constant dense<0.000000e+00> : vector<16xf32>
    %129 = vector.multi_reduction <add>, %128, %cst_49 [1] : vector<16x16xf32> to vector<16xf32>
    %130 = vector.shape_cast %129 : vector<16xf32> to vector<16x1xf32>
    %131 = tpu.reciprocal %130 {approx = true} : vector<16x1xf32> -> vector<16x1xf32>
    %132 = vector.broadcast %131 : vector<16x1xf32> to vector<16x16xf32>
    %133 = arith.mulf %128, %132 : vector<16x16xf32>
    %134 = arith.truncf %133 : vector<16x16xf32> to vector<16x16xbf16>
    %cst_50 = arith.constant dense<0.000000e+00> : vector<16x8xf32>
    %135 = tpu.matmul %134, %120, %cst_50 {dimension_numbers = #tpu.dot_dimension_numbers<[1], [0], [0], [1], [0, 0, 1, 1], [], []>} : vector<16x16xbf16>, vector<16x8xbf16>, vector<16x8xf32> -> vector<16x8xf32>
    %136 = arith.truncf %135 : vector<16x8xf32> to vector<16x8xbf16>
    %c0_51 = arith.constant 0 : index
    %c24 = arith.constant 24 : index
    %c0_52 = arith.constant 0 : index
    %137 = vector.load %arg7[%c0_51, %c24, %c0_52] : memref<1x128x128xbf16, #tpu.memory_space<vmem>>, vector<1x8x128xbf16>
    %138 = vector.shape_cast %137 : vector<1x8x128xbf16> to vector<8x128xbf16>
    %cst_53 = arith.constant dense<0.000000e+00> : vector<16x128xf32>
    %139 = tpu.matmul %136, %138, %cst_53 {dimension_numbers = #tpu.dot_dimension_numbers<[1], [0], [0], [1], [0, 0, 1, 1], [], []>} : vector<16x8xbf16>, vector<8x128xbf16>, vector<16x128xf32> -> vector<16x128xf32>
    %140 = arith.addf %117, %139 : vector<16x128xf32>
    %141 = arith.addf %3, %140 : vector<16x128xf32>
    %c0_54 = arith.constant 0 : index
    %c0_55 = arith.constant 0 : index
    %c0_56 = arith.constant 0 : index
    %142 = vector.load %arg8[%c0_54, %c0_55, %c0_56] : memref<1x1x128xf32, #tpu.memory_space<vmem>>, vector<1x1x128xf32>
    %143 = vector.shape_cast %142 : vector<1x1x128xf32> to vector<1x128xf32>
    %144 = vector.broadcast %143 : vector<1x128xf32> to vector<16x128xf32>
    %145 = arith.addf %141, %144 : vector<16x128xf32>
    %c0_57 = arith.constant 0 : index
    %c0_58 = arith.constant 0 : index
    %c0_59 = arith.constant 0 : index
    %146 = vector.load %arg9[%c0_57, %c0_58, %c0_59] : memref<1x1x128xf32, #tpu.memory_space<vmem>>, vector<1x1x128xf32>
    %147 = vector.shape_cast %146 : vector<1x1x128xf32> to vector<1x128xf32>
    %c0_60 = arith.constant 0 : index
    %c0_61 = arith.constant 0 : index
    %c0_62 = arith.constant 0 : index
    %148 = vector.load %arg10[%c0_60, %c0_61, %c0_62] : memref<1x1x128xf32, #tpu.memory_space<vmem>>, vector<1x1x128xf32>
    %149 = vector.shape_cast %148 : vector<1x1x128xf32> to vector<1x128xf32>
    %cst_63 = arith.constant dense<0.000000e+00> : vector<16xf32>
    %150 = vector.multi_reduction <add>, %145, %cst_63 [1] : vector<16x128xf32> to vector<16xf32>
    %151 = vector.shape_cast %150 : vector<16xf32> to vector<16x1xf32>
    %cst_64 = arith.constant 3.125000e-02 : f32
    %152 = vector.broadcast %cst_64 : f32 to vector<16x1xf32>
    %153 = arith.mulf %151, %152 : vector<16x1xf32>
    %154 = vector.broadcast %153 : vector<16x1xf32> to vector<16x128xf32>
    %155 = arith.subf %145, %154 : vector<16x128xf32>
    %cst_65 = arith.constant 0.000000e+00 : f32
    %156 = vector.broadcast %cst_65 : f32 to vector<16x128xf32>
    %157 = arith.select %6, %155, %156 : vector<16x128xi1>, vector<16x128xf32>
    %158 = arith.mulf %157, %157 : vector<16x128xf32>
    %cst_66 = arith.constant dense<0.000000e+00> : vector<16xf32>
    %159 = vector.multi_reduction <add>, %158, %cst_66 [1] : vector<16x128xf32> to vector<16xf32>
    %160 = vector.shape_cast %159 : vector<16xf32> to vector<16x1xf32>
    %cst_67 = arith.constant 3.125000e-02 : f32
    %161 = vector.broadcast %cst_67 : f32 to vector<16x1xf32>
    %162 = arith.mulf %160, %161 : vector<16x1xf32>
    %cst_68 = arith.constant 9.99999974E-6 : f32
    %163 = vector.broadcast %cst_68 : f32 to vector<16x1xf32>
    %164 = arith.addf %162, %163 : vector<16x1xf32>
    %165 = math.rsqrt %164 : vector<16x1xf32>
    %166 = vector.broadcast %165 : vector<16x1xf32> to vector<16x128xf32>
    %167 = arith.mulf %157, %166 : vector<16x128xf32>
    %168 = vector.broadcast %147 : vector<1x128xf32> to vector<16x128xf32>
    %169 = arith.mulf %167, %168 : vector<16x128xf32>
    %170 = vector.broadcast %149 : vector<1x128xf32> to vector<16x128xf32>
    %171 = arith.addf %169, %170 : vector<16x128xf32>
    %172 = arith.truncf %171 : vector<16x128xf32> to vector<16x128xbf16>
    %c0_69 = arith.constant 0 : index
    %c0_70 = arith.constant 0 : index
    %c0_71 = arith.constant 0 : index
    %173 = vector.load %arg11[%c0_69, %c0_70, %c0_71] : memref<1x128x128xbf16, #tpu.memory_space<vmem>>, vector<1x128x128xbf16>
    %174 = vector.shape_cast %173 : vector<1x128x128xbf16> to vector<128x128xbf16>
    %cst_72 = arith.constant dense<0.000000e+00> : vector<16x128xf32>
    %175 = tpu.matmul %172, %174, %cst_72 {dimension_numbers = #tpu.dot_dimension_numbers<[1], [0], [0], [1], [0, 0, 1, 1], [], []>} : vector<16x128xbf16>, vector<128x128xbf16>, vector<16x128xf32> -> vector<16x128xf32>
    %c0_73 = arith.constant 0 : index
    %c0_74 = arith.constant 0 : index
    %c0_75 = arith.constant 0 : index
    %176 = vector.load %arg12[%c0_73, %c0_74, %c0_75] : memref<1x1x128xf32, #tpu.memory_space<vmem>>, vector<1x1x128xf32>
    %177 = vector.shape_cast %176 : vector<1x1x128xf32> to vector<1x128xf32>
    %178 = vector.broadcast %177 : vector<1x128xf32> to vector<16x128xf32>
    %179 = arith.addf %175, %178 : vector<16x128xf32>
    %cst_76 = arith.constant 5.000000e-01 : f32
    %180 = vector.broadcast %cst_76 : f32 to vector<16x128xf32>
    %181 = arith.mulf %180, %179 : vector<16x128xf32>
    %cst_77 = arith.constant 4.471500e-02 : f32
    %182 = vector.broadcast %cst_77 : f32 to vector<16x128xf32>
    %183 = arith.mulf %182, %179 : vector<16x128xf32>
    %184 = arith.mulf %183, %179 : vector<16x128xf32>
    %185 = arith.mulf %184, %179 : vector<16x128xf32>
    %186 = arith.addf %179, %185 : vector<16x128xf32>
    %cst_78 = arith.constant 0.797884583 : f32
    %187 = vector.broadcast %cst_78 : f32 to vector<16x128xf32>
    %188 = arith.mulf %187, %186 : vector<16x128xf32>
    %189 = math.tanh %188 : vector<16x128xf32>
    %cst_79 = arith.constant 1.000000e+00 : f32
    %190 = vector.broadcast %cst_79 : f32 to vector<16x128xf32>
    %191 = arith.addf %190, %189 : vector<16x128xf32>
    %192 = arith.mulf %181, %191 : vector<16x128xf32>
    %193 = arith.truncf %192 : vector<16x128xf32> to vector<16x128xbf16>
    %c0_80 = arith.constant 0 : index
    %c0_81 = arith.constant 0 : index
    %c0_82 = arith.constant 0 : index
    %194 = vector.load %arg13[%c0_80, %c0_81, %c0_82] : memref<1x128x128xbf16, #tpu.memory_space<vmem>>, vector<1x128x128xbf16>
    %195 = vector.shape_cast %194 : vector<1x128x128xbf16> to vector<128x128xbf16>
    %cst_83 = arith.constant dense<0.000000e+00> : vector<16x128xf32>
    %196 = tpu.matmul %193, %195, %cst_83 {dimension_numbers = #tpu.dot_dimension_numbers<[1], [0], [0], [1], [0, 0, 1, 1], [], []>} : vector<16x128xbf16>, vector<128x128xbf16>, vector<16x128xf32> -> vector<16x128xf32>
    %c0_84 = arith.constant 0 : index
    %c0_85 = arith.constant 0 : index
    %c0_86 = arith.constant 0 : index
    %197 = vector.load %arg14[%c0_84, %c0_85, %c0_86] : memref<1x1x128xf32, #tpu.memory_space<vmem>>, vector<1x1x128xf32>
    %198 = vector.shape_cast %197 : vector<1x1x128xf32> to vector<1x128xf32>
    %199 = vector.broadcast %198 : vector<1x128xf32> to vector<16x128xf32>
    %200 = arith.addf %196, %199 : vector<16x128xf32>
    %201 = arith.addf %145, %200 : vector<16x128xf32>
    %c0_87 = arith.constant 0 : index
    %c0_88 = arith.constant 0 : index
    %202 = vector.load %arg19[%c0_87, %c0_88] : memref<16x128xf32, #tpu.memory_space<vmem>>, vector<16x128xf32>
    tpu.vector_store %arg19[%c0_87, %c0_88], %201 {strides = array<i32>} : memref<16x128xf32, #tpu.memory_space<vmem>>, vector<16x128xf32>,
    %c1_i32 = arith.constant 1 : i32
    %203 = arith.cmpi eq, %arg1, %c1_i32 : i32
    %204 = arith.extui %203 : i1 to i32
    %c0_i32_89 = arith.constant 0 : i32
    %205 = arith.cmpi ne, %204, %c0_i32_89 : i32
    scf.if %205 {
      %c0_90 = arith.constant 0 : index
      %c0_91 = arith.constant 0 : index
      %206 = vector.load %arg15[%c0_90, %c0_91] : memref<1x128xf32, #tpu.memory_space<vmem>>, vector<1x128xf32>
      %c0_92 = arith.constant 0 : index
      %c0_93 = arith.constant 0 : index
      %207 = vector.load %arg16[%c0_92, %c0_93] : memref<1x128xf32, #tpu.memory_space<vmem>>, vector<1x128xf32>
      %cst_94 = arith.constant dense<0.000000e+00> : vector<16xf32>
      %208 = vector.multi_reduction <add>, %201, %cst_94 [1] : vector<16x128xf32> to vector<16xf32>
      %209 = vector.shape_cast %208 : vector<16xf32> to vector<16x1xf32>
      %cst_95 = arith.constant 3.125000e-02 : f32
      %210 = vector.broadcast %cst_95 : f32 to vector<16x1xf32>
      %211 = arith.mulf %209, %210 : vector<16x1xf32>
      %212 = vector.broadcast %211 : vector<16x1xf32> to vector<16x128xf32>
      %213 = arith.subf %201, %212 : vector<16x128xf32>
      %cst_96 = arith.constant 0.000000e+00 : f32
      %214 = vector.broadcast %cst_96 : f32 to vector<16x128xf32>
      %215 = arith.select %6, %213, %214 : vector<16x128xi1>, vector<16x128xf32>
      %216 = arith.mulf %215, %215 : vector<16x128xf32>
      %cst_97 = arith.constant dense<0.000000e+00> : vector<16xf32>
      %217 = vector.multi_reduction <add>, %216, %cst_97 [1] : vector<16x128xf32> to vector<16xf32>
      %218 = vector.shape_cast %217 : vector<16xf32> to vector<16x1xf32>
      %cst_98 = arith.constant 3.125000e-02 : f32
      %219 = vector.broadcast %cst_98 : f32 to vector<16x1xf32>
      %220 = arith.mulf %218, %219 : vector<16x1xf32>
      %cst_99 = arith.constant 9.99999974E-6 : f32
      %221 = vector.broadcast %cst_99 : f32 to vector<16x1xf32>
      %222 = arith.addf %220, %221 : vector<16x1xf32>
      %223 = math.rsqrt %222 : vector<16x1xf32>
      %224 = vector.broadcast %223 : vector<16x1xf32> to vector<16x128xf32>
      %225 = arith.mulf %215, %224 : vector<16x128xf32>
      %226 = vector.broadcast %206 : vector<1x128xf32> to vector<16x128xf32>
      %227 = arith.mulf %225, %226 : vector<16x128xf32>
      %228 = vector.broadcast %207 : vector<1x128xf32> to vector<16x128xf32>
      %229 = arith.addf %227, %228 : vector<16x128xf32>
      %230 = arith.truncf %229 : vector<16x128xf32> to vector<16x128xbf16>
      %c0_100 = arith.constant 0 : index
      %c0_101 = arith.constant 0 : index
      %231 = vector.load %arg17[%c0_100, %c0_101] : memref<128x128xbf16, #tpu.memory_space<vmem>>, vector<128x128xbf16>
      %cst_102 = arith.constant dense<0.000000e+00> : vector<16x128xf32>
      %232 = tpu.matmul %230, %231, %cst_102 {dimension_numbers = #tpu.dot_dimension_numbers<[1], [0], [0], [1], [0, 0, 1, 1], [], []>} : vector<16x128xbf16>, vector<128x128xbf16>, vector<16x128xf32> -> vector<16x128xf32>
      %c0_103 = arith.constant 0 : index
      %c0_104 = arith.constant 0 : index
      %233 = vector.load %arg18[%c0_103, %c0_104] : memref<16x128xf32, #tpu.memory_space<vmem>>, vector<16x128xf32>
      tpu.vector_store %arg18[%c0_103, %c0_104], %232 {strides = array<i32>} : memref<16x128xf32, #tpu.memory_space<vmem>>, vector<16x128xf32>,
    } else {
    }
    return
  }
  func.func @transform_0(%arg0: i32, %arg1: i32) -> (i32, i32) {
    %c0_i32 = arith.constant 0 : i32
    %c0_i32_0 = arith.constant 0 : i32
    return %arg0, %c0_i32 : i32, i32
  }
  func.func @transform_1(%arg0: i32, %arg1: i32) -> (i32, i32, i32) {
    %c0_i32 = arith.constant 0 : i32
    %c0_i32_0 = arith.constant 0 : i32
    %c0_i32_1 = arith.constant 0 : i32
    return %arg1, %c0_i32, %c0_i32_0 : i32, i32, i32
  }
  func.func @transform_2(%arg0: i32, %arg1: i32) -> (i32, i32, i32) {
    %c0_i32 = arith.constant 0 : i32
    %c0_i32_0 = arith.constant 0 : i32
    %c0_i32_1 = arith.constant 0 : i32
    return %arg1, %c0_i32, %c0_i32_0 : i32, i32, i32
  }
  func.func @transform_3(%arg0: i32, %arg1: i32) -> (i32, i32, i32) {
    %c0_i32 = arith.constant 0 : i32
    %c0_i32_0 = arith.constant 0 : i32
    %c0_i32_1 = arith.constant 0 : i32
    return %arg1, %c0_i32, %c0_i32_0 : i32, i32, i32
  }
  func.func @transform_4(%arg0: i32, %arg1: i32) -> (i32, i32, i32) {
    %c0_i32 = arith.constant 0 : i32
    %c0_i32_0 = arith.constant 0 : i32
    %c0_i32_1 = arith.constant 0 : i32
    return %arg1, %c0_i32, %c0_i32_0 : i32, i32, i32
  }
  func.func @transform_5(%arg0: i32, %arg1: i32) -> (i32, i32, i32) {
    %c0_i32 = arith.constant 0 : i32
    %c0_i32_0 = arith.constant 0 : i32
    %c0_i32_1 = arith.constant 0 : i32
    return %arg1, %c0_i32, %c0_i32_0 : i32, i32, i32
  }
  func.func @transform_6(%arg0: i32, %arg1: i32) -> (i32, i32, i32) {
    %c0_i32 = arith.constant 0 : i32
    %c0_i32_0 = arith.constant 0 : i32
    %c0_i32_1 = arith.constant 0 : i32
    return %arg1, %c0_i32, %c0_i32_0 : i32, i32, i32
  }
  func.func @transform_7(%arg0: i32, %arg1: i32) -> (i32, i32, i32) {
    %c0_i32 = arith.constant 0 : i32
    %c0_i32_0 = arith.constant 0 : i32
    %c0_i32_1 = arith.constant 0 : i32
    return %arg1, %c0_i32, %c0_i32_0 : i32, i32, i32
  }
  func.func @transform_8(%arg0: i32, %arg1: i32) -> (i32, i32, i32) {
    %c0_i32 = arith.constant 0 : i32
    %c0_i32_0 = arith.constant 0 : i32
    %c0_i32_1 = arith.constant 0 : i32
    return %arg1, %c0_i32, %c0_i32_0 : i32, i32, i32
  }
  func.func @transform_9(%arg0: i32, %arg1: i32) -> (i32, i32, i32) {
    %c0_i32 = arith.constant 0 : i32
    %c0_i32_0 = arith.constant 0 : i32
    %c0_i32_1 = arith.constant 0 : i32
    return %arg1, %c0_i32, %c0_i32_0 : i32, i32, i32
  }
  func.func @transform_10(%arg0: i32, %arg1: i32) -> (i32, i32, i32) {
    %c0_i32 = arith.constant 0 : i32
    %c0_i32_0 = arith.constant 0 : i32
    %c0_i32_1 = arith.constant 0 : i32
    return %arg1, %c0_i32, %c0_i32_0 : i32, i32, i32
  }
  func.func @transform_11(%arg0: i32, %arg1: i32) -> (i32, i32, i32) {
    %c0_i32 = arith.constant 0 : i32
    %c0_i32_0 = arith.constant 0 : i32
    %c0_i32_1 = arith.constant 0 : i32
    return %arg1, %c0_i32, %c0_i32_0 : i32, i32, i32
  }
  func.func @transform_12(%arg0: i32, %arg1: i32) -> (i32, i32, i32) {
    %c0_i32 = arith.constant 0 : i32
    %c0_i32_0 = arith.constant 0 : i32
    %c0_i32_1 = arith.constant 0 : i32
    return %arg1, %c0_i32, %c0_i32_0 : i32, i32, i32
  }
  func.func @transform_13(%arg0: i32, %arg1: i32) -> (i32, i32) {
    %c0_i32 = arith.constant 0 : i32
    %c0_i32_0 = arith.constant 0 : i32
    %c0_i32_1 = arith.constant 0 : i32
    return %c0_i32, %c0_i32_0 : i32, i32
  }
  func.func @transform_14(%arg0: i32, %arg1: i32) -> (i32, i32) {
    %c0_i32 = arith.constant 0 : i32
    %c0_i32_0 = arith.constant 0 : i32
    %c0_i32_1 = arith.constant 0 : i32
    return %c0_i32, %c0_i32_0 : i32, i32
  }
  func.func @transform_15(%arg0: i32, %arg1: i32) -> (i32, i32) {
    %c0_i32 = arith.constant 0 : i32
    %c0_i32_0 = arith.constant 0 : i32
    %c0_i32_1 = arith.constant 0 : i32
    return %c0_i32, %c0_i32_0 : i32, i32
  }
  func.func @transform_16(%arg0: i32, %arg1: i32) -> (i32, i32) {
    %c0_i32 = arith.constant 0 : i32
    %c0_i32_0 = arith.constant 0 : i32
    return %arg0, %c0_i32 : i32, i32
  }
}

</mosaic_0001>

<llo_original>
// kernel: gpt_forward.2
$region0: #{gpt_forward.2}
  #allocation0 [shape = 'u32[]', space=smem, size = 0x4, offset = 0x4, fixed_abs, tag = 'smem constant byte address 0x4 - core index']
  #allocation1 [shape = 'u32[144,128]{1,0:T(1,128)}', space=vmem, size = 0x12000, scoped, tag = 'internal scratch']
  %s0 = inlined_call_operand.vmem [shape: bf16[8,768], index: 0, kind: input, shape index: {}]
  %s1 = inlined_call_operand.vmem [shape: bf16[768,128], index: 1, kind: input, shape index: {}]
  %s2 = inlined_call_operand.vmem [shape: f32[1,128], index: 2, kind: input, shape index: {}]
  %s3 = inlined_call_operand.vmem [shape: bf16[128,128], index: 3, kind: input, shape index: {}]
  %s4 = inlined_call_operand.vmem [shape: f32[1,128], index: 4, kind: input, shape index: {}]
  %s5 = inlined_call_operand.vmem [shape: f32[8,128], index: 5, kind: output, shape index: {}]
  %s6 = sld [smem:[#allocation0]]
  $region30: #{gpt_forward.2} parent=0
    _
  %s8 = ssub.s32 1, %s6
  %s9 = scalar_select 0, %s8, %s6
  // Predicated region
  $region2: #{gpt_forward.2} parent=0 // pred_check
    _
  $region3: #{gpt_forward.2} parent=0 // pred_check_branch
    %11 = sbr.rel (0) target = $region5
  $region4: #{gpt_forward.2} parent=0 // pred_region
    _
  $region5: #{gpt_forward.2} parent=0 // pred_fallthru
    _
  // Predicated region
  $region6: #{gpt_forward.2} parent=0 // pred_check
    _
  $region7: #{gpt_forward.2} parent=0 // pred_check_branch
    %13 = sbr.rel (0) target = $region9
  $region8: #{gpt_forward.2} parent=0 // pred_region
    _
  $region9: #{gpt_forward.2} parent=0 // pred_fallthru
    _
  // Predicated region
  $region10: #{gpt_forward.2} parent=0 // pred_check
    _
  $region11: #{gpt_forward.2} parent=0 // pred_check_branch
    %15 = sbr.rel (0) target = $region13
  $region12: #{gpt_forward.2} parent=0 // pred_region
    _
  $region13: #{gpt_forward.2} parent=0 // pred_fallthru
    _
  // Predicated region
  $region14: #{gpt_forward.2} parent=0 // pred_check
    _
  $region15: #{gpt_forward.2} parent=0 // pred_check_branch
    %17 = sbr.rel (0) target = $region17
  $region16: #{gpt_forward.2} parent=0 // pred_region
    _
  $region17: #{gpt_forward.2} parent=0 // pred_fallthru
    _
  // Predicated region
  $region18: #{gpt_forward.2} parent=0 // pred_check
    _
  $region19: #{gpt_forward.2} parent=0 // pred_check_branch
    %19 = sbr.rel (0) target = $region21
  $region20: #{gpt_forward.2} parent=0 // pred_region
    _
  $region21: #{gpt_forward.2} parent=0 // pred_fallthru
    _
  %v21 = vld [vmem:[%s0] sm:$0xff]
  %v22 = vld [vmem:[%s0 + $0x8] sm:$0xff]
  %v23 = vld [vmem:[%s0 + $0x10] sm:$0xff]
  %v24 = vld [vmem:[%s1] sm:$0xf]
  %v25 = vld [vmem:[%s1 + $0x4] sm:$0xf]
  %v26 = vld [vmem:[%s1 + $0x8] sm:$0xf]
  %v27 = vld [vmem:[%s1 + $0xc] sm:$0xf]
  %v28 = vld [vmem:[%s1 + $0x10] sm:$0xf]
  %v29 = vld [vmem:[%s1 + $0x14] sm:$0xf]
  %v30 = vld [vmem:[%s1 + $0x18] sm:$0xf]
  %v31 = vld [vmem:[%s1 + $0x1c] sm:$0xf]
  %v32 = vld [vmem:[%s1 + $0x20] sm:$0xf]
  %v33 = vld [vmem:[%s1 + $0x24] sm:$0xf]
  %v34 = vld [vmem:[%s1 + $0x28] sm:$0xf]
  %v35 = vld [vmem:[%s1 + $0x2c] sm:$0xf]
  %v36 = vld [vmem:[%s1 + $0x30] sm:$0xf]
  %v37 = vld [vmem:[%s1 + $0x34] sm:$0xf]
  %v38 = vld [vmem:[%s1 + $0x38] sm:$0xf]
  %v39 = vld [vmem:[%s1 + $0x3c] sm:$0xf]
  %v40 = vld [vmem:[%s1 + $0x40] sm:$0xf]
  %v41 = vld [vmem:[%s1 + $0x44] sm:$0xf]
  %v42 = vld [vmem:[%s1 + $0x48] sm:$0xf]
  %v43 = vld [vmem:[%s1 + $0x4c] sm:$0xf]
  %v44 = vld [vmem:[%s1 + $0x50] sm:$0xf]
  %v45 = vld [vmem:[%s1 + $0x54] sm:$0xf]
  %v46 = vld [vmem:[%s1 + $0x58] sm:$0xf]
  %v47 = vld [vmem:[%s1 + $0x5c] sm:$0xf]
  %v48 = vld [vmem:[%s1 + $0x60] sm:$0xf]
  %v49 = vld [vmem:[%s1 + $0x64] sm:$0xf]
  %v50 = vld [vmem:[%s1 + $0x68] sm:$0xf]
  %v51 = vld [vmem:[%s1 + $0x6c] sm:$0xf]
  %v52 = vld [vmem:[%s1 + $0x70] sm:$0xf]
  %v53 = vld [vmem:[%s1 + $0x74] sm:$0xf]
  %v54 = vld [vmem:[%s1 + $0x78] sm:$0xf]
  %v55 = vld [vmem:[%s1 + $0x7c] sm:$0xf]
  %v56 = vld [vmem:[%s1 + $0x80] sm:$0xf]
  %v57 = vld [vmem:[%s1 + $0x84] sm:$0xf]
  %v58 = vld [vmem:[%s1 + $0x88] sm:$0xf]
  %v59 = vld [vmem:[%s1 + $0x8c] sm:$0xf]
  %v60 = vld [vmem:[%s1 + $0x90] sm:$0xf]
  %v61 = vld [vmem:[%s1 + $0x94] sm:$0xf]
  %v62 = vld [vmem:[%s1 + $0x98] sm:$0xf]
  %v63 = vld [vmem:[%s1 + $0x9c] sm:$0xf]
  %v64 = vld [vmem:[%s1 + $0xa0] sm:$0xf]
  %v65 = vld [vmem:[%s1 + $0xa4] sm:$0xf]
  %v66 = vld [vmem:[%s1 + $0xa8] sm:$0xf]
  %v67 = vld [vmem:[%s1 + $0xac] sm:$0xf]
  %v68 = vld [vmem:[%s1 + $0xb0] sm:$0xf]
  %v69 = vld [vmem:[%s1 + $0xb4] sm:$0xf]
  %v70 = vld [vmem:[%s1 + $0xb8] sm:$0xf]
  %v71 = vld [vmem:[%s1 + $0xbc] sm:$0xf]
  %v72 = vld [vmem:[%s1 + $0xc0] sm:$0xf]
  %v73 = vld [vmem:[%s1 + $0xc4] sm:$0xf]
  %v74 = vld [vmem:[%s1 + $0xc8] sm:$0xf]
  %v75 = vld [vmem:[%s1 + $0xcc] sm:$0xf]
  %v76 = vld [vmem:[%s1 + $0xd0] sm:$0xf]
  %v77 = vld [vmem:[%s1 + $0xd4] sm:$0xf]
  %v78 = vld [vmem:[%s1 + $0xd8] sm:$0xf]
  %v79 = vld [vmem:[%s1 + $0xdc] sm:$0xf]
  %v80 = vld [vmem:[%s1 + $0xe0] sm:$0xf]
  %v81 = vld [vmem:[%s1 + $0xe4] sm:$0xf]
  %v82 = vld [vmem:[%s1 + $0xe8] sm:$0xf]
  %v83 = vld [vmem:[%s1 + $0xec] sm:$0xf]
  %v84 = vld [vmem:[%s1 + $0xf0] sm:$0xf]
  %v85 = vld [vmem:[%s1 + $0xf4] sm:$0xf]
  %v86 = vld [vmem:[%s1 + $0xf8] sm:$0xf]
  %v87 = vld [vmem:[%s1 + $0xfc] sm:$0xf]
  %v88 = vld [vmem:[%s1 + $0x100] sm:$0xf]
  %v89 = vld [vmem:[%s1 + $0x104] sm:$0xf]
  %v90 = vld [vmem:[%s1 + $0x108] sm:$0xf]
  %v91 = vld [vmem:[%s1 + $0x10c] sm:$0xf]
  %v92 = vld [vmem:[%s1 + $0x110] sm:$0xf]
  %v93 = vld [vmem:[%s1 + $0x114] sm:$0xf]
  %v94 = vld [vmem:[%s1 + $0x118] sm:$0xf]
  %v95 = vld [vmem:[%s1 + $0x11c] sm:$0xf]
  %v96 = vld [vmem:[%s1 + $0x120] sm:$0xf]
  %v97 = vld [vmem:[%s1 + $0x124] sm:$0xf]
  %v98 = vld [vmem:[%s1 + $0x128] sm:$0xf]
  %v99 = vld [vmem:[%s1 + $0x12c] sm:$0xf]
  %v100 = vld [vmem:[%s1 + $0x130] sm:$0xf]
  %v101 = vld [vmem:[%s1 + $0x134] sm:$0xf]
  %v102 = vld [vmem:[%s1 + $0x138] sm:$0xf]
  %v103 = vld [vmem:[%s1 + $0x13c] sm:$0xf]
  %v104 = vld [vmem:[%s1 + $0x140] sm:$0xf]
  %v105 = vld [vmem:[%s1 + $0x144] sm:$0xf]
  %v106 = vld [vmem:[%s1 + $0x148] sm:$0xf]
  %v107 = vld [vmem:[%s1 + $0x14c] sm:$0xf]
  %v108 = vld [vmem:[%s1 + $0x150] sm:$0xf]
  %v109 = vld [vmem:[%s1 + $0x154] sm:$0xf]
  %v110 = vld [vmem:[%s1 + $0x158] sm:$0xf]
  %v111 = vld [vmem:[%s1 + $0x15c] sm:$0xf]
  %v112 = vld [vmem:[%s1 + $0x160] sm:$0xf]
  %v113 = vld [vmem:[%s1 + $0x164] sm:$0xf]
  %v114 = vld [vmem:[%s1 + $0x168] sm:$0xf]
  %v115 = vld [vmem:[%s1 + $0x16c] sm:$0xf]
  %v116 = vld [vmem:[%s1 + $0x170] sm:$0xf]
  %v117 = vld [vmem:[%s1 + $0x174] sm:$0xf]
  %v118 = vld [vmem:[%s1 + $0x178] sm:$0xf]
  %v119 = vld [vmem:[%s1 + $0x17c] sm:$0xf]
  %v120 = vld [vmem:[%s2] sm:$0x1]
  %v122 = vlaneseq
  %v123 = vshrl.u32 %v122, 7
  %v124 = vsub.s32 0, %v123
  %v125 = vrot.slane %v120, %v124
  %v130 = vunpack.c.l.b16 %v21
  %v131 = vunpack.c.h.b16 %v21
  %v132 = vunpack.c.l.b16 %v22
  %v133 = vunpack.c.h.b16 %v22
  %v134 = vunpack.c.l.b16 %v23
  %v135 = vunpack.c.h.b16 %v23
  %v136 = vpack.c.b16 %v130, %v130
  %v137 = vpack.c.b16 %v131, %v131
  %v138 = vpack.c.b16 %v132, %v132
  %v139 = vpack.c.b16 %v133, %v133
  %v140 = vpack.c.b16 %v134, %v134
  %v141 = vpack.c.b16 %v135, %v135
  %v244 = vunpack.c.l.b16 %v24
  %v245 = vunpack.c.l.b16 %v25
  %v246 = vunpack.c.l.b16 %v26
  %v247 = vunpack.c.l.b16 %v27
  %v248 = vunpack.c.l.b16 %v28
  %v249 = vunpack.c.l.b16 %v29
  %v250 = vunpack.c.l.b16 %v30
  %v251 = vunpack.c.l.b16 %v31
  %v252 = vunpack.c.l.b16 %v32
  %v253 = vunpack.c.l.b16 %v33
  %v254 = vunpack.c.l.b16 %v34
  %v255 = vunpack.c.l.b16 %v35
  %v256 = vunpack.c.l.b16 %v36
  %v257 = vunpack.c.l.b16 %v37
  %v258 = vunpack.c.l.b16 %v38
  %v259 = vunpack.c.l.b16 %v39
  %v260 = vunpack.c.l.b16 %v40
  %v261 = vunpack.c.l.b16 %v41
  %v262 = vunpack.c.l.b16 %v42
  %v263 = vunpack.c.l.b16 %v43
  %v264 = vunpack.c.l.b16 %v44
  %v265 = vunpack.c.l.b16 %v45
  %v266 = vunpack.c.l.b16 %v46
  %v267 = vunpack.c.l.b16 %v47
  %v268 = vunpack.c.l.b16 %v48
  %v269 = vunpack.c.l.b16 %v49
  %v270 = vunpack.c.l.b16 %v50
  %v271 = vunpack.c.l.b16 %v51
  %v272 = vunpack.c.l.b16 %v52
  %v273 = vunpack.c.l.b16 %v53
  %v274 = vunpack.c.l.b16 %v54
  %v275 = vunpack.c.l.b16 %v55
  %v276 = vunpack.c.l.b16 %v56
  %v277 = vunpack.c.l.b16 %v57
  %v278 = vunpack.c.l.b16 %v58
  %v279 = vunpack.c.l.b16 %v59
  %v280 = vunpack.c.l.b16 %v60
  %v281 = vunpack.c.l.b16 %v61
  %v282 = vunpack.c.l.b16 %v62
  %v283 = vunpack.c.l.b16 %v63
  %v284 = vunpack.c.l.b16 %v64
  %v285 = vunpack.c.l.b16 %v65
  %v286 = vunpack.c.l.b16 %v66
  %v287 = vunpack.c.l.b16 %v67
  %v288 = vunpack.c.l.b16 %v68
  %v289 = vunpack.c.l.b16 %v69
  %v290 = vunpack.c.l.b16 %v70
  %v291 = vunpack.c.l.b16 %v71
  %v292 = vunpack.c.l.b16 %v72
  %v293 = vunpack.c.l.b16 %v73
  %v294 = vunpack.c.l.b16 %v74
  %v295 = vunpack.c.l.b16 %v75
  %v296 = vunpack.c.l.b16 %v76
  %v297 = vunpack.c.l.b16 %v77
  %v298 = vunpack.c.l.b16 %v78
  %v299 = vunpack.c.l.b16 %v79
  %v300 = vunpack.c.l.b16 %v80
  %v301 = vunpack.c.l.b16 %v81
  %v302 = vunpack.c.l.b16 %v82
  %v303 = vunpack.c.l.b16 %v83
  %v304 = vunpack.c.l.b16 %v84
  %v305 = vunpack.c.l.b16 %v85
  %v306 = vunpack.c.l.b16 %v86
  %v307 = vunpack.c.l.b16 %v87
  %v308 = vunpack.c.l.b16 %v88
  %v309 = vunpack.c.l.b16 %v89
  %v310 = vunpack.c.l.b16 %v90
  %v311 = vunpack.c.l.b16 %v91
  %v312 = vunpack.c.l.b16 %v92
  %v313 = vunpack.c.l.b16 %v93
  %v314 = vunpack.c.l.b16 %v94
  %v315 = vunpack.c.l.b16 %v95
  %v316 = vunpack.c.l.b16 %v96
  %v317 = vunpack.c.l.b16 %v97
  %v318 = vunpack.c.l.b16 %v98
  %v319 = vunpack.c.l.b16 %v99
  %v320 = vunpack.c.l.b16 %v100
  %v321 = vunpack.c.l.b16 %v101
  %v322 = vunpack.c.l.b16 %v102
  %v323 = vunpack.c.l.b16 %v103
  %v324 = vunpack.c.l.b16 %v104
  %v325 = vunpack.c.l.b16 %v105
  %v326 = vunpack.c.l.b16 %v106
  %v327 = vunpack.c.l.b16 %v107
  %v328 = vunpack.c.l.b16 %v108
  %v329 = vunpack.c.l.b16 %v109
  %v330 = vunpack.c.l.b16 %v110
  %v331 = vunpack.c.l.b16 %v111
  %v332 = vunpack.c.l.b16 %v112
  %v333 = vunpack.c.l.b16 %v113
  %v334 = vunpack.c.l.b16 %v114
  %v335 = vunpack.c.l.b16 %v115
  %v336 = vunpack.c.l.b16 %v116
  %v337 = vunpack.c.l.b16 %v117
  %v338 = vunpack.c.l.b16 %v118
  %v339 = vunpack.c.l.b16 %v119
  %v340 = vpack.c.b16 %v245, %v244
  %v341 = vpack.c.b16 %v247, %v246
  %v342 = vpack.c.b16 %v249, %v248
  %v343 = vpack.c.b16 %v251, %v250
  %v344 = vpack.c.b16 %v253, %v252
  %v345 = vpack.c.b16 %v255, %v254
  %v346 = vpack.c.b16 %v257, %v256
  %v347 = vpack.c.b16 %v259, %v258
  %v348 = vpack.c.b16 %v261, %v260
  %v349 = vpack.c.b16 %v263, %v262
  %v350 = vpack.c.b16 %v265, %v264
  %v351 = vpack.c.b16 %v267, %v266
  %v352 = vpack.c.b16 %v269, %v268
  %v353 = vpack.c.b16 %v271, %v270
  %v354 = vpack.c.b16 %v273, %v272
  %v355 = vpack.c.b16 %v275, %v274
  %v356 = vpack.c.b16 %v277, %v276
  %v357 = vpack.c.b16 %v279, %v278
  %v358 = vpack.c.b16 %v281, %v280
  %v359 = vpack.c.b16 %v283, %v282
  %v360 = vpack.c.b16 %v285, %v284
  %v361 = vpack.c.b16 %v287, %v286
  %v362 = vpack.c.b16 %v289, %v288
  %v363 = vpack.c.b16 %v291, %v290
  %v364 = vpack.c.b16 %v293, %v292
  %v365 = vpack.c.b16 %v295, %v294
  %v366 = vpack.c.b16 %v297, %v296
  %v367 = vpack.c.b16 %v299, %v298
  %v368 = vpack.c.b16 %v301, %v300
  %v369 = vpack.c.b16 %v303, %v302
  %v370 = vpack.c.b16 %v305, %v304
  %v371 = vpack.c.b16 %v307, %v306
  %v372 = vpack.c.b16 %v309, %v308
  %v373 = vpack.c.b16 %v311, %v310
  %v374 = vpack.c.b16 %v313, %v312
  %v375 = vpack.c.b16 %v315, %v314
  %v376 = vpack.c.b16 %v317, %v316
  %v377 = vpack.c.b16 %v319, %v318
  %v378 = vpack.c.b16 %v321, %v320
  %v379 = vpack.c.b16 %v323, %v322
  %v380 = vpack.c.b16 %v325, %v324
  %v381 = vpack.c.b16 %v327, %v326
  %v382 = vpack.c.b16 %v329, %v328
  %v383 = vpack.c.b16 %v331, %v330
  %v384 = vpack.c.b16 %v333, %v332
  %v385 = vpack.c.b16 %v335, %v334
  %v386 = vpack.c.b16 %v337, %v336
  %v387 = vpack.c.b16 %v339, %v338
  %436 = vmatprep.subr.bf16.mxu0 0
  %437 = vmatpush1.bf16.msra.mxu0 %v347
  %438 = vmatprep.subr.bf16.mxu0 0
  %439 = vmatpush1.bf16.msra.mxu0 %v346
  %440 = vmatprep.subr.bf16.mxu0 0
  %441 = vmatpush1.bf16.msra.mxu0 %v345
  %442 = vmatprep.subr.bf16.mxu0 0
  %443 = vmatpush1.bf16.msra.mxu0 %v344
  %444 = vmatprep.subr.bf16.mxu0 0
  %445 = vmatpush1.bf16.msra.mxu0 %v343
  %446 = vmatprep.subr.bf16.mxu0 0
  %447 = vmatpush1.bf16.msra.mxu0 %v342
  %448 = vmatprep.subr.bf16.mxu0 0
  %449 = vmatpush1.bf16.msra.mxu0 %v341
  %450 = vmatprep.subr.bf16.mxu0 0
  %451 = vmatpush1.bf16.msra.mxu0 %v340
  %452 = vmatprep.subr.bf16.mxu0 0
  %453 = vmatpush2.bf16.msra.mxu0 %v355
  %454 = vmatprep.subr.bf16.mxu0 0
  %455 = vmatpush2.bf16.msra.mxu0 %v354
  %456 = vmatprep.subr.bf16.mxu0 0
  %457 = vmatpush2.bf16.msra.mxu0 %v353
  %458 = vmatprep.subr.bf16.mxu0 0
  %459 = vmatpush2.bf16.msra.mxu0 %v352
  %460 = vmatprep.subr.bf16.mxu0 0
  %461 = vmatpush2.bf16.msra.mxu0 %v351
  %462 = vmatprep.subr.bf16.mxu0 0
  %463 = vmatpush2.bf16.msra.mxu0 %v350
  %464 = vmatprep.subr.bf16.mxu0 0
  %465 = vmatpush2.bf16.msra.mxu0 %v349
  %466 = vmatprep.subr.bf16.mxu0 0
  %467 = vmatpush2.bf16.msra.mxu0 %v348
  %468 = vmatprep.mubr.bf16.mxu0 %v137
  %469 = vmatmul.mubr.bf16.gmra.mxu0 %v136
  %v470 = vpop.f32.mrf.mxu0
  %v471 = vadd.f32 %v125, %v470
  %v472 = vpop.f32.mrf.mxu0
  %v473 = vpop.f32.mrf.mxu0
  %v474 = vpop.f32.mrf.mxu0
  %475 = vdwg.mxu0
  %476 = vmatprep.subr.bf16.mxu0 0
  %477 = vmatpush1.bf16.msra.mxu0 %v363
  %478 = vmatprep.subr.bf16.mxu0 0
  %479 = vmatpush1.bf16.msra.mxu0 %v362
  %480 = vmatprep.subr.bf16.mxu0 0
  %481 = vmatpush1.bf16.msra.mxu0 %v361
  %482 = vmatprep.subr.bf16.mxu0 0
  %483 = vmatpush1.bf16.msra.mxu0 %v360
  %484 = vmatprep.subr.bf16.mxu0 0
  %485 = vmatpush1.bf16.msra.mxu0 %v359
  %486 = vmatprep.subr.bf16.mxu0 0
  %487 = vmatpush1.bf16.msra.mxu0 %v358
  %488 = vmatprep.subr.bf16.mxu0 0
  %489 = vmatpush1.bf16.msra.mxu0 %v357
  %490 = vmatprep.subr.bf16.mxu0 0
  %491 = vmatpush1.bf16.msra.mxu0 %v356
  %492 = vmatprep.subr.bf16.mxu0 0
  %493 = vmatpush2.bf16.msra.mxu0 %v371
  %494 = vmatprep.subr.bf16.mxu0 0
  %495 = vmatpush2.bf16.msra.mxu0 %v370
  %496 = vmatprep.subr.bf16.mxu0 0
  %497 = vmatpush2.bf16.msra.mxu0 %v369
  %498 = vmatprep.subr.bf16.mxu0 0
  %499 = vmatpush2.bf16.msra.mxu0 %v368
  %500 = vmatprep.subr.bf16.mxu0 0
  %501 = vmatpush2.bf16.msra.mxu0 %v367
  %502 = vmatprep.subr.bf16.mxu0 0
  %503 = vmatpush2.bf16.msra.mxu0 %v366
  %504 = vmatprep.subr.bf16.mxu0 0
  %505 = vmatpush2.bf16.msra.mxu0 %v365
  %506 = vmatprep.subr.bf16.mxu0 0
  %507 = vmatpush2.bf16.msra.mxu0 %v364
  %508 = vmatprep.mubr.bf16.mxu0 %v139
  %509 = vmatmul.mubr.bf16.gmra.mxu0 %v138
  %v510 = vpop.f32.mrf.mxu0
  %v511 = vadd.f32 %v471, %v510
  %v512 = vpop.f32.mrf.mxu0
  %v513 = vpop.f32.mrf.mxu0
  %v514 = vpop.f32.mrf.mxu0
  %515 = vdwg.mxu0
  %516 = vmatprep.subr.bf16.mxu0 0
  %517 = vmatpush1.bf16.msra.mxu0 %v379
  %518 = vmatprep.subr.bf16.mxu0 0
  %519 = vmatpush1.bf16.msra.mxu0 %v378
  %520 = vmatprep.subr.bf16.mxu0 0
  %521 = vmatpush1.bf16.msra.mxu0 %v377
  %522 = vmatprep.subr.bf16.mxu0 0
  %523 = vmatpush1.bf16.msra.mxu0 %v376
  %524 = vmatprep.subr.bf16.mxu0 0
  %525 = vmatpush1.bf16.msra.mxu0 %v375
  %526 = vmatprep.subr.bf16.mxu0 0
  %527 = vmatpush1.bf16.msra.mxu0 %v374
  %528 = vmatprep.subr.bf16.mxu0 0
  %529 = vmatpush1.bf16.msra.mxu0 %v373
  %530 = vmatprep.subr.bf16.mxu0 0
  %531 = vmatpush1.bf16.msra.mxu0 %v372
  %532 = vmatprep.subr.bf16.mxu0 0
  %533 = vmatpush2.bf16.msra.mxu0 %v387
  %534 = vmatprep.subr.bf16.mxu0 0
  %535 = vmatpush2.bf16.msra.mxu0 %v386
  %536 = vmatprep.subr.bf16.mxu0 0
  %537 = vmatpush2.bf16.msra.mxu0 %v385
  %538 = vmatprep.subr.bf16.mxu0 0
  %539 = vmatpush2.bf16.msra.mxu0 %v384
  %540 = vmatprep.subr.bf16.mxu0 0
  %541 = vmatpush2.bf16.msra.mxu0 %v383
  %542 = vmatprep.subr.bf16.mxu0 0
  %543 = vmatpush2.bf16.msra.mxu0 %v382
  %544 = vmatprep.subr.bf16.mxu0 0
  %545 = vmatpush2.bf16.msra.mxu0 %v381
  %546 = vmatprep.subr.bf16.mxu0 0
  %547 = vmatpush2.bf16.msra.mxu0 %v380
  %548 = vmatprep.mubr.bf16.mxu0 %v141
  %549 = vmatmul.mubr.bf16.gmra.mxu0 %v140
  %v550 = vpop.f32.mrf.mxu0
  %v551 = vadd.f32 %v511, %v550
  %v552 = vpop.f32.mrf.mxu0
  %v553 = vpop.f32.mrf.mxu0
  %v554 = vpop.f32.mrf.mxu0
  %555 = vdwg.mxu0
  %v556 = vpack.c.bf16 %v551, %v551
  %v557 = vld [vmem:[%s3] sm:$0xf]
  %v558 = vld [vmem:[%s3 + $0x4] sm:$0xf]
  %v559 = vld [vmem:[%s3 + $0x8] sm:$0xf]
  %v560 = vld [vmem:[%s3 + $0xc] sm:$0xf]
  %v561 = vld [vmem:[%s3 + $0x10] sm:$0xf]
  %v562 = vld [vmem:[%s3 + $0x14] sm:$0xf]
  %v563 = vld [vmem:[%s3 + $0x18] sm:$0xf]
  %v564 = vld [vmem:[%s3 + $0x1c] sm:$0xf]
  %v565 = vld [vmem:[%s3 + $0x20] sm:$0xf]
  %v566 = vld [vmem:[%s3 + $0x24] sm:$0xf]
  %v567 = vld [vmem:[%s3 + $0x28] sm:$0xf]
  %v568 = vld [vmem:[%s3 + $0x2c] sm:$0xf]
  %v569 = vld [vmem:[%s3 + $0x30] sm:$0xf]
  %v570 = vld [vmem:[%s3 + $0x34] sm:$0xf]
  %v571 = vld [vmem:[%s3 + $0x38] sm:$0xf]
  %v572 = vld [vmem:[%s3 + $0x3c] sm:$0xf]
  %v573 = vld [vmem:[%s4] sm:$0x1]
  %v575 = vlaneseq
  %v576 = vshrl.u32 %v575, 7
  %v577 = vsub.s32 0, %v576
  %v578 = vrot.slane %v573, %v577
  %v596 = vunpack.c.l.b16 %v557
  %v597 = vunpack.c.l.b16 %v558
  %v598 = vunpack.c.l.b16 %v559
  %v599 = vunpack.c.l.b16 %v560
  %v600 = vunpack.c.l.b16 %v561
  %v601 = vunpack.c.l.b16 %v562
  %v602 = vunpack.c.l.b16 %v563
  %v603 = vunpack.c.l.b16 %v564
  %v604 = vunpack.c.l.b16 %v565
  %v605 = vunpack.c.l.b16 %v566
  %v606 = vunpack.c.l.b16 %v567
  %v607 = vunpack.c.l.b16 %v568
  %v608 = vunpack.c.l.b16 %v569
  %v609 = vunpack.c.l.b16 %v570
  %v610 = vunpack.c.l.b16 %v571
  %v611 = vunpack.c.l.b16 %v572
  %v612 = vpack.c.b16 %v597, %v596
  %v613 = vpack.c.b16 %v599, %v598
  %v614 = vpack.c.b16 %v601, %v600
  %v615 = vpack.c.b16 %v603, %v602
  %v616 = vpack.c.b16 %v605, %v604
  %v617 = vpack.c.b16 %v607, %v606
  %v618 = vpack.c.b16 %v609, %v608
  %v619 = vpack.c.b16 %v611, %v610
  %628 = vmatprep.subr.bf16.mxu0 0
  %629 = vmatpush1.bf16.msra.mxu0 %v619
  %630 = vmatprep.subr.bf16.mxu0 0
  %631 = vmatpush1.bf16.msra.mxu0 %v618
  %632 = vmatprep.subr.bf16.mxu0 0
  %633 = vmatpush1.bf16.msra.mxu0 %v617
  %634 = vmatprep.subr.bf16.mxu0 0
  %635 = vmatpush1.bf16.msra.mxu0 %v616
  %636 = vmatprep.subr.bf16.mxu0 0
  %637 = vmatpush1.bf16.msra.mxu0 %v615
  %638 = vmatprep.subr.bf16.mxu0 0
  %639 = vmatpush1.bf16.msra.mxu0 %v614
  %640 = vmatprep.subr.bf16.mxu0 0
  %641 = vmatpush1.bf16.msra.mxu0 %v613
  %642 = vmatprep.subr.bf16.mxu0 0
  %643 = vmatpush1.bf16.msra.mxu0 %v612
  %644 = vmatprep.subr.bf16.mxu0 0
  %645 = vmatpush2.bf16.msra.mxu0 0
  %646 = vmatprep.subr.bf16.mxu0 0
  %647 = vmatpush2.bf16.msra.mxu0 0
  %648 = vmatprep.subr.bf16.mxu0 0
  %649 = vmatpush2.bf16.msra.mxu0 0
  %650 = vmatprep.subr.bf16.mxu0 0
  %651 = vmatpush2.bf16.msra.mxu0 0
  %652 = vmatprep.subr.bf16.mxu0 0
  %653 = vmatpush2.bf16.msra.mxu0 0
  %654 = vmatprep.subr.bf16.mxu0 0
  %655 = vmatpush2.bf16.msra.mxu0 0
  %656 = vmatprep.subr.bf16.mxu0 0
  %657 = vmatpush2.bf16.msra.mxu0 0
  %658 = vmatprep.subr.bf16.mxu0 0
  %659 = vmatpush2.bf16.msra.mxu0 0
  %660 = vmatprep.mubr.bf16.mxu0 0
  %661 = vmatmul.mubr.bf16.gmra.mxu0 %v556
  %v662 = vpop.f32.mrf.mxu0
  %v663 = vadd.f32 %v578, %v662
  %v664 = vpop.f32.mrf.mxu0
  %v665 = vpop.f32.mrf.mxu0
  %v666 = vpop.f32.mrf.mxu0
  %667 = vdwg.mxu0
  %668 = vst [vmem:[%s5] sm:$0xff] %v663
  // Predicated region
  $region22: #{gpt_forward.2} parent=0 // pred_check
    _
  $region23: #{gpt_forward.2} parent=0 // pred_check_branch
    %670 = sbr.rel (0) target = $region25
  $region24: #{gpt_forward.2} parent=0 // pred_region
    _
  $region25: #{gpt_forward.2} parent=0 // pred_fallthru
    _
  // Predicated region
  $region26: #{gpt_forward.2} parent=0 // pred_check
    _
  $region27: #{gpt_forward.2} parent=0 // pred_check_branch
    %672 = sbr.rel (0) target = $region29
  $region28: #{gpt_forward.2} parent=0 // pred_region
    _
  $region29: #{gpt_forward.2} parent=0 // pred_fallthru
    _

// kernel: gpt_forward.3
$region0: #{gpt_forward.3}
  #allocation0 [shape = 'u32[]', space=smem, size = 0x4, offset = 0x4, fixed_abs, tag = 'smem constant byte address 0x4 - core index']
  #allocation1 [shape = 'u32[144,128]{1,0:T(1,128)}', space=vmem, size = 0x12000, scoped, tag = 'internal scratch']
  #allocation2 [shape = 'f32[16,128]{1,0:T(8,128)}', space=vmem, size = 0x2000, scoped, tag = 'scratch operand']
  %s0 = inlined_call_operand.vmem [shape: f32[32,128], index: 0, kind: input, shape index: {}]
  %s1 = inlined_call_operand.vmem [shape: f32[2,1,128], index: 1, kind: input, shape index: {}]
  %s2 = inlined_call_operand.vmem [shape: f32[2,1,128], index: 2, kind: input, shape index: {}]
  %s3 = inlined_call_operand.vmem [shape: bf16[2,128,384], index: 3, kind: input, shape index: {}]
  %s4 = inlined_call_operand.vmem [shape: f32[2,1,384], index: 4, kind: input, shape index: {}]
  %s5 = inlined_call_operand.vmem [shape: bf16[2,128,128], index: 5, kind: input, shape index: {}]
  %s6 = inlined_call_operand.vmem [shape: f32[2,1,128], index: 6, kind: input, shape index: {}]
  %s7 = inlined_call_operand.vmem [shape: f32[2,1,128], index: 7, kind: input, shape index: {}]
  %s8 = inlined_call_operand.vmem [shape: f32[2,1,128], index: 8, kind: input, shape index: {}]
  %s9 = inlined_call_operand.vmem [shape: bf16[2,128,128], index: 9, kind: input, shape index: {}]
  %s10 = inlined_call_operand.vmem [shape: f32[2,1,128], index: 10, kind: input, shape index: {}]
  %s11 = inlined_call_operand.vmem [shape: bf16[2,128,128], index: 11, kind: input, shape index: {}]
  %s12 = inlined_call_operand.vmem [shape: f32[2,1,128], index: 12, kind: input, shape index: {}]
  %s13 = inlined_call_operand.vmem [shape: f32[1,128], index: 13, kind: input, shape index: {}]
  %s14 = inlined_call_operand.vmem [shape: f32[1,128], index: 14, kind: input, shape index: {}]
  %s15 = inlined_call_operand.vmem [shape: bf16[128,128], index: 15, kind: input, shape index: {}]
  %s16 = inlined_call_operand.vmem [shape: f32[32,128], index: 16, kind: output, shape index: {}]
  %s17 = sld [smem:[#allocation0]]
  $region105: #{gpt_forward.3} parent=0
    _
  %s19 = ssub.s32 1, %s17
  %s20 = scalar_select 0, %s19, %s17
  loop: start=0, step=1, limit=6
  $region2: #{gpt_forward.3} parent=0 // loop_pre_header
    _
  $region3: #{gpt_forward.3} parent=0 // loop_header
    %s22 = sphi 0, %s26
    %p23 = scmp.ge.s32.totalorder %s22, 6
    %s29 = sphi 0, %s41
    %s30 = sphi 0, %s37
    %s31 = sphi 0, %s29
    %s32 = sphi 0, %s30
    %s33 = sphi 0, %s31
    %s34 = sphi 0, %s32
    %s44 = sphi 0, %s46
    %s47 = sphi 0, %s44
    %s48 = sphi 0, %s47
    %s64 = sphi 0, %s48
    %s70 = sphi 0, %s72
    %s73 = sphi 0, %s70
    %s74 = sphi 0, %s73
    %s90 = sphi 0, %s74
    %s96 = sphi 0, %s98
    %s99 = sphi 0, %s96
    %s100 = sphi 0, %s99
    %s116 = sphi 0, %s100
    %s122 = sphi 0, %s124
    %s125 = sphi 0, %s122
    %s126 = sphi 0, %s125
    %s142 = sphi 0, %s126
    %s148 = sphi 0, %s150
    %s151 = sphi 0, %s148
    %s152 = sphi 0, %s151
    %s168 = sphi 0, %s152
    %s174 = sphi 0, %s176
    %s177 = sphi 0, %s174
    %s178 = sphi 0, %s177
    %s194 = sphi 0, %s178
    %s200 = sphi 0, %s202
    %s203 = sphi 0, %s200
    %s204 = sphi 0, %s203
    %s220 = sphi 0, %s204
    %s226 = sphi 0, %s228
    %s229 = sphi 0, %s226
    %s230 = sphi 0, %s229
    %s246 = sphi 0, %s230
    %s252 = sphi 0, %s254
    %s255 = sphi 0, %s252
    %s256 = sphi 0, %s255
    %s272 = sphi 0, %s256
    %s278 = sphi 0, %s280
    %s281 = sphi 0, %s278
    %s282 = sphi 0, %s281
    %s298 = sphi 0, %s282
    %s304 = sphi 0, %s306
    %s307 = sphi 0, %s304
    %s308 = sphi 0, %s307
    %s324 = sphi 0, %s308
    %s330 = sphi 0, %s332
    %s333 = sphi 0, %s330
    %s334 = sphi 0, %s333
    %s350 = sphi 0, %s334
    %s356 = sphi 0, %s358
    %s359 = sphi 0, %s356
    %s360 = sphi 0, %s359
    %s376 = sphi 0, %s360
    %s380 = sphi 0, %s380
    %s382 = sphi 0, %s380
    %s383 = sphi 0, %s382
    %s397 = sphi 0, %s383
    %s401 = sphi 0, %s401
    %s403 = sphi 0, %s401
    %s404 = sphi 0, %s403
    %s418 = sphi 0, %s404
    %s422 = sphi 0, %s422
    %s424 = sphi 0, %s422
    %s425 = sphi 0, %s424
    %s439 = sphi 0, %s425
    %s445 = sphi 0, %s447
    %s448 = sphi 0, %s445
    %s449 = sphi 0, %s448
    %s465 = sphi 0, %s449
  $region4: #{gpt_forward.3} parent=0 // loop_header_branch
    %25 = sbr.rel (%p23) target = $region8
  $region5: #{gpt_forward.3} parent=0 // loop_body
    %s27 = ssub.s32 %s22, 1
    %s28 = ssub.s32 %s22, 2
    %s35 = sadd.s32 1, %s30
    %p36 = scmp.ge.s32.totalorder %s35, 2
    %s37 = scalar_select %p36, 0, %s35
    %s38 = sadd.s32 1, %s29
    %s39 = scalar_select %p36, %s38, %s29
    %p40 = scmp.ge.s32.totalorder %s39, 2
    %s41 = scalar_select %p40, 0, %s39
    %s42 = ssub.s32 %s29, %s41
    %p43 = scmp.eq.s32.totalorder %s42, 0
    %s45 = sadd.s32 %s44, 1
    %s46 = scalar_select %p43, %s44, %s45
    %p49 = pneg %p43
    %p50 = scmp.eq.s32.totalorder %s22, 3
    %p51 = por %p49, %p50
    %p52 = scmp.ne.s32.totalorder %s44, %s47
    %p53 = scmp.eq.s32.totalorder %s22, 0
    %p54 = por %p52, %p53
    %p55 = scmp.ne.s32.totalorder %s44, %s47
    %p56 = scmp.eq.s32.totalorder %s27, 3
    %p57 = por %p55, %p56
    %p58 = scmp.ne.s32.totalorder %s47, %s48
    %p59 = scmp.eq.s32.totalorder %s27, 0
    %p60 = por %p58, %p59
    %p61 = scmp.ne.s32.totalorder %s47, %s48
    %p62 = scmp.eq.s32.totalorder %s28, 3
    %p63 = por %p61, %p62
    %p65 = scmp.ne.s32.totalorder %s48, %s64
    %p66 = scmp.eq.s32.totalorder %s28, 0
    %p67 = por %p65, %p66
    %s68 = ssub.s32 %s30, %s37
    %p69 = scmp.eq.s32.totalorder %s68, 0
    %s71 = sadd.s32 %s70, 1
    %s72 = scalar_select %p69, %s70, %s71
    %p75 = pneg %p69
    %p76 = scmp.eq.s32.totalorder %s22, 3
    %p77 = por %p75, %p76
    %p78 = scmp.ne.s32.totalorder %s70, %s73
    %p79 = scmp.eq.s32.totalorder %s22, 0
    %p80 = por %p78, %p79
    %p81 = scmp.ne.s32.totalorder %s70, %s73
    %p82 = scmp.eq.s32.totalorder %s27, 3
    %p83 = por %p81, %p82
    %p84 = scmp.ne.s32.totalorder %s73, %s74
    %p85 = scmp.eq.s32.totalorder %s27, 0
    %p86 = por %p84, %p85
    %p87 = scmp.ne.s32.totalorder %s73, %s74
    %p88 = scmp.eq.s32.totalorder %s28, 3
    %p89 = por %p87, %p88
    %p91 = scmp.ne.s32.totalorder %s74, %s90
    %p92 = scmp.eq.s32.totalorder %s28, 0
    %p93 = por %p91, %p92
    %s94 = ssub.s32 %s30, %s37
    %p95 = scmp.eq.s32.totalorder %s94, 0
    %s97 = sadd.s32 %s96, 1
    %s98 = scalar_select %p95, %s96, %s97
    %p101 = pneg %p95
    %p102 = scmp.eq.s32.totalorder %s22, 3
    %p103 = por %p101, %p102
    %p104 = scmp.ne.s32.totalorder %s96, %s99
    %p105 = scmp.eq.s32.totalorder %s22, 0
    %p106 = por %p104, %p105
    %p107 = scmp.ne.s32.totalorder %s96, %s99
    %p108 = scmp.eq.s32.totalorder %s27, 3
    %p109 = por %p107, %p108
    %p110 = scmp.ne.s32.totalorder %s99, %s100
    %p111 = scmp.eq.s32.totalorder %s27, 0
    %p112 = por %p110, %p111
    %p113 = scmp.ne.s32.totalorder %s99, %s100
    %p114 = scmp.eq.s32.totalorder %s28, 3
    %p115 = por %p113, %p114
    %p117 = scmp.ne.s32.totalorder %s100, %s116
    %p118 = scmp.eq.s32.totalorder %s28, 0
    %p119 = por %p117, %p118
    %s120 = ssub.s32 %s30, %s37
    %p121 = scmp.eq.s32.totalorder %s120, 0
    %s123 = sadd.s32 %s122, 1
    %s124 = scalar_select %p121, %s122, %s123
    %p127 = pneg %p121
    %p128 = scmp.eq.s32.totalorder %s22, 3
    %p129 = por %p127, %p128
    %p130 = scmp.ne.s32.totalorder %s122, %s125
    %p131 = scmp.eq.s32.totalorder %s22, 0
    %p132 = por %p130, %p131
    %p133 = scmp.ne.s32.totalorder %s122, %s125
    %p134 = scmp.eq.s32.totalorder %s27, 3
    %p135 = por %p133, %p134
    %p136 = scmp.ne.s32.totalorder %s125, %s126
    %p137 = scmp.eq.s32.totalorder %s27, 0
    %p138 = por %p136, %p137
    %p139 = scmp.ne.s32.totalorder %s125, %s126
    %p140 = scmp.eq.s32.totalorder %s28, 3
    %p141 = por %p139, %p140
    %p143 = scmp.ne.s32.totalorder %s126, %s142
    %p144 = scmp.eq.s32.totalorder %s28, 0
    %p145 = por %p143, %p144
    %s146 = ssub.s32 %s30, %s37
    %p147 = scmp.eq.s32.totalorder %s146, 0
    %s149 = sadd.s32 %s148, 1
    %s150 = scalar_select %p147, %s148, %s149
    %p153 = pneg %p147
    %p154 = scmp.eq.s32.totalorder %s22, 3
    %p155 = por %p153, %p154
    %p156 = scmp.ne.s32.totalorder %s148, %s151
    %p157 = scmp.eq.s32.totalorder %s22, 0
    %p158 = por %p156, %p157
    %p159 = scmp.ne.s32.totalorder %s148, %s151
    %p160 = scmp.eq.s32.totalorder %s27, 3
    %p161 = por %p159, %p160
    %p162 = scmp.ne.s32.totalorder %s151, %s152
    %p163 = scmp.eq.s32.totalorder %s27, 0
    %p164 = por %p162, %p163
    %p165 = scmp.ne.s32.totalorder %s151, %s152
    %p166 = scmp.eq.s32.totalorder %s28, 3
    %p167 = por %p165, %p166
    %p169 = scmp.ne.s32.totalorder %s152, %s168
    %p170 = scmp.eq.s32.totalorder %s28, 0
    %p171 = por %p169, %p170
    %s172 = ssub.s32 %s30, %s37
    %p173 = scmp.eq.s32.totalorder %s172, 0
    %s175 = sadd.s32 %s174, 1
    %s176 = scalar_select %p173, %s174, %s175
    %p179 = pneg %p173
    %p180 = scmp.eq.s32.totalorder %s22, 3
    %p181 = por %p179, %p180
    %p182 = scmp.ne.s32.totalorder %s174, %s177
    %p183 = scmp.eq.s32.totalorder %s22, 0
    %p184 = por %p182, %p183
    %p185 = scmp.ne.s32.totalorder %s174, %s177
    %p186 = scmp.eq.s32.totalorder %s27, 3
    %p187 = por %p185, %p186
    %p188 = scmp.ne.s32.totalorder %s177, %s178
    %p189 = scmp.eq.s32.totalorder %s27, 0
    %p190 = por %p188, %p189
    %p191 = scmp.ne.s32.totalorder %s177, %s178
    %p192 = scmp.eq.s32.totalorder %s28, 3
    %p193 = por %p191, %p192
    %p195 = scmp.ne.s32.totalorder %s178, %s194
    %p196 = scmp.eq.s32.totalorder %s28, 0
    %p197 = por %p195, %p196
    %s198 = ssub.s32 %s30, %s37
    %p199 = scmp.eq.s32.totalorder %s198, 0
    %s201 = sadd.s32 %s200, 1
    %s202 = scalar_select %p199, %s200, %s201
    %p205 = pneg %p199
    %p206 = scmp.eq.s32.totalorder %s22, 3
    %p207 = por %p205, %p206
    %p208 = scmp.ne.s32.totalorder %s200, %s203
    %p209 = scmp.eq.s32.totalorder %s22, 0
    %p210 = por %p208, %p209
    %p211 = scmp.ne.s32.totalorder %s200, %s203
    %p212 = scmp.eq.s32.totalorder %s27, 3
    %p213 = por %p211, %p212
    %p214 = scmp.ne.s32.totalorder %s203, %s204
    %p215 = scmp.eq.s32.totalorder %s27, 0
    %p216 = por %p214, %p215
    %p217 = scmp.ne.s32.totalorder %s203, %s204
    %p218 = scmp.eq.s32.totalorder %s28, 3
    %p219 = por %p217, %p218
    %p221 = scmp.ne.s32.totalorder %s204, %s220
    %p222 = scmp.eq.s32.totalorder %s28, 0
    %p223 = por %p221, %p222
    %s224 = ssub.s32 %s30, %s37
    %p225 = scmp.eq.s32.totalorder %s224, 0
    %s227 = sadd.s32 %s226, 1
    %s228 = scalar_select %p225, %s226, %s227
    %p231 = pneg %p225
    %p232 = scmp.eq.s32.totalorder %s22, 3
    %p233 = por %p231, %p232
    %p234 = scmp.ne.s32.totalorder %s226, %s229
    %p235 = scmp.eq.s32.totalorder %s22, 0
    %p236 = por %p234, %p235
    %p237 = scmp.ne.s32.totalorder %s226, %s229
    %p238 = scmp.eq.s32.totalorder %s27, 3
    %p239 = por %p237, %p238
    %p240 = scmp.ne.s32.totalorder %s229, %s230
    %p241 = scmp.eq.s32.totalorder %s27, 0
    %p242 = por %p240, %p241
    %p243 = scmp.ne.s32.totalorder %s229, %s230
    %p244 = scmp.eq.s32.totalorder %s28, 3
    %p245 = por %p243, %p244
    %p247 = scmp.ne.s32.totalorder %s230, %s246
    %p248 = scmp.eq.s32.totalorder %s28, 0
    %p249 = por %p247, %p248
    %s250 = ssub.s32 %s30, %s37
    %p251 = scmp.eq.s32.totalorder %s250, 0
    %s253 = sadd.s32 %s252, 1
    %s254 = scalar_select %p251, %s252, %s253
    %p257 = pneg %p251
    %p258 = scmp.eq.s32.totalorder %s22, 3
    %p259 = por %p257, %p258
    %p260 = scmp.ne.s32.totalorder %s252, %s255
    %p261 = scmp.eq.s32.totalorder %s22, 0
    %p262 = por %p260, %p261
    %p263 = scmp.ne.s32.totalorder %s252, %s255
    %p264 = scmp.eq.s32.totalorder %s27, 3
    %p265 = por %p263, %p264
    %p266 = scmp.ne.s32.totalorder %s255, %s256
    %p267 = scmp.eq.s32.totalorder %s27, 0
    %p268 = por %p266, %p267
    %p269 = scmp.ne.s32.totalorder %s255, %s256
    %p270 = scmp.eq.s32.totalorder %s28, 3
    %p271 = por %p269, %p270
    %p273 = scmp.ne.s32.totalorder %s256, %s272
    %p274 = scmp.eq.s32.totalorder %s28, 0
    %p275 = por %p273, %p274
    %s276 = ssub.s32 %s30, %s37
    %p277 = scmp.eq.s32.totalorder %s276, 0
    %s279 = sadd.s32 %s278, 1
    %s280 = scalar_select %p277, %s278, %s279
    %p283 = pneg %p277
    %p284 = scmp.eq.s32.totalorder %s22, 3
    %p285 = por %p283, %p284
    %p286 = scmp.ne.s32.totalorder %s278, %s281
    %p287 = scmp.eq.s32.totalorder %s22, 0
    %p288 = por %p286, %p287
    %p289 = scmp.ne.s32.totalorder %s278, %s281
    %p290 = scmp.eq.s32.totalorder %s27, 3
    %p291 = por %p289, %p290
    %p292 = scmp.ne.s32.totalorder %s281, %s282
    %p293 = scmp.eq.s32.totalorder %s27, 0
    %p294 = por %p292, %p293
    %p295 = scmp.ne.s32.totalorder %s281, %s282
    %p296 = scmp.eq.s32.totalorder %s28, 3
    %p297 = por %p295, %p296
    %p299 = scmp.ne.s32.totalorder %s282, %s298
    %p300 = scmp.eq.s32.totalorder %s28, 0
    %p301 = por %p299, %p300
    %s302 = ssub.s32 %s30, %s37
    %p303 = scmp.eq.s32.totalorder %s302, 0
    %s305 = sadd.s32 %s304, 1
    %s306 = scalar_select %p303, %s304, %s305
    %p309 = pneg %p303
    %p310 = scmp.eq.s32.totalorder %s22, 3
    %p311 = por %p309, %p310
    %p312 = scmp.ne.s32.totalorder %s304, %s307
    %p313 = scmp.eq.s32.totalorder %s22, 0
    %p314 = por %p312, %p313
    %p315 = scmp.ne.s32.totalorder %s304, %s307
    %p316 = scmp.eq.s32.totalorder %s27, 3
    %p317 = por %p315, %p316
    %p318 = scmp.ne.s32.totalorder %s307, %s308
    %p319 = scmp.eq.s32.totalorder %s27, 0
    %p320 = por %p318, %p319
    %p321 = scmp.ne.s32.totalorder %s307, %s308
    %p322 = scmp.eq.s32.totalorder %s28, 3
    %p323 = por %p321, %p322
    %p325 = scmp.ne.s32.totalorder %s308, %s324
    %p326 = scmp.eq.s32.totalorder %s28, 0
    %p327 = por %p325, %p326
    %s328 = ssub.s32 %s30, %s37
    %p329 = scmp.eq.s32.totalorder %s328, 0
    %s331 = sadd.s32 %s330, 1
    %s332 = scalar_select %p329, %s330, %s331
    %p335 = pneg %p329
    %p336 = scmp.eq.s32.totalorder %s22, 3
    %p337 = por %p335, %p336
    %p338 = scmp.ne.s32.totalorder %s330, %s333
    %p339 = scmp.eq.s32.totalorder %s22, 0
    %p340 = por %p338, %p339
    %p341 = scmp.ne.s32.totalorder %s330, %s333
    %p342 = scmp.eq.s32.totalorder %s27, 3
    %p343 = por %p341, %p342
    %p344 = scmp.ne.s32.totalorder %s333, %s334
    %p345 = scmp.eq.s32.totalorder %s27, 0
    %p346 = por %p344, %p345
    %p347 = scmp.ne.s32.totalorder %s333, %s334
    %p348 = scmp.eq.s32.totalorder %s28, 3
    %p349 = por %p347, %p348
    %p351 = scmp.ne.s32.totalorder %s334, %s350
    %p352 = scmp.eq.s32.totalorder %s28, 0
    %p353 = por %p351, %p352
    %s354 = ssub.s32 %s30, %s37
    %p355 = scmp.eq.s32.totalorder %s354, 0
    %s357 = sadd.s32 %s356, 1
    %s358 = scalar_select %p355, %s356, %s357
    %p361 = pneg %p355
    %p362 = scmp.eq.s32.totalorder %s22, 3
    %p363 = por %p361, %p362
    %p364 = scmp.ne.s32.totalorder %s356, %s359
    %p365 = scmp.eq.s32.totalorder %s22, 0
    %p366 = por %p364, %p365
    %p367 = scmp.ne.s32.totalorder %s356, %s359
    %p368 = scmp.eq.s32.totalorder %s27, 3
    %p369 = por %p367, %p368
    %p370 = scmp.ne.s32.totalorder %s359, %s360
    %p371 = scmp.eq.s32.totalorder %s27, 0
    %p372 = por %p370, %p371
    %p373 = scmp.ne.s32.totalorder %s359, %s360
    %p374 = scmp.eq.s32.totalorder %s28, 3
    %p375 = por %p373, %p374
    %p377 = scmp.ne.s32.totalorder %s360, %s376
    %p378 = scmp.eq.s32.totalorder %s28, 0
    %p379 = por %p377, %p378
    %s381 = sadd.s32 %s380, 1
    %p384 = scmp.eq.s32.totalorder %s22, 3
    %p385 = scmp.ne.s32.totalorder %s380, %s382
    %p386 = scmp.eq.s32.totalorder %s22, 0
    %p387 = por %p385, %p386
    %p388 = scmp.ne.s32.totalorder %s380, %s382
    %p389 = scmp.eq.s32.totalorder %s27, 3
    %p390 = por %p388, %p389
    %p391 = scmp.ne.s32.totalorder %s382, %s383
    %p392 = scmp.eq.s32.totalorder %s27, 0
    %p393 = por %p391, %p392
    %p394 = scmp.ne.s32.totalorder %s382, %s383
    %p395 = scmp.eq.s32.totalorder %s28, 3
    %p396 = por %p394, %p395
    %p398 = scmp.ne.s32.totalorder %s383, %s397
    %p399 = scmp.eq.s32.totalorder %s28, 0
    %p400 = por %p398, %p399
    %s402 = sadd.s32 %s401, 1
    %p405 = scmp.eq.s32.totalorder %s22, 3
    %p406 = scmp.ne.s32.totalorder %s401, %s403
    %p407 = scmp.eq.s32.totalorder %s22, 0
    %p408 = por %p406, %p407
    %p409 = scmp.ne.s32.totalorder %s401, %s403
    %p410 = scmp.eq.s32.totalorder %s27, 3
    %p411 = por %p409, %p410
    %p412 = scmp.ne.s32.totalorder %s403, %s404
    %p413 = scmp.eq.s32.totalorder %s27, 0
    %p414 = por %p412, %p413
    %p415 = scmp.ne.s32.totalorder %s403, %s404
    %p416 = scmp.eq.s32.totalorder %s28, 3
    %p417 = por %p415, %p416
    %p419 = scmp.ne.s32.totalorder %s404, %s418
    %p420 = scmp.eq.s32.totalorder %s28, 0
    %p421 = por %p419, %p420
    %s423 = sadd.s32 %s422, 1
    %p426 = scmp.eq.s32.totalorder %s22, 3
    %p427 = scmp.ne.s32.totalorder %s422, %s424
    %p428 = scmp.eq.s32.totalorder %s22, 0
    %p429 = por %p427, %p428
    %p430 = scmp.ne.s32.totalorder %s422, %s424
    %p431 = scmp.eq.s32.totalorder %s27, 3
    %p432 = por %p430, %p431
    %p433 = scmp.ne.s32.totalorder %s424, %s425
    %p434 = scmp.eq.s32.totalorder %s27, 0
    %p435 = por %p433, %p434
    %p436 = scmp.ne.s32.totalorder %s424, %s425
    %p437 = scmp.eq.s32.totalorder %s28, 3
    %p438 = por %p436, %p437
    %p440 = scmp.ne.s32.totalorder %s425, %s439
    %p441 = scmp.eq.s32.totalorder %s28, 0
    %p442 = por %p440, %p441
    %s443 = ssub.s32 %s29, %s41
    %p444 = scmp.eq.s32.totalorder %s443, 0
    %s446 = sadd.s32 %s445, 1
    %s447 = scalar_select %p444, %s445, %s446
    %p450 = pneg %p444
    %p451 = scmp.eq.s32.totalorder %s22, 3
    %p452 = por %p450, %p451
    %p453 = scmp.ne.s32.totalorder %s445, %s448
    %p454 = scmp.eq.s32.totalorder %s22, 0
    %p455 = por %p453, %p454
    %p456 = scmp.ne.s32.totalorder %s445, %s448
    %p457 = scmp.eq.s32.totalorder %s27, 3
    %p458 = por %p456, %p457
    %p459 = scmp.ne.s32.totalorder %s448, %s449
    %p460 = scmp.eq.s32.totalorder %s27, 0
    %p461 = por %p459, %p460
    %p462 = scmp.ne.s32.totalorder %s448, %s449
    %p463 = scmp.eq.s32.totalorder %s28, 3
    %p464 = por %p462, %p463
    %p466 = scmp.ne.s32.totalorder %s449, %s465
    %p467 = scmp.eq.s32.totalorder %s28, 0
    %p468 = por %p466, %p467
    %p469 = scmp.le.s32.totalorder 1, %s22
    %p470 = scmp.lt.s32.totalorder %s22, 5
    %p471 = pnand %p469, %p470
    %p472 = pneg %p471
    // Predicated region
    $region9: #{gpt_forward.3} parent=5 // pred_check
      _
    $region10: #{gpt_forward.3} parent=5 // pred_check_branch
      %474 = sbr.rel (%p471) target = $region12
    $region11: #{gpt_forward.3} parent=5 // pred_region
      %s475 = ssub.s32 %s22, 1
      // Predicated region
      $region13: #{gpt_forward.3} parent=11 // pred_check
        %p476 = pneg %p393
      $region14: #{gpt_forward.3} parent=11 // pred_check_branch
        %478 = sbr.rel (%p476) target = $region16
      $region15: #{gpt_forward.3} parent=11 // pred_region
        _
      $region16: #{gpt_forward.3} parent=11 // pred_fallthru
        _
      // Predicated region
      $region17: #{gpt_forward.3} parent=11 // pred_check
        %p479 = pneg %p414
      $region18: #{gpt_forward.3} parent=11 // pred_check_branch
        %481 = sbr.rel (%p479) target = $region20
      $region19: #{gpt_forward.3} parent=11 // pred_region
        _
      $region20: #{gpt_forward.3} parent=11 // pred_fallthru
        _
      // Predicated region
      $region21: #{gpt_forward.3} parent=11 // pred_check
        %p482 = pneg %p435
      $region22: #{gpt_forward.3} parent=11 // pred_check_branch
        %484 = sbr.rel (%p482) target = $region24
      $region23: #{gpt_forward.3} parent=11 // pred_region
        _
      $region24: #{gpt_forward.3} parent=11 // pred_fallthru
        _
    $region12: #{gpt_forward.3} parent=5 // pred_fallthru
      _
    %p485 = scmp.lt.s32.totalorder %s22, 4
    // Predicated region
    $region25: #{gpt_forward.3} parent=5 // pred_check
      %p486 = pneg %p485
    $region26: #{gpt_forward.3} parent=5 // pred_check_branch
      %488 = sbr.rel (%p486) target = $region28
    $region27: #{gpt_forward.3} parent=5 // pred_region
      // Predicated region
      $region29: #{gpt_forward.3} parent=27 // pred_check
        %p489 = pneg %p54
      $region30: #{gpt_forward.3} parent=27 // pred_check_branch
        %491 = sbr.rel (%p489) target = $region32
      $region31: #{gpt_forward.3} parent=27 // pred_region
        %s492 = smul.u32 2, %s29
        %p493 = scmp.lt.s32.totalorder %s492, 3
        %s494 = scalar_select %p493, %s492, 3
        %s495 = smul.addr %s494, 8
        %s496 = scalar_lea.vmem %s0, %s495
        %s497 = smul.u32 2, %s29
      $region32: #{gpt_forward.3} parent=27 // pred_fallthru
        _
      // Predicated region
      $region33: #{gpt_forward.3} parent=27 // pred_check
        %p498 = pneg %p80
      $region34: #{gpt_forward.3} parent=27 // pred_check_branch
        %500 = sbr.rel (%p498) target = $region36
      $region35: #{gpt_forward.3} parent=27 // pred_region
        %p501 = scmp.lt.s32.totalorder %s30, 1
        %s502 = scalar_select %p501, %s30, 1
        %s503 = scalar_lea.vmem %s1, %s502
      $region36: #{gpt_forward.3} parent=27 // pred_fallthru
        _
      // Predicated region
      $region37: #{gpt_forward.3} parent=27 // pred_check
        %p504 = pneg %p106
      $region38: #{gpt_forward.3} parent=27 // pred_check_branch
        %506 = sbr.rel (%p504) target = $region40
      $region39: #{gpt_forward.3} parent=27 // pred_region
        %p507 = scmp.lt.s32.totalorder %s30, 1
        %s508 = scalar_select %p507, %s30, 1
        %s509 = scalar_lea.vmem %s2, %s508
      $region40: #{gpt_forward.3} parent=27 // pred_fallthru
        _
      // Predicated region
      $region41: #{gpt_forward.3} parent=27 // pred_check
        %p510 = pneg %p132
      $region42: #{gpt_forward.3} parent=27 // pred_check_branch
        %512 = sbr.rel (%p510) target = $region44
      $region43: #{gpt_forward.3} parent=27 // pred_region
        %p513 = scmp.lt.s32.totalorder %s30, 1
        %s514 = scalar_select %p513, %s30, 1
        %s515 = smul.addr %s514, 48
        %s516 = smul.addr %s515, 4
        %s517 = scalar_lea.vmem %s3, %s516
      $region44: #{gpt_forward.3} parent=27 // pred_fallthru
        _
      // Predicated region
      $region45: #{gpt_forward.3} parent=27 // pred_check
        %p518 = pneg %p158
      $region46: #{gpt_forward.3} parent=27 // pred_check_branch
        %520 = sbr.rel (%p518) target = $region48
      $region47: #{gpt_forward.3} parent=27 // pred_region
        %p521 = scmp.lt.s32.totalorder %s30, 1
        %s522 = scalar_select %p521, %s30, 1
        %s523 = smul.addr %s522, 3
        %s524 = scalar_lea.vmem %s4, %s523
      $region48: #{gpt_forward.3} parent=27 // pred_fallthru
        _
      // Predicated region
      $region49: #{gpt_forward.3} parent=27 // pred_check
        %p525 = pneg %p184
      $region50: #{gpt_forward.3} parent=27 // pred_check_branch
        %527 = sbr.rel (%p525) target = $region52
      $region51: #{gpt_forward.3} parent=27 // pred_region
        %p528 = scmp.lt.s32.totalorder %s30, 1
        %s529 = scalar_select %p528, %s30, 1
        %s530 = smul.addr %s529, 16
        %s531 = smul.addr %s530, 4
        %s532 = scalar_lea.vmem %s5, %s531
      $region52: #{gpt_forward.3} parent=27 // pred_fallthru
        _
      // Predicated region
      $region53: #{gpt_forward.3} parent=27 // pred_check
        %p533 = pneg %p210
      $region54: #{gpt_forward.3} parent=27 // pred_check_branch
        %535 = sbr.rel (%p533) target = $region56
      $region55: #{gpt_forward.3} parent=27 // pred_region
        %p536 = scmp.lt.s32.totalorder %s30, 1
        %s537 = scalar_select %p536, %s30, 1
        %s538 = scalar_lea.vmem %s6, %s537
      $region56: #{gpt_forward.3} parent=27 // pred_fallthru
        _
      // Predicated region
      $region57: #{gpt_forward.3} parent=27 // pred_check
        %p539 = pneg %p236
      $region58: #{gpt_forward.3} parent=27 // pred_check_branch
        %541 = sbr.rel (%p539) target = $region60
      $region59: #{gpt_forward.3} parent=27 // pred_region
        %p542 = scmp.lt.s32.totalorder %s30, 1
        %s543 = scalar_select %p542, %s30, 1
        %s544 = scalar_lea.vmem %s7, %s543
      $region60: #{gpt_forward.3} parent=27 // pred_fallthru
        _
      // Predicated region
      $region61: #{gpt_forward.3} parent=27 // pred_check
        %p545 = pneg %p262
      $region62: #{gpt_forward.3} parent=27 // pred_check_branch
        %547 = sbr.rel (%p545) target = $region64
      $region63: #{gpt_forward.3} parent=27 // pred_region
        %p548 = scmp.lt.s32.totalorder %s30, 1
        %s549 = scalar_select %p548, %s30, 1
        %s550 = scalar_lea.vmem %s8, %s549
      $region64: #{gpt_forward.3} parent=27 // pred_fallthru
        _
      // Predicated region
      $region65: #{gpt_forward.3} parent=27 // pred_check
        %p551 = pneg %p288
      $region66: #{gpt_forward.3} parent=27 // pred_check_branch
        %553 = sbr.rel (%p551) target = $region68
      $region67: #{gpt_forward.3} parent=27 // pred_region
        %p554 = scmp.lt.s32.totalorder %s30, 1
        %s555 = scalar_select %p554, %s30, 1
        %s556 = smul.addr %s555, 16
        %s557 = smul.addr %s556, 4
        %s558 = scalar_lea.vmem %s9, %s557
      $region68: #{gpt_forward.3} parent=27 // pred_fallthru
        _
      // Predicated region
      $region69: #{gpt_forward.3} parent=27 // pred_check
        %p559 = pneg %p314
      $region70: #{gpt_forward.3} parent=27 // pred_check_branch
        %561 = sbr.rel (%p559) target = $region72
      $region71: #{gpt_forward.3} parent=27 // pred_region
        %p562 = scmp.lt.s32.totalorder %s30, 1
        %s563 = scalar_select %p562, %s30, 1
        %s564 = scalar_lea.vmem %s10, %s563
      $region72: #{gpt_forward.3} parent=27 // pred_fallthru
        _
      // Predicated region
      $region73: #{gpt_forward.3} parent=27 // pred_check
        %p565 = pneg %p340
      $region74: #{gpt_forward.3} parent=27 // pred_check_branch
        %567 = sbr.rel (%p565) target = $region76
      $region75: #{gpt_forward.3} parent=27 // pred_region
        %p568 = scmp.lt.s32.totalorder %s30, 1
        %s569 = scalar_select %p568, %s30, 1
        %s570 = smul.addr %s569, 16
        %s571 = smul.addr %s570, 4
        %s572 = scalar_lea.vmem %s11, %s571
      $region76: #{gpt_forward.3} parent=27 // pred_fallthru
        _
      // Predicated region
      $region77: #{gpt_forward.3} parent=27 // pred_check
        %p573 = pneg %p366
      $region78: #{gpt_forward.3} parent=27 // pred_check_branch
        %575 = sbr.rel (%p573) target = $region80
      $region79: #{gpt_forward.3} parent=27 // pred_region
        %p576 = scmp.lt.s32.totalorder %s30, 1
        %s577 = scalar_select %p576, %s30, 1
        %s578 = scalar_lea.vmem %s12, %s577
      $region80: #{gpt_forward.3} parent=27 // pred_fallthru
        _
    $region28: #{gpt_forward.3} parent=5 // pred_fallthru
      _
    %p579 = scmp.le.s32.totalorder 1, %s22
    %p580 = scmp.lt.s32.totalorder %s22, 5
    %p581 = pnand %p579, %p580
    %p582 = pneg %p581
    // Predicated region
    $region81: #{gpt_forward.3} parent=5 // pred_check
      _
    $region82: #{gpt_forward.3} parent=5 // pred_check_branch
      %584 = sbr.rel (%p581) target = $region84
    $region83: #{gpt_forward.3} parent=5 // pred_region
      %s585 = ssub.s32 %s22, 1
      %s586 = smul.u32 2, %s31
      %p587 = scmp.lt.s32.totalorder %s586, 3
      %s588 = scalar_select %p587, %s586, 3
      %s589 = smul.addr %s588, 8
      %s590 = scalar_lea.vmem %s0, %s589
      %p591 = pneg %p60
      %p592 = pneg %p57
      %p593 = scmp.lt.s32.totalorder %s32, 1
      %s594 = scalar_select %p593, %s32, 1
      %s595 = scalar_lea.vmem %s1, %s594
      %p596 = pneg %p86
      %p597 = pneg %p83
      %p598 = scmp.lt.s32.totalorder %s32, 1
      %s599 = scalar_select %p598, %s32, 1
      %s600 = scalar_lea.vmem %s2, %s599
      %p601 = pneg %p112
      %p602 = pneg %p109
      %p603 = scmp.lt.s32.totalorder %s32, 1
      %s604 = scalar_select %p603, %s32, 1
      %s605 = smul.addr %s604, 48
      %s606 = smul.addr %s605, 4
      %s607 = scalar_lea.vmem %s3, %s606
      %p608 = pneg %p138
      %p609 = pneg %p135
      %p610 = scmp.lt.s32.totalorder %s32, 1
      %s611 = scalar_select %p610, %s32, 1
      %s612 = smul.addr %s611, 3
      %s613 = scalar_lea.vmem %s4, %s612
      %p614 = pneg %p164
      %p615 = pneg %p161
      %p616 = scmp.lt.s32.totalorder %s32, 1
      %s617 = scalar_select %p616, %s32, 1
      %s618 = smul.addr %s617, 16
      %s619 = smul.addr %s618, 4
      %s620 = scalar_lea.vmem %s5, %s619
      %p621 = pneg %p190
      %p622 = pneg %p187
      %p623 = scmp.lt.s32.totalorder %s32, 1
      %s624 = scalar_select %p623, %s32, 1
      %s625 = scalar_lea.vmem %s6, %s624
      %p626 = pneg %p216
      %p627 = pneg %p213
      %p628 = scmp.lt.s32.totalorder %s32, 1
      %s629 = scalar_select %p628, %s32, 1
      %s630 = scalar_lea.vmem %s7, %s629
      %p631 = pneg %p242
      %p632 = pneg %p239
      %p633 = scmp.lt.s32.totalorder %s32, 1
      %s634 = scalar_select %p633, %s32, 1
      %s635 = scalar_lea.vmem %s8, %s634
      %p636 = pneg %p268
      %p637 = pneg %p265
      %p638 = scmp.lt.s32.totalorder %s32, 1
      %s639 = scalar_select %p638, %s32, 1
      %s640 = smul.addr %s639, 16
      %s641 = smul.addr %s640, 4
      %s642 = scalar_lea.vmem %s9, %s641
      %p643 = pneg %p294
      %p644 = pneg %p291
      %p645 = scmp.lt.s32.totalorder %s32, 1
      %s646 = scalar_select %p645, %s32, 1
      %s647 = scalar_lea.vmem %s10, %s646
      %p648 = pneg %p320
      %p649 = pneg %p317
      %p650 = scmp.lt.s32.totalorder %s32, 1
      %s651 = scalar_select %p650, %s32, 1
      %s652 = smul.addr %s651, 16
      %s653 = smul.addr %s652, 4
      %s654 = scalar_lea.vmem %s11, %s653
      %p655 = pneg %p346
      %p656 = pneg %p343
      %p657 = scmp.lt.s32.totalorder %s32, 1
      %s658 = scalar_select %p657, %s32, 1
      %s659 = scalar_lea.vmem %s12, %s658
      %p660 = pneg %p372
      %p661 = pneg %p369
      %p662 = pneg %p393
      %p663 = pneg %p390
      %p664 = pneg %p414
      %p665 = pneg %p411
      %p666 = pneg %p435
      %p667 = pneg %p432
      %p668 = pneg %p461
      %p669 = pneg %p458
      %s670 = smul.u32 2, %s31
      %p671 = scmp.lt.s32.totalorder %s670, 3
      %s672 = scalar_select %p671, %s670, 3
      %s673 = smul.addr %s672, 8
      %s674 = scalar_lea.vmem %s16, %s673
      %s675 = smul.u32 2, %s31
      %p676 = scmp.lt.s32.totalorder %s675, 3
      %s677 = scalar_select %p676, %s675, 3
      %s678 = smul.addr %s677, 8
      %s679 = scalar_lea.vmem %s0, %s678
      %s680 = smul.u32 2, %s31
      %p681 = scmp.lt.s32.totalorder %s32, 1
      %s682 = scalar_select %p681, %s32, 1
      %s683 = scalar_lea.vmem %s1, %s682
      %p684 = scmp.lt.s32.totalorder %s32, 1
      %s685 = scalar_select %p684, %s32, 1
      %s686 = scalar_lea.vmem %s2, %s685
      %p687 = scmp.lt.s32.totalorder %s32, 1
      %s688 = scalar_select %p687, %s32, 1
      %s689 = smul.addr %s688, 48
      %s690 = smul.addr %s689, 4
      %s691 = scalar_lea.vmem %s3, %s690
      %p692 = scmp.lt.s32.totalorder %s32, 1
      %s693 = scalar_select %p692, %s32, 1
      %s694 = smul.addr %s693, 3
      %s695 = scalar_lea.vmem %s4, %s694
      %p696 = scmp.lt.s32.totalorder %s32, 1
      %s697 = scalar_select %p696, %s32, 1
      %s698 = smul.addr %s697, 16
      %s699 = smul.addr %s698, 4
      %s700 = scalar_lea.vmem %s5, %s699
      %p701 = scmp.lt.s32.totalorder %s32, 1
      %s702 = scalar_select %p701, %s32, 1
      %s703 = scalar_lea.vmem %s6, %s702
      %p704 = scmp.lt.s32.totalorder %s32, 1
      %s705 = scalar_select %p704, %s32, 1
      %s706 = scalar_lea.vmem %s7, %s705
      %p707 = scmp.lt.s32.totalorder %s32, 1
      %s708 = scalar_select %p707, %s32, 1
      %s709 = scalar_lea.vmem %s8, %s708
      %p710 = scmp.lt.s32.totalorder %s32, 1
      %s711 = scalar_select %p710, %s32, 1
      %s712 = smul.addr %s711, 16
      %s713 = smul.addr %s712, 4
      %s714 = scalar_lea.vmem %s9, %s713
      %p715 = scmp.lt.s32.totalorder %s32, 1
      %s716 = scalar_select %p715, %s32, 1
      %s717 = scalar_lea.vmem %s10, %s716
      %p718 = scmp.lt.s32.totalorder %s32, 1
      %s719 = scalar_select %p718, %s32, 1
      %s720 = smul.addr %s719, 16
      %s721 = smul.addr %s720, 4
      %s722 = scalar_lea.vmem %s11, %s721
      %p723 = scmp.lt.s32.totalorder %s32, 1
      %s724 = scalar_select %p723, %s32, 1
      %s725 = scalar_lea.vmem %s12, %s724
      %s726 = smul.u32 2, %s31
      %p727 = scmp.lt.s32.totalorder %s726, 3
      %s728 = scalar_select %p727, %s726, 3
      %s729 = smul.addr %s728, 8
      %s730 = scalar_lea.vmem %s16, %s729
      %s731 = smul.u32 2, %s31
      %p733 = scmp.eq.s32.totalorder %s32, 0
      // Predicated region
      $region85: #{gpt_forward.3} parent=83 // pred_check
        %p734 = pneg %p733
      $region86: #{gpt_forward.3} parent=83 // pred_check_branch
        %736 = sbr.rel (%p734) target = $region88
      $region87: #{gpt_forward.3} parent=83 // pred_region
        %v737 = vld [vmem:[%s679] sm:$0xff]
        %v738 = vld [vmem:[%s679 + $0x8] sm:$0xff]
        %739 = vst [vmem:[#allocation2] sm:$0xff] %v737
        %740 = vst [vmem:[#allocation2 + $0x8] sm:$0xff] %v738
      $region88: #{gpt_forward.3} parent=83 // pred_fallthru
        _
      %v741 = vld [vmem:[#allocation2] sm:$0xff]
      %v742 = vld [vmem:[#allocation2 + $0x8] sm:$0xff]
      %v743 = vlaneseq
      %v744 = vand.u32 %v743, 127
      %vm745 = vcmp.lt.s32.totalorder %v744, 32
      %v746 = vlaneseq
      %v747 = vshrl.u32 %v746, 7
      %v748 = vadd.s32 %v747, 8
      %vm749 = vcmp.le.s32.totalorder %v744, %v747
      %vm750 = vcmp.le.s32.totalorder %v744, %v748
      %vm751 = vcmp.lt.s32.totalorder %v744, 11
      %vm752 = vmand %vm749, %vm751
      %vm753 = vmand %vm750, %vm751
      %v754 = vld [vmem:[%s683] sm:$0x1]
      %v755 = vld [vmem:[%s686] sm:$0x1]
      %756 = vadd.xlane.f32.xlu0 %v741
      %v757 = vpop.xlane.xlu0 %756
      %758 = vadd.xlane.f32.xlu0 %v742
      %v759 = vpop.xlane.xlu0 %758
      %v760 = vmul.f32 %v757, 0.03125
      %v761 = vmul.f32 %v759, 0.03125
      %v762 = vsub.f32 %v741, %v760
      %v763 = vsub.f32 %v742, %v761
      %v764 = vsel %vm745, %v762, 0.0
      %v765 = vsel %vm745, %v763, 0.0
      %v766 = vmul.f32 %v764, %v764
      %v767 = vmul.f32 %v765, %v765
      %768 = vadd.xlane.f32.xlu0 %v766
      %v769 = vpop.xlane.xlu0 %768
      %770 = vadd.xlane.f32.xlu0 %v767
      %v771 = vpop.xlane.xlu0 %770
      %v772 = vmul.f32 %v769, 0.03125
      %v773 = vmul.f32 %v771, 0.03125
      %v774 = vadd.f32 %v772, 1e-05
      %v775 = vadd.f32 %v773, 1e-05
      %v776 = vrsqrt.pop %v774
      %v777 = vrsqrt.pop %v775
      %v778 = vmul.f32 %v764, %v776
      %v779 = vmul.f32 %v765, %v777
      %v781 = vlaneseq
      %v782 = vshrl.u32 %v781, 7
      %v783 = vsub.s32 0, %v782
      %v784 = vrot.slane %v754, %v783
      %v786 = vmul.f32 %v778, %v784
      %v787 = vmul.f32 %v779, %v784
      %v789 = vlaneseq
      %v790 = vshrl.u32 %v789, 7
      %v791 = vsub.s32 0, %v790
      %v792 = vrot.slane %v755, %v791
      %v794 = vadd.f32 %v786, %v792
      %v795 = vadd.f32 %v787, %v792
      %v796 = vpack.c.bf16 %v795, %v794
      %v797 = vld [vmem:[%s691] sm:$0xff]
      %v798 = vld [vmem:[%s691 + $0x8] sm:$0xf]
      %v799 = vld [vmem:[%s691 + $0xc] sm:$0xff]
      %v800 = vld [vmem:[%s691 + $0x14] sm:$0xf]
      %v801 = vld [vmem:[%s691 + $0x18] sm:$0xff]
      %v802 = vld [vmem:[%s691 + $0x20] sm:$0xf]
      %v803 = vld [vmem:[%s691 + $0x24] sm:$0xff]
      %v804 = vld [vmem:[%s691 + $0x2c] sm:$0xf]
      %v805 = vld [vmem:[%s691 + $0x30] sm:$0xff]
      %v806 = vld [vmem:[%s691 + $0x38] sm:$0xf]
      %v807 = vld [vmem:[%s691 + $0x3c] sm:$0xff]
      %v808 = vld [vmem:[%s691 + $0x44] sm:$0xf]
      %v809 = vld [vmem:[%s691 + $0x48] sm:$0xff]
      %v810 = vld [vmem:[%s691 + $0x50] sm:$0xf]
      %v811 = vld [vmem:[%s691 + $0x54] sm:$0xff]
      %v812 = vld [vmem:[%s691 + $0x5c] sm:$0xf]
      %v813 = vld [vmem:[%s691 + $0x60] sm:$0xff]
      %v814 = vld [vmem:[%s691 + $0x68] sm:$0xf]
      %v815 = vld [vmem:[%s691 + $0x6c] sm:$0xff]
      %v816 = vld [vmem:[%s691 + $0x74] sm:$0xf]
      %v817 = vld [vmem:[%s691 + $0x78] sm:$0xff]
      %v818 = vld [vmem:[%s691 + $0x80] sm:$0xf]
      %v819 = vld [vmem:[%s691 + $0x84] sm:$0xff]
      %v820 = vld [vmem:[%s691 + $0x8c] sm:$0xf]
      %v821 = vld [vmem:[%s691 + $0x90] sm:$0xff]
      %v822 = vld [vmem:[%s691 + $0x98] sm:$0xf]
      %v823 = vld [vmem:[%s691 + $0x9c] sm:$0xff]
      %v824 = vld [vmem:[%s691 + $0xa4] sm:$0xf]
      %v825 = vld [vmem:[%s691 + $0xa8] sm:$0xff]
      %v826 = vld [vmem:[%s691 + $0xb0] sm:$0xf]
      %v827 = vld [vmem:[%s691 + $0xb4] sm:$0xff]
      %v828 = vld [vmem:[%s691 + $0xbc] sm:$0xf]
      %v829 = vld [vmem:[%s695] sm:$0x7]
      %v831 = vlaneseq
      %v832 = vshrl.u32 %v831, 7
      %v833 = vsub.s32 0, %v832
      %v834 = vrot.slane %v829, %v833
      %v835 = vlaneseq
      %v836 = vshrl.u32 %v835, 7
      %v837 = vsub.s32 1, %v836
      %v838 = vrot.slane %v829, %v837
      %v839 = vlaneseq
      %v840 = vshrl.u32 %v839, 7
      %v841 = vsub.s32 2, %v840
      %v842 = vrot.slane %v829, %v841
      %v878 = vunpack.c.l.b16 %v797
      %v879 = vunpack.c.h.b16 %v797
      %v880 = vunpack.c.l.b16 %v798
      %v881 = vunpack.c.l.b16 %v799
      %v882 = vunpack.c.h.b16 %v799
      %v883 = vunpack.c.l.b16 %v800
      %v884 = vunpack.c.l.b16 %v801
      %v885 = vunpack.c.h.b16 %v801
      %v886 = vunpack.c.l.b16 %v802
      %v887 = vunpack.c.l.b16 %v803
      %v888 = vunpack.c.h.b16 %v803
      %v889 = vunpack.c.l.b16 %v804
      %v890 = vunpack.c.l.b16 %v805
      %v891 = vunpack.c.h.b16 %v805
      %v892 = vunpack.c.l.b16 %v806
      %v893 = vunpack.c.l.b16 %v807
      %v894 = vunpack.c.h.b16 %v807
      %v895 = vunpack.c.l.b16 %v808
      %v896 = vunpack.c.l.b16 %v809
      %v897 = vunpack.c.h.b16 %v809
      %v898 = vunpack.c.l.b16 %v810
      %v899 = vunpack.c.l.b16 %v811
      %v900 = vunpack.c.h.b16 %v811
      %v901 = vunpack.c.l.b16 %v812
      %v902 = vunpack.c.l.b16 %v813
      %v903 = vunpack.c.h.b16 %v813
      %v904 = vunpack.c.l.b16 %v814
      %v905 = vunpack.c.l.b16 %v815
      %v906 = vunpack.c.h.b16 %v815
      %v907 = vunpack.c.l.b16 %v816
      %v908 = vunpack.c.l.b16 %v817
      %v909 = vunpack.c.h.b16 %v817
      %v910 = vunpack.c.l.b16 %v818
      %v911 = vunpack.c.l.b16 %v819
      %v912 = vunpack.c.h.b16 %v819
      %v913 = vunpack.c.l.b16 %v820
      %v914 = vunpack.c.l.b16 %v821
      %v915 = vunpack.c.h.b16 %v821
      %v916 = vunpack.c.l.b16 %v822
      %v917 = vunpack.c.l.b16 %v823
      %v918 = vunpack.c.h.b16 %v823
      %v919 = vunpack.c.l.b16 %v824
      %v920 = vunpack.c.l.b16 %v825
      %v921 = vunpack.c.h.b16 %v825
      %v922 = vunpack.c.l.b16 %v826
      %v923 = vunpack.c.l.b16 %v827
      %v924 = vunpack.c.h.b16 %v827
      %v925 = vunpack.c.l.b16 %v828
      %v926 = vpack.c.b16 %v881, %v878
      %v927 = vpack.c.b16 %v882, %v879
      %v928 = vpack.c.b16 %v883, %v880
      %v929 = vpack.c.b16 %v887, %v884
      %v930 = vpack.c.b16 %v888, %v885
      %v931 = vpack.c.b16 %v889, %v886
      %v932 = vpack.c.b16 %v893, %v890
      %v933 = vpack.c.b16 %v894, %v891
      %v934 = vpack.c.b16 %v895, %v892
      %v935 = vpack.c.b16 %v899, %v896
      %v936 = vpack.c.b16 %v900, %v897
      %v937 = vpack.c.b16 %v901, %v898
      %v938 = vpack.c.b16 %v905, %v902
      %v939 = vpack.c.b16 %v906, %v903
      %v940 = vpack.c.b16 %v907, %v904
      %v941 = vpack.c.b16 %v911, %v908
      %v942 = vpack.c.b16 %v912, %v909
      %v943 = vpack.c.b16 %v913, %v910
      %v944 = vpack.c.b16 %v917, %v914
      %v945 = vpack.c.b16 %v918, %v915
      %v946 = vpack.c.b16 %v919, %v916
      %v947 = vpack.c.b16 %v923, %v920
      %v948 = vpack.c.b16 %v924, %v921
      %v949 = vpack.c.b16 %v925, %v922
      %974 = vmatprep.subr.bf16.mxu0 %v948
      %975 = vmatpush1.bf16.msra.mxu0 %v947
      %976 = vmatprep.subr.bf16.mxu0 %v945
      %977 = vmatpush1.bf16.msra.mxu0 %v944
      %978 = vmatprep.subr.bf16.mxu0 %v942
      %979 = vmatpush1.bf16.msra.mxu0 %v941
      %980 = vmatprep.subr.bf16.mxu0 %v939
      %981 = vmatpush1.bf16.msra.mxu0 %v938
      %982 = vmatprep.subr.bf16.mxu0 %v936
      %983 = vmatpush1.bf16.msra.mxu0 %v935
      %984 = vmatprep.subr.bf16.mxu0 %v933
      %985 = vmatpush1.bf16.msra.mxu0 %v932
      %986 = vmatprep.subr.bf16.mxu0 %v930
      %987 = vmatpush1.bf16.msra.mxu0 %v929
      %988 = vmatprep.subr.bf16.mxu0 %v927
      %989 = vmatpush1.bf16.msra.mxu0 %v926
      %990 = vmatprep.subr.bf16.mxu0 0
      %991 = vmatpush2.bf16.msra.mxu0 0
      %992 = vmatprep.subr.bf16.mxu0 0
      %993 = vmatpush2.bf16.msra.mxu0 0
      %994 = vmatprep.subr.bf16.mxu0 0
      %995 = vmatpush2.bf16.msra.mxu0 0
      %996 = vmatprep.subr.bf16.mxu0 0
      %997 = vmatpush2.bf16.msra.mxu0 0
      %998 = vmatprep.subr.bf16.mxu0 0
      %999 = vmatpush2.bf16.msra.mxu0 0
      %1000 = vmatprep.subr.bf16.mxu0 0
      %1001 = vmatpush2.bf16.msra.mxu0 0
      %1002 = vmatprep.subr.bf16.mxu0 0
      %1003 = vmatpush2.bf16.msra.mxu0 0
      %1004 = vmatprep.subr.bf16.mxu0 0
      %1005 = vmatpush2.bf16.msra.mxu0 0
      %1006 = vmatprep.mubr.bf16.mxu0 0
      %1007 = vmatmul.mubr.bf16.gmra.mxu0 %v796
      %v1008 = vpop.f32.mrf.mxu0
      %v1009 = vadd.f32 %v834, %v1008
      %v1010 = vpop.f32.mrf.mxu0
      %v1011 = vadd.f32 %v838, %v1010
      %v1012 = vpop.f32.mrf.mxu0
      %v1013 = vadd.f32 %v834, %v1012
      %v1014 = vpop.f32.mrf.mxu0
      %v1015 = vadd.f32 %v838, %v1014
      %1016 = vdwg.mxu0
      %1017 = vmatprep.subr.bf16.mxu0 0
      %1018 = vmatpush1.bf16.msra.mxu0 %v949
      %1019 = vmatprep.subr.bf16.mxu0 0
      %1020 = vmatpush1.bf16.msra.mxu0 %v946
      %1021 = vmatprep.subr.bf16.mxu0 0
      %1022 = vmatpush1.bf16.msra.mxu0 %v943
      %1023 = vmatprep.subr.bf16.mxu0 0
      %1024 = vmatpush1.bf16.msra.mxu0 %v940
      %1025 = vmatprep.subr.bf16.mxu0 0
      %1026 = vmatpush1.bf16.msra.mxu0 %v937
      %1027 = vmatprep.subr.bf16.mxu0 0
      %1028 = vmatpush1.bf16.msra.mxu0 %v934
      %1029 = vmatprep.subr.bf16.mxu0 0
      %1030 = vmatpush1.bf16.msra.mxu0 %v931
      %1031 = vmatprep.subr.bf16.mxu0 0
      %1032 = vmatpush1.bf16.msra.mxu0 %v928
      %1033 = vmatprep.subr.bf16.mxu0 0
      %1034 = vmatpush2.bf16.msra.mxu0 0
      %1035 = vmatprep.subr.bf16.mxu0 0
      %1036 = vmatpush2.bf16.msra.mxu0 0
      %1037 = vmatprep.subr.bf16.mxu0 0
      %1038 = vmatpush2.bf16.msra.mxu0 0
      %1039 = vmatprep.subr.bf16.mxu0 0
      %1040 = vmatpush2.bf16.msra.mxu0 0
      %1041 = vmatprep.subr.bf16.mxu0 0
      %1042 = vmatpush2.bf16.msra.mxu0 0
      %1043 = vmatprep.subr.bf16.mxu0 0
      %1044 = vmatpush2.bf16.msra.mxu0 0
      %1045 = vmatprep.subr.bf16.mxu0 0
      %1046 = vmatpush2.bf16.msra.mxu0 0
      %1047 = vmatprep.subr.bf16.mxu0 0
      %1048 = vmatpush2.bf16.msra.mxu0 0
      %1049 = vmatprep.mubr.bf16.mxu0 0
      %1050 = vmatmul.mubr.bf16.gmra.mxu0 %v796
      %v1051 = vpop.f32.mrf.mxu0
      %v1052 = vadd.f32 %v842, %v1051
      %v1053 = vpop.f32.mrf.mxu0
      %v1054 = vpop.f32.mrf.mxu0
      %v1055 = vadd.f32 %v842, %v1054
      %v1056 = vpop.f32.mrf.mxu0
      %1057 = vdwg.mxu0
      %v1058 = vpack.c.bf16 %v1013, %v1009
      %v1059 = vpack.c.bf16 %v1015, %v1011
      %v1060 = vpack.c.bf16 %v1055, %v1052
      %vm1061 = vcmask 64512
      %v1063 = vsel %vm1061, %v1058, 0
      %v1066 = vsel %vm1061, %v1059, 0
      %1068 = vmatprep.subr.bf16.mxu0 0
      %1069 = vmatpush1.bf16.xpose.msra.mxu0 0
      %1070 = vmatprep.subr.bf16.mxu0 0
      %1071 = vmatpush1.bf16.xpose.msra.mxu0 0
      %1072 = vmatprep.subr.bf16.mxu0 0
      %1073 = vmatpush1.bf16.xpose.msra.mxu0 0
      %1074 = vmatprep.subr.bf16.mxu0 0
      %1075 = vmatpush1.bf16.xpose.msra.mxu0 0
      %1076 = vmatprep.subr.bf16.mxu0 0
      %1077 = vmatpush1.bf16.xpose.msra.mxu0 0
      %1078 = vmatprep.subr.bf16.mxu0 0
      %1079 = vmatpush1.bf16.xpose.msra.mxu0 0
      %1080 = vmatprep.subr.bf16.mxu0 0
      %1081 = vmatpush1.bf16.xpose.msra.mxu0 0
      %1082 = vmatprep.subr.bf16.mxu0 0
      %1083 = vmatpush1.bf16.xpose.msra.mxu0 %v1066
      %1084 = vmatprep.subr.bf16.mxu0 0
      %1085 = vmatpush2.bf16.xpose.msra.mxu0 0
      %1086 = vmatprep.subr.bf16.mxu0 0
      %1087 = vmatpush2.bf16.xpose.msra.mxu0 0
      %1088 = vmatprep.subr.bf16.mxu0 0
      %1089 = vmatpush2.bf16.xpose.msra.mxu0 0
      %1090 = vmatprep.subr.bf16.mxu0 0
      %1091 = vmatpush2.bf16.xpose.msra.mxu0 0
      %1092 = vmatprep.subr.bf16.mxu0 0
      %1093 = vmatpush2.bf16.xpose.msra.mxu0 0
      %1094 = vmatprep.subr.bf16.mxu0 0
      %1095 = vmatpush2.bf16.xpose.msra.mxu0 0
      %1096 = vmatprep.subr.bf16.mxu0 0
      %1097 = vmatpush2.bf16.xpose.msra.mxu0 0
      %1098 = vmatprep.subr.bf16.mxu0 0
      %1099 = vmatpush2.bf16.xpose.msra.mxu0 0
      %1100 = vmatprep.mubr.bf16.mxu0 0
      %1101 = vmatmul.mubr.bf16.gmra.mxu0 %v1063
      %v1102 = vpop.f32.mrf.mxu0
      %v1103 = vadd.f32 0.0, %v1102
      %v1104 = vpop.f32.mrf.mxu0
      %v1105 = vpop.f32.mrf.mxu0
      %v1106 = vadd.f32 0.0, %v1105
      %v1107 = vpop.f32.mrf.mxu0
      %1108 = vdwg.mxu0
      %v1109 = vsel %vm752, %v1103, -inf
      %v1110 = vsel %vm753, %v1106, -inf
      %vm1111 = vcmask 130048
      %v1112 = vsel %vm1111, %v1109, -inf
      %1113 = vmax.xlane.f32.xlu0 %v1112
      %v1114 = vpop.xlane.xlu0 %1113
      %v1115 = vsel %vm1111, %v1110, -inf
      %1116 = vmax.xlane.f32.xlu0 %v1115
      %v1117 = vpop.xlane.xlu0 %1116
      %v1118 = vsub.f32 %v1109, %v1114
      %v1119 = vsub.f32 %v1110, %v1117
      %v1120 = vmul.f32 %v1118, 1.442695
      %v1121 = vpow.pop %v1120
      %v1122 = vmul.f32 %v1119, 1.442695
      %v1123 = vpow.pop %v1122
      %v1124 = vsel %vm1111, %v1121, 0.0
      %1125 = vadd.xlane.f32.xlu0 %v1124
      %v1126 = vpop.xlane.xlu0 %1125
      %v1127 = vsel %vm1111, %v1123, 0.0
      %1128 = vadd.xlane.f32.xlu0 %v1127
      %v1129 = vpop.xlane.xlu0 %1128
      %v1130 = vrcp.pop %v1126
      %v1131 = vrcp.pop %v1129
      %v1132 = vmul.f32 %v1121, %v1130
      %v1133 = vmul.f32 %v1123, %v1131
      %v1134 = vpack.c.bf16 %v1133, %v1132
      %v1136 = vsel %vm1111, %v1134, 0
      %1138 = vmatprep.subr.bf16.mxu0 0
      %1139 = vmatpush1.bf16.msra.mxu0 0
      %1140 = vmatprep.subr.bf16.mxu0 0
      %1141 = vmatpush1.bf16.msra.mxu0 0
      %1142 = vmatprep.subr.bf16.mxu0 0
      %1143 = vmatpush1.bf16.msra.mxu0 0
      %1144 = vmatprep.subr.bf16.mxu0 0
      %1145 = vmatpush1.bf16.msra.mxu0 0
      %1146 = vmatprep.subr.bf16.mxu0 0
      %1147 = vmatpush1.bf16.msra.mxu0 0
      %1148 = vmatprep.subr.bf16.mxu0 0
      %1149 = vmatpush1.bf16.msra.mxu0 0
      %1150 = vmatprep.subr.bf16.mxu0 0
      %1151 = vmatpush1.bf16.msra.mxu0 0
      %1152 = vmatprep.subr.bf16.mxu0 0
      %1153 = vmatpush1.bf16.msra.mxu0 %v1060
      %1154 = vmatprep.subr.bf16.mxu0 0
      %1155 = vmatpush2.bf16.msra.mxu0 0
      %1156 = vmatprep.subr.bf16.mxu0 0
      %1157 = vmatpush2.bf16.msra.mxu0 0
      %1158 = vmatprep.subr.bf16.mxu0 0
      %1159 = vmatpush2.bf16.msra.mxu0 0
      %1160 = vmatprep.subr.bf16.mxu0 0
      %1161 = vmatpush2.bf16.msra.mxu0 0
      %1162 = vmatprep.subr.bf16.mxu0 0
      %1163 = vmatpush2.bf16.msra.mxu0 0
      %1164 = vmatprep.subr.bf16.mxu0 0
      %1165 = vmatpush2.bf16.msra.mxu0 0
      %1166 = vmatprep.subr.bf16.mxu0 0
      %1167 = vmatpush2.bf16.msra.mxu0 0
      %1168 = vmatprep.subr.bf16.mxu0 0
      %1169 = vmatpush2.bf16.msra.mxu0 0
      %1170 = vmatprep.mubr.bf16.mxu0 0
      %1171 = vmatmul.mubr.bf16.gmra.mxu0 %v1136
      %v1172 = vpop.f32.mrf.mxu0
      %v1173 = vadd.f32 0.0, %v1172
      %v1174 = vpop.f32.mrf.mxu0
      %v1175 = vpop.f32.mrf.mxu0
      %v1176 = vadd.f32 0.0, %v1175
      %v1177 = vpop.f32.mrf.mxu0
      %1178 = vdwg.mxu0
      %v1179 = vpack.c.bf16 %v1176, %v1173
      %v1180 = vld [vmem:[%s700] sm:$0xf]
      %1182 = vrot.lane.b32.xlu0 %v1058, 120
      %v1183 = vpop.permute.xlu0 %1182
      %1185 = vrot.lane.b32.xlu0 %v1059, 120
      %v1186 = vpop.permute.xlu0 %1185
      %v1188 = vsel %vm1061, %v1183, 0
      %v1191 = vsel %vm1061, %v1186, 0
      %1193 = vmatprep.subr.bf16.mxu0 0
      %1194 = vmatpush1.bf16.xpose.msra.mxu0 0
      %1195 = vmatprep.subr.bf16.mxu0 0
      %1196 = vmatpush1.bf16.xpose.msra.mxu0 0
      %1197 = vmatprep.subr.bf16.mxu0 0
      %1198 = vmatpush1.bf16.xpose.msra.mxu0 0
      %1199 = vmatprep.subr.bf16.mxu0 0
      %1200 = vmatpush1.bf16.xpose.msra.mxu0 0
      %1201 = vmatprep.subr.bf16.mxu0 0
      %1202 = vmatpush1.bf16.xpose.msra.mxu0 0
      %1203 = vmatprep.subr.bf16.mxu0 0
      %1204 = vmatpush1.bf16.xpose.msra.mxu0 0
      %1205 = vmatprep.subr.bf16.mxu0 0
      %1206 = vmatpush1.bf16.xpose.msra.mxu0 0
      %1207 = vmatprep.subr.bf16.mxu0 0
      %1208 = vmatpush1.bf16.xpose.msra.mxu0 %v1191
      %1209 = vmatprep.subr.bf16.mxu0 0
      %1210 = vmatpush2.bf16.xpose.msra.mxu0 0
      %1211 = vmatprep.subr.bf16.mxu0 0
      %1212 = vmatpush2.bf16.xpose.msra.mxu0 0
      %1213 = vmatprep.subr.bf16.mxu0 0
      %1214 = vmatpush2.bf16.xpose.msra.mxu0 0
      %1215 = vmatprep.subr.bf16.mxu0 0
      %1216 = vmatpush2.bf16.xpose.msra.mxu0 0
      %1217 = vmatprep.subr.bf16.mxu0 0
      %1218 = vmatpush2.bf16.xpose.msra.mxu0 0
      %1219 = vmatprep.subr.bf16.mxu0 0
      %1220 = vmatpush2.bf16.xpose.msra.mxu0 0
      %1221 = vmatprep.subr.bf16.mxu0 0
      %1222 = vmatpush2.bf16.xpose.msra.mxu0 0
      %1223 = vmatprep.subr.bf16.mxu0 0
      %1224 = vmatpush2.bf16.xpose.msra.mxu0 0
      %1225 = vmatprep.mubr.bf16.mxu0 0
      %1226 = vmatmul.mubr.bf16.gmra.mxu0 %v1188
      %v1227 = vpop.f32.mrf.mxu0
      %v1228 = vadd.f32 0.0, %v1227
      %v1229 = vpop.f32.mrf.mxu0
      %v1230 = vpop.f32.mrf.mxu0
      %v1231 = vadd.f32 0.0, %v1230
      %v1232 = vpop.f32.mrf.mxu0
      %1233 = vdwg.mxu0
      %v1234 = vsel %vm752, %v1228, -inf
      %v1235 = vsel %vm753, %v1231, -inf
      %v1236 = vsel %vm1111, %v1234, -inf
      %1237 = vmax.xlane.f32.xlu0 %v1236
      %v1238 = vpop.xlane.xlu0 %1237
      %v1239 = vsel %vm1111, %v1235, -inf
      %1240 = vmax.xlane.f32.xlu0 %v1239
      %v1241 = vpop.xlane.xlu0 %1240
      %v1242 = vsub.f32 %v1234, %v1238
      %v1243 = vsub.f32 %v1235, %v1241
      %v1244 = vmul.f32 %v1242, 1.442695
      %v1245 = vpow.pop %v1244
      %v1246 = vmul.f32 %v1243, 1.442695
      %v1247 = vpow.pop %v1246
      %v1248 = vsel %vm1111, %v1245, 0.0
      %1249 = vadd.xlane.f32.xlu0 %v1248
      %v1250 = vpop.xlane.xlu0 %1249
      %v1251 = vsel %vm1111, %v1247, 0.0
      %1252 = vadd.xlane.f32.xlu0 %v1251
      %v1253 = vpop.xlane.xlu0 %1252
      %v1254 = vrcp.pop %v1250
      %v1255 = vrcp.pop %v1253
      %v1256 = vmul.f32 %v1245, %v1254
      %v1257 = vmul.f32 %v1247, %v1255
      %v1258 = vpack.c.bf16 %v1257, %v1256
      %1260 = vrot.lane.b32.xlu0 %v1060, 120
      %v1261 = vpop.permute.xlu0 %1260
      %v1264 = vsel %vm1111, %v1258, 0
      %1266 = vmatprep.subr.bf16.mxu0 0
      %1267 = vmatpush1.bf16.msra.mxu0 0
      %1268 = vmatprep.subr.bf16.mxu0 0
      %1269 = vmatpush1.bf16.msra.mxu0 0
      %1270 = vmatprep.subr.bf16.mxu0 0
      %1271 = vmatpush1.bf16.msra.mxu0 0
      %1272 = vmatprep.subr.bf16.mxu0 0
      %1273 = vmatpush1.bf16.msra.mxu0 0
      %1274 = vmatprep.subr.bf16.mxu0 0
      %1275 = vmatpush1.bf16.msra.mxu0 0
      %1276 = vmatprep.subr.bf16.mxu0 0
      %1277 = vmatpush1.bf16.msra.mxu0 0
      %1278 = vmatprep.subr.bf16.mxu0 0
      %1279 = vmatpush1.bf16.msra.mxu0 0
      %1280 = vmatprep.subr.bf16.mxu0 0
      %1281 = vmatpush1.bf16.msra.mxu0 %v1261
      %1282 = vmatprep.subr.bf16.mxu0 0
      %1283 = vmatpush2.bf16.msra.mxu0 0
      %1284 = vmatprep.subr.bf16.mxu0 0
      %1285 = vmatpush2.bf16.msra.mxu0 0
      %1286 = vmatprep.subr.bf16.mxu0 0
      %1287 = vmatpush2.bf16.msra.mxu0 0
      %1288 = vmatprep.subr.bf16.mxu0 0
      %1289 = vmatpush2.bf16.msra.mxu0 0
      %1290 = vmatprep.subr.bf16.mxu0 0
      %1291 = vmatpush2.bf16.msra.mxu0 0
      %1292 = vmatprep.subr.bf16.mxu0 0
      %1293 = vmatpush2.bf16.msra.mxu0 0
      %1294 = vmatprep.subr.bf16.mxu0 0
      %1295 = vmatpush2.bf16.msra.mxu0 0
      %1296 = vmatprep.subr.bf16.mxu0 0
      %1297 = vmatpush2.bf16.msra.mxu0 0
      %1298 = vmatprep.mubr.bf16.mxu0 0
      %1299 = vmatmul.mubr.bf16.gmra.mxu0 %v1264
      %v1300 = vpop.f32.mrf.mxu0
      %v1301 = vadd.f32 0.0, %v1300
      %v1302 = vpop.f32.mrf.mxu0
      %v1303 = vpop.f32.mrf.mxu0
      %v1304 = vadd.f32 0.0, %v1303
      %v1305 = vpop.f32.mrf.mxu0
      %1306 = vdwg.mxu0
      %v1307 = vpack.c.bf16 %v1304, %v1301
      %v1308 = vld [vmem:[%s700 + $0x4] sm:$0xf]
      %v1310 = vsel %vm1061, %v1307, 0
      %vm1312 = vcmask 1043456
      %v1314 = vsel %vm1312, %v1308, 0
      %1316 = vmatprep.subr.bf16.mxu0 0
      %1317 = vmatpush1.bf16.msra.mxu0 0
      %1318 = vmatprep.subr.bf16.mxu0 0
      %1319 = vmatpush1.bf16.msra.mxu0 0
      %1320 = vmatprep.subr.bf16.mxu0 0
      %1321 = vmatpush1.bf16.msra.mxu0 0
      %1322 = vmatprep.subr.bf16.mxu0 0
      %1323 = vmatpush1.bf16.msra.mxu0 0
      %1324 = vmatprep.subr.bf16.mxu0 0
      %1325 = vmatpush1.bf16.msra.mxu0 0
      %1326 = vmatprep.subr.bf16.mxu0 0
      %1327 = vmatpush1.bf16.msra.mxu0 0
      %1328 = vmatprep.subr.bf16.mxu0 0
      %1329 = vmatpush1.bf16.msra.mxu0 0
      %1330 = vmatprep.subr.bf16.mxu0 0
      %1331 = vmatpush1.bf16.msra.mxu0 %v1314
      %1332 = vmatprep.subr.bf16.mxu0 0
      %1333 = vmatpush2.bf16.msra.mxu0 0
      %1334 = vmatprep.subr.bf16.mxu0 0
      %1335 = vmatpush2.bf16.msra.mxu0 0
      %1336 = vmatprep.subr.bf16.mxu0 0
      %1337 = vmatpush2.bf16.msra.mxu0 0
      %1338 = vmatprep.subr.bf16.mxu0 0
      %1339 = vmatpush2.bf16.msra.mxu0 0
      %1340 = vmatprep.subr.bf16.mxu0 0
      %1341 = vmatpush2.bf16.msra.mxu0 0
      %1342 = vmatprep.subr.bf16.mxu0 0
      %1343 = vmatpush2.bf16.msra.mxu0 0
      %1344 = vmatprep.subr.bf16.mxu0 0
      %1345 = vmatpush2.bf16.msra.mxu0 0
      %1346 = vmatprep.subr.bf16.mxu0 0
      %1347 = vmatpush2.bf16.msra.mxu0 0
      %1348 = vmatprep.mubr.bf16.mxu0 0
      %1349 = vmatmul.mubr.bf16.gmra.mxu0 %v1310
      %v1350 = vpop.f32.mrf.mxu0
      %v1351 = vadd.f32 0.0, %v1350
      %v1352 = vpop.f32.mrf.mxu0
      %v1353 = vpop.f32.mrf.mxu0
      %v1354 = vadd.f32 0.0, %v1353
      %v1355 = vpop.f32.mrf.mxu0
      %1356 = vdwg.mxu0
      %v1358 = vsel %vm1061, %v1179, 0
      %v1361 = vsel %vm1312, %v1180, 0
      %1363 = vmatprep.subr.bf16.mxu0 0
      %1364 = vmatpush1.bf16.msra.mxu0 0
      %1365 = vmatprep.subr.bf16.mxu0 0
      %1366 = vmatpush1.bf16.msra.mxu0 0
      %1367 = vmatprep.subr.bf16.mxu0 0
      %1368 = vmatpush1.bf16.msra.mxu0 0
      %1369 = vmatprep.subr.bf16.mxu0 0
      %1370 = vmatpush1.bf16.msra.mxu0 0
      %1371 = vmatprep.subr.bf16.mxu0 0
      %1372 = vmatpush1.bf16.msra.mxu0 0
      %1373 = vmatprep.subr.bf16.mxu0 0
      %1374 = vmatpush1.bf16.msra.mxu0 0
      %1375 = vmatprep.subr.bf16.mxu0 0
      %1376 = vmatpush1.bf16.msra.mxu0 0
      %1377 = vmatprep.subr.bf16.mxu0 0
      %1378 = vmatpush1.bf16.msra.mxu0 %v1361
      %1379 = vmatprep.subr.bf16.mxu0 0
      %1380 = vmatpush2.bf16.msra.mxu0 0
      %1381 = vmatprep.subr.bf16.mxu0 0
      %1382 = vmatpush2.bf16.msra.mxu0 0
      %1383 = vmatprep.subr.bf16.mxu0 0
      %1384 = vmatpush2.bf16.msra.mxu0 0
      %1385 = vmatprep.subr.bf16.mxu0 0
      %1386 = vmatpush2.bf16.msra.mxu0 0
      %1387 = vmatprep.subr.bf16.mxu0 0
      %1388 = vmatpush2.bf16.msra.mxu0 0
      %1389 = vmatprep.subr.bf16.mxu0 0
      %1390 = vmatpush2.bf16.msra.mxu0 0
      %1391 = vmatprep.subr.bf16.mxu0 0
      %1392 = vmatpush2.bf16.msra.mxu0 0
      %1393 = vmatprep.subr.bf16.mxu0 0
      %1394 = vmatpush2.bf16.msra.mxu0 0
      %1395 = vmatprep.mubr.bf16.mxu0 0
      %1396 = vmatmul.mubr.bf16.gmra.mxu0 %v1358
      %v1397 = vpop.f32.mrf.mxu0
      %v1398 = vadd.f32 %v1351, %v1397
      %v1399 = vpop.f32.mrf.mxu0
      %v1400 = vpop.f32.mrf.mxu0
      %v1401 = vadd.f32 %v1354, %v1400
      %v1402 = vpop.f32.mrf.mxu0
      %1403 = vdwg.mxu0
      %1404 = vrot.lane.b32.xlu0 %v1058, 112
      %v1405 = vpop.permute.xlu0 %1404
      %1406 = vrot.lane.b32.xlu0 %v1059, 112
      %v1407 = vpop.permute.xlu0 %1406
      %v1409 = vsel %vm1061, %v1405, 0
      %v1412 = vsel %vm1061, %v1407, 0
      %1414 = vmatprep.subr.bf16.mxu0 0
      %1415 = vmatpush1.bf16.xpose.msra.mxu0 0
      %1416 = vmatprep.subr.bf16.mxu0 0
      %1417 = vmatpush1.bf16.xpose.msra.mxu0 0
      %1418 = vmatprep.subr.bf16.mxu0 0
      %1419 = vmatpush1.bf16.xpose.msra.mxu0 0
      %1420 = vmatprep.subr.bf16.mxu0 0
      %1421 = vmatpush1.bf16.xpose.msra.mxu0 0
      %1422 = vmatprep.subr.bf16.mxu0 0
      %1423 = vmatpush1.bf16.xpose.msra.mxu0 0
      %1424 = vmatprep.subr.bf16.mxu0 0
      %1425 = vmatpush1.bf16.xpose.msra.mxu0 0
      %1426 = vmatprep.subr.bf16.mxu0 0
      %1427 = vmatpush1.bf16.xpose.msra.mxu0 0
      %1428 = vmatprep.subr.bf16.mxu0 0
      %1429 = vmatpush1.bf16.xpose.msra.mxu0 %v1412
      %1430 = vmatprep.subr.bf16.mxu0 0
      %1431 = vmatpush2.bf16.xpose.msra.mxu0 0
      %1432 = vmatprep.subr.bf16.mxu0 0
      %1433 = vmatpush2.bf16.xpose.msra.mxu0 0
      %1434 = vmatprep.subr.bf16.mxu0 0
      %1435 = vmatpush2.bf16.xpose.msra.mxu0 0
      %1436 = vmatprep.subr.bf16.mxu0 0
      %1437 = vmatpush2.bf16.xpose.msra.mxu0 0
      %1438 = vmatprep.subr.bf16.mxu0 0
      %1439 = vmatpush2.bf16.xpose.msra.mxu0 0
      %1440 = vmatprep.subr.bf16.mxu0 0
      %1441 = vmatpush2.bf16.xpose.msra.mxu0 0
      %1442 = vmatprep.subr.bf16.mxu0 0
      %1443 = vmatpush2.bf16.xpose.msra.mxu0 0
      %1444 = vmatprep.subr.bf16.mxu0 0
      %1445 = vmatpush2.bf16.xpose.msra.mxu0 0
      %1446 = vmatprep.mubr.bf16.mxu0 0
      %1447 = vmatmul.mubr.bf16.gmra.mxu0 %v1409
      %v1448 = vpop.f32.mrf.mxu0
      %v1449 = vadd.f32 0.0, %v1448
      %v1450 = vpop.f32.mrf.mxu0
      %v1451 = vpop.f32.mrf.mxu0
      %v1452 = vadd.f32 0.0, %v1451
      %v1453 = vpop.f32.mrf.mxu0
      %1454 = vdwg.mxu0
      %v1455 = vsel %vm752, %v1449, -inf
      %v1456 = vsel %vm753, %v1452, -inf
      %v1457 = vsel %vm1111, %v1455, -inf
      %1458 = vmax.xlane.f32.xlu0 %v1457
      %v1459 = vpop.xlane.xlu0 %1458
      %v1460 = vsel %vm1111, %v1456, -inf
      %1461 = vmax.xlane.f32.xlu0 %v1460
      %v1462 = vpop.xlane.xlu0 %1461
      %v1463 = vsub.f32 %v1455, %v1459
      %v1464 = vsub.f32 %v1456, %v1462
      %v1465 = vmul.f32 %v1463, 1.442695
      %v1466 = vpow.pop %v1465
      %v1467 = vmul.f32 %v1464, 1.442695
      %v1468 = vpow.pop %v1467
      %v1469 = vsel %vm1111, %v1466, 0.0
      %1470 = vadd.xlane.f32.xlu0 %v1469
      %v1471 = vpop.xlane.xlu0 %1470
      %v1472 = vsel %vm1111, %v1468, 0.0
      %1473 = vadd.xlane.f32.xlu0 %v1472
      %v1474 = vpop.xlane.xlu0 %1473
      %v1475 = vrcp.pop %v1471
      %v1476 = vrcp.pop %v1474
      %v1477 = vmul.f32 %v1466, %v1475
      %v1478 = vmul.f32 %v1468, %v1476
      %v1479 = vpack.c.bf16 %v1478, %v1477
      %1480 = vrot.lane.b32.xlu0 %v1060, 112
      %v1481 = vpop.permute.xlu0 %1480
      %v1484 = vsel %vm1111, %v1479, 0
      %1486 = vmatprep.subr.bf16.mxu0 0
      %1487 = vmatpush1.bf16.msra.mxu0 0
      %1488 = vmatprep.subr.bf16.mxu0 0
      %1489 = vmatpush1.bf16.msra.mxu0 0
      %1490 = vmatprep.subr.bf16.mxu0 0
      %1491 = vmatpush1.bf16.msra.mxu0 0
      %1492 = vmatprep.subr.bf16.mxu0 0
      %1493 = vmatpush1.bf16.msra.mxu0 0
      %1494 = vmatprep.subr.bf16.mxu0 0
      %1495 = vmatpush1.bf16.msra.mxu0 0
      %1496 = vmatprep.subr.bf16.mxu0 0
      %1497 = vmatpush1.bf16.msra.mxu0 0
      %1498 = vmatprep.subr.bf16.mxu0 0
      %1499 = vmatpush1.bf16.msra.mxu0 0
      %1500 = vmatprep.subr.bf16.mxu0 0
      %1501 = vmatpush1.bf16.msra.mxu0 %v1481
      %1502 = vmatprep.subr.bf16.mxu0 0
      %1503 = vmatpush2.bf16.msra.mxu0 0
      %1504 = vmatprep.subr.bf16.mxu0 0
      %1505 = vmatpush2.bf16.msra.mxu0 0
      %1506 = vmatprep.subr.bf16.mxu0 0
      %1507 = vmatpush2.bf16.msra.mxu0 0
      %1508 = vmatprep.subr.bf16.mxu0 0
      %1509 = vmatpush2.bf16.msra.mxu0 0
      %1510 = vmatprep.subr.bf16.mxu0 0
      %1511 = vmatpush2.bf16.msra.mxu0 0
      %1512 = vmatprep.subr.bf16.mxu0 0
      %1513 = vmatpush2.bf16.msra.mxu0 0
      %1514 = vmatprep.subr.bf16.mxu0 0
      %1515 = vmatpush2.bf16.msra.mxu0 0
      %1516 = vmatprep.subr.bf16.mxu0 0
      %1517 = vmatpush2.bf16.msra.mxu0 0
      %1518 = vmatprep.mubr.bf16.mxu0 0
      %1519 = vmatmul.mubr.bf16.gmra.mxu0 %v1484
      %v1520 = vpop.f32.mrf.mxu0
      %v1521 = vadd.f32 0.0, %v1520
      %v1522 = vpop.f32.mrf.mxu0
      %v1523 = vpop.f32.mrf.mxu0
      %v1524 = vadd.f32 0.0, %v1523
      %v1525 = vpop.f32.mrf.mxu0
      %1526 = vdwg.mxu0
      %v1527 = vpack.c.bf16 %v1524, %v1521
      %v1528 = vld [vmem:[%s700 + $0x8] sm:$0xf]
      %v1530 = vsel %vm1061, %v1527, 0
      %v1533 = vsel %vm1312, %v1528, 0
      %1535 = vmatprep.subr.bf16.mxu0 0
      %1536 = vmatpush1.bf16.msra.mxu0 0
      %1537 = vmatprep.subr.bf16.mxu0 0
      %1538 = vmatpush1.bf16.msra.mxu0 0
      %1539 = vmatprep.subr.bf16.mxu0 0
      %1540 = vmatpush1.bf16.msra.mxu0 0
      %1541 = vmatprep.subr.bf16.mxu0 0
      %1542 = vmatpush1.bf16.msra.mxu0 0
      %1543 = vmatprep.subr.bf16.mxu0 0
      %1544 = vmatpush1.bf16.msra.mxu0 0
      %1545 = vmatprep.subr.bf16.mxu0 0
      %1546 = vmatpush1.bf16.msra.mxu0 0
      %1547 = vmatprep.subr.bf16.mxu0 0
      %1548 = vmatpush1.bf16.msra.mxu0 0
      %1549 = vmatprep.subr.bf16.mxu0 0
      %1550 = vmatpush1.bf16.msra.mxu0 %v1533
      %1551 = vmatprep.subr.bf16.mxu0 0
      %1552 = vmatpush2.bf16.msra.mxu0 0
      %1553 = vmatprep.subr.bf16.mxu0 0
      %1554 = vmatpush2.bf16.msra.mxu0 0
      %1555 = vmatprep.subr.bf16.mxu0 0
      %1556 = vmatpush2.bf16.msra.mxu0 0
      %1557 = vmatprep.subr.bf16.mxu0 0
      %1558 = vmatpush2.bf16.msra.mxu0 0
      %1559 = vmatprep.subr.bf16.mxu0 0
      %1560 = vmatpush2.bf16.msra.mxu0 0
      %1561 = vmatprep.subr.bf16.mxu0 0
      %1562 = vmatpush2.bf16.msra.mxu0 0
      %1563 = vmatprep.subr.bf16.mxu0 0
      %1564 = vmatpush2.bf16.msra.mxu0 0
      %1565 = vmatprep.subr.bf16.mxu0 0
      %1566 = vmatpush2.bf16.msra.mxu0 0
      %1567 = vmatprep.mubr.bf16.mxu0 0
      %1568 = vmatmul.mubr.bf16.gmra.mxu0 %v1530
      %v1569 = vpop.f32.mrf.mxu0
      %v1570 = vadd.f32 0.0, %v1569
      %v1571 = vpop.f32.mrf.mxu0
      %v1572 = vpop.f32.mrf.mxu0
      %v1573 = vadd.f32 0.0, %v1572
      %v1574 = vpop.f32.mrf.mxu0
      %1575 = vdwg.mxu0
      %v1576 = vadd.f32 %v1398, %v1570
      %v1577 = vadd.f32 %v1401, %v1573
      %1578 = vrot.lane.b32.xlu0 %v1058, 104
      %v1579 = vpop.permute.xlu0 %1578
      %1580 = vrot.lane.b32.xlu0 %v1059, 104
      %v1581 = vpop.permute.xlu0 %1580
      %v1583 = vsel %vm1061, %v1579, 0
      %v1586 = vsel %vm1061, %v1581, 0
      %1588 = vmatprep.subr.bf16.mxu0 0
      %1589 = vmatpush1.bf16.xpose.msra.mxu0 0
      %1590 = vmatprep.subr.bf16.mxu0 0
      %1591 = vmatpush1.bf16.xpose.msra.mxu0 0
      %1592 = vmatprep.subr.bf16.mxu0 0
      %1593 = vmatpush1.bf16.xpose.msra.mxu0 0
      %1594 = vmatprep.subr.bf16.mxu0 0
      %1595 = vmatpush1.bf16.xpose.msra.mxu0 0
      %1596 = vmatprep.subr.bf16.mxu0 0
      %1597 = vmatpush1.bf16.xpose.msra.mxu0 0
      %1598 = vmatprep.subr.bf16.mxu0 0
      %1599 = vmatpush1.bf16.xpose.msra.mxu0 0
      %1600 = vmatprep.subr.bf16.mxu0 0
      %1601 = vmatpush1.bf16.xpose.msra.mxu0 0
      %1602 = vmatprep.subr.bf16.mxu0 0
      %1603 = vmatpush1.bf16.xpose.msra.mxu0 %v1586
      %1604 = vmatprep.subr.bf16.mxu0 0
      %1605 = vmatpush2.bf16.xpose.msra.mxu0 0
      %1606 = vmatprep.subr.bf16.mxu0 0
      %1607 = vmatpush2.bf16.xpose.msra.mxu0 0
      %1608 = vmatprep.subr.bf16.mxu0 0
      %1609 = vmatpush2.bf16.xpose.msra.mxu0 0
      %1610 = vmatprep.subr.bf16.mxu0 0
      %1611 = vmatpush2.bf16.xpose.msra.mxu0 0
      %1612 = vmatprep.subr.bf16.mxu0 0
      %1613 = vmatpush2.bf16.xpose.msra.mxu0 0
      %1614 = vmatprep.subr.bf16.mxu0 0
      %1615 = vmatpush2.bf16.xpose.msra.mxu0 0
      %1616 = vmatprep.subr.bf16.mxu0 0
      %1617 = vmatpush2.bf16.xpose.msra.mxu0 0
      %1618 = vmatprep.subr.bf16.mxu0 0
      %1619 = vmatpush2.bf16.xpose.msra.mxu0 0
      %1620 = vmatprep.mubr.bf16.mxu0 0
      %1621 = vmatmul.mubr.bf16.gmra.mxu0 %v1583
      %v1622 = vpop.f32.mrf.mxu0
      %v1623 = vadd.f32 0.0, %v1622
      %v1624 = vpop.f32.mrf.mxu0
      %v1625 = vpop.f32.mrf.mxu0
      %v1626 = vadd.f32 0.0, %v1625
      %v1627 = vpop.f32.mrf.mxu0
      %1628 = vdwg.mxu0
      %v1629 = vsel %vm752, %v1623, -inf
      %v1630 = vsel %vm753, %v1626, -inf
      %v1631 = vsel %vm1111, %v1629, -inf
      %1632 = vmax.xlane.f32.xlu0 %v1631
      %v1633 = vpop.xlane.xlu0 %1632
      %v1634 = vsel %vm1111, %v1630, -inf
      %1635 = vmax.xlane.f32.xlu0 %v1634
      %v1636 = vpop.xlane.xlu0 %1635
      %v1637 = vsub.f32 %v1629, %v1633
      %v1638 = vsub.f32 %v1630, %v1636
      %v1639 = vmul.f32 %v1637, 1.442695
      %v1640 = vpow.pop %v1639
      %v1641 = vmul.f32 %v1638, 1.442695
      %v1642 = vpow.pop %v1641
      %v1643 = vsel %vm1111, %v1640, 0.0
      %1644 = vadd.xlane.f32.xlu0 %v1643
      %v1645 = vpop.xlane.xlu0 %1644
      %v1646 = vsel %vm1111, %v1642, 0.0
      %1647 = vadd.xlane.f32.xlu0 %v1646
      %v1648 = vpop.xlane.xlu0 %1647
      %v1649 = vrcp.pop %v1645
      %v1650 = vrcp.pop %v1648
      %v1651 = vmul.f32 %v1640, %v1649
      %v1652 = vmul.f32 %v1642, %v1650
      %v1653 = vpack.c.bf16 %v1652, %v1651
      %1654 = vrot.lane.b32.xlu0 %v1060, 104
      %v1655 = vpop.permute.xlu0 %1654
      %v1658 = vsel %vm1111, %v1653, 0
      %1660 = vmatprep.subr.bf16.mxu0 0
      %1661 = vmatpush1.bf16.msra.mxu0 0
      %1662 = vmatprep.subr.bf16.mxu0 0
      %1663 = vmatpush1.bf16.msra.mxu0 0
      %1664 = vmatprep.subr.bf16.mxu0 0
      %1665 = vmatpush1.bf16.msra.mxu0 0
      %1666 = vmatprep.subr.bf16.mxu0 0
      %1667 = vmatpush1.bf16.msra.mxu0 0
      %1668 = vmatprep.subr.bf16.mxu0 0
      %1669 = vmatpush1.bf16.msra.mxu0 0
      %1670 = vmatprep.subr.bf16.mxu0 0
      %1671 = vmatpush1.bf16.msra.mxu0 0
      %1672 = vmatprep.subr.bf16.mxu0 0
      %1673 = vmatpush1.bf16.msra.mxu0 0
      %1674 = vmatprep.subr.bf16.mxu0 0
      %1675 = vmatpush1.bf16.msra.mxu0 %v1655
      %1676 = vmatprep.subr.bf16.mxu0 0
      %1677 = vmatpush2.bf16.msra.mxu0 0
      %1678 = vmatprep.subr.bf16.mxu0 0
      %1679 = vmatpush2.bf16.msra.mxu0 0
      %1680 = vmatprep.subr.bf16.mxu0 0
      %1681 = vmatpush2.bf16.msra.mxu0 0
      %1682 = vmatprep.subr.bf16.mxu0 0
      %1683 = vmatpush2.bf16.msra.mxu0 0
      %1684 = vmatprep.subr.bf16.mxu0 0
      %1685 = vmatpush2.bf16.msra.mxu0 0
      %1686 = vmatprep.subr.bf16.mxu0 0
      %1687 = vmatpush2.bf16.msra.mxu0 0
      %1688 = vmatprep.subr.bf16.mxu0 0
      %1689 = vmatpush2.bf16.msra.mxu0 0
      %1690 = vmatprep.subr.bf16.mxu0 0
      %1691 = vmatpush2.bf16.msra.mxu0 0
      %1692 = vmatprep.mubr.bf16.mxu0 0
      %1693 = vmatmul.mubr.bf16.gmra.mxu0 %v1658
      %v1694 = vpop.f32.mrf.mxu0
      %v1695 = vadd.f32 0.0, %v1694
      %v1696 = vpop.f32.mrf.mxu0
      %v1697 = vpop.f32.mrf.mxu0
      %v1698 = vadd.f32 0.0, %v1697
      %v1699 = vpop.f32.mrf.mxu0
      %1700 = vdwg.mxu0
      %v1701 = vpack.c.bf16 %v1698, %v1695
      %v1702 = vld [vmem:[%s700 + $0xc] sm:$0xf]
      %v1704 = vsel %vm1061, %v1701, 0
      %v1707 = vsel %vm1312, %v1702, 0
      %1709 = vmatprep.subr.bf16.mxu0 0
      %1710 = vmatpush1.bf16.msra.mxu0 0
      %1711 = vmatprep.subr.bf16.mxu0 0
      %1712 = vmatpush1.bf16.msra.mxu0 0
      %1713 = vmatprep.subr.bf16.mxu0 0
      %1714 = vmatpush1.bf16.msra.mxu0 0
      %1715 = vmatprep.subr.bf16.mxu0 0
      %1716 = vmatpush1.bf16.msra.mxu0 0
      %1717 = vmatprep.subr.bf16.mxu0 0
      %1718 = vmatpush1.bf16.msra.mxu0 0
      %1719 = vmatprep.subr.bf16.mxu0 0
      %1720 = vmatpush1.bf16.msra.mxu0 0
      %1721 = vmatprep.subr.bf16.mxu0 0
      %1722 = vmatpush1.bf16.msra.mxu0 0
      %1723 = vmatprep.subr.bf16.mxu0 0
      %1724 = vmatpush1.bf16.msra.mxu0 %v1707
      %1725 = vmatprep.subr.bf16.mxu0 0
      %1726 = vmatpush2.bf16.msra.mxu0 0
      %1727 = vmatprep.subr.bf16.mxu0 0
      %1728 = vmatpush2.bf16.msra.mxu0 0
      %1729 = vmatprep.subr.bf16.mxu0 0
      %1730 = vmatpush2.bf16.msra.mxu0 0
      %1731 = vmatprep.subr.bf16.mxu0 0
      %1732 = vmatpush2.bf16.msra.mxu0 0
      %1733 = vmatprep.subr.bf16.mxu0 0
      %1734 = vmatpush2.bf16.msra.mxu0 0
      %1735 = vmatprep.subr.bf16.mxu0 0
      %1736 = vmatpush2.bf16.msra.mxu0 0
      %1737 = vmatprep.subr.bf16.mxu0 0
      %1738 = vmatpush2.bf16.msra.mxu0 0
      %1739 = vmatprep.subr.bf16.mxu0 0
      %1740 = vmatpush2.bf16.msra.mxu0 0
      %1741 = vmatprep.mubr.bf16.mxu0 0
      %1742 = vmatmul.mubr.bf16.gmra.mxu0 %v1704
      %v1743 = vpop.f32.mrf.mxu0
      %v1744 = vadd.f32 0.0, %v1743
      %v1745 = vpop.f32.mrf.mxu0
      %v1746 = vpop.f32.mrf.mxu0
      %v1747 = vadd.f32 0.0, %v1746
      %v1748 = vpop.f32.mrf.mxu0
      %1749 = vdwg.mxu0
      %v1750 = vadd.f32 %v1576, %v1744
      %v1751 = vadd.f32 %v1577, %v1747
      %v1752 = vadd.f32 %v741, %v1750
      %v1753 = vadd.f32 %v742, %v1751
      %v1754 = vld [vmem:[%s703] sm:$0x1]
      %v1756 = vlaneseq
      %v1757 = vshrl.u32 %v1756, 7
      %v1758 = vsub.s32 0, %v1757
      %v1759 = vrot.slane %v1754, %v1758
      %v1761 = vadd.f32 %v1752, %v1759
      %v1762 = vadd.f32 %v1753, %v1759
      %v1763 = vld [vmem:[%s706] sm:$0x1]
      %v1764 = vld [vmem:[%s709] sm:$0x1]
      %1765 = vadd.xlane.f32.xlu0 %v1761
      %v1766 = vpop.xlane.xlu0 %1765
      %1767 = vadd.xlane.f32.xlu0 %v1762
      %v1768 = vpop.xlane.xlu0 %1767
      %v1769 = vmul.f32 %v1766, 0.03125
      %v1770 = vmul.f32 %v1768, 0.03125
      %v1771 = vsub.f32 %v1761, %v1769
      %v1772 = vsub.f32 %v1762, %v1770
      %v1773 = vsel %vm745, %v1771, 0.0
      %v1774 = vsel %vm745, %v1772, 0.0
      %v1775 = vmul.f32 %v1773, %v1773
      %v1776 = vmul.f32 %v1774, %v1774
      %1777 = vadd.xlane.f32.xlu0 %v1775
      %v1778 = vpop.xlane.xlu0 %1777
      %1779 = vadd.xlane.f32.xlu0 %v1776
      %v1780 = vpop.xlane.xlu0 %1779
      %v1781 = vmul.f32 %v1778, 0.03125
      %v1782 = vmul.f32 %v1780, 0.03125
      %v1783 = vadd.f32 %v1781, 1e-05
      %v1784 = vadd.f32 %v1782, 1e-05
      %v1785 = vrsqrt.pop %v1783
      %v1786 = vrsqrt.pop %v1784
      %v1787 = vmul.f32 %v1773, %v1785
      %v1788 = vmul.f32 %v1774, %v1786
      %v1790 = vlaneseq
      %v1791 = vshrl.u32 %v1790, 7
      %v1792 = vsub.s32 0, %v1791
      %v1793 = vrot.slane %v1763, %v1792
      %v1795 = vmul.f32 %v1787, %v1793
      %v1796 = vmul.f32 %v1788, %v1793
      %v1798 = vlaneseq
      %v1799 = vshrl.u32 %v1798, 7
      %v1800 = vsub.s32 0, %v1799
      %v1801 = vrot.slane %v1764, %v1800
      %v1803 = vadd.f32 %v1795, %v1801
      %v1804 = vadd.f32 %v1796, %v1801
      %v1805 = vpack.c.bf16 %v1804, %v1803
      %v1806 = vld [vmem:[%s714] sm:$0xf]
      %v1807 = vld [vmem:[%s714 + $0x4] sm:$0xf]
      %v1808 = vld [vmem:[%s714 + $0x8] sm:$0xf]
      %v1809 = vld [vmem:[%s714 + $0xc] sm:$0xf]
      %v1810 = vld [vmem:[%s714 + $0x10] sm:$0xf]
      %v1811 = vld [vmem:[%s714 + $0x14] sm:$0xf]
      %v1812 = vld [vmem:[%s714 + $0x18] sm:$0xf]
      %v1813 = vld [vmem:[%s714 + $0x1c] sm:$0xf]
      %v1814 = vld [vmem:[%s714 + $0x20] sm:$0xf]
      %v1815 = vld [vmem:[%s714 + $0x24] sm:$0xf]
      %v1816 = vld [vmem:[%s714 + $0x28] sm:$0xf]
      %v1817 = vld [vmem:[%s714 + $0x2c] sm:$0xf]
      %v1818 = vld [vmem:[%s714 + $0x30] sm:$0xf]
      %v1819 = vld [vmem:[%s714 + $0x34] sm:$0xf]
      %v1820 = vld [vmem:[%s714 + $0x38] sm:$0xf]
      %v1821 = vld [vmem:[%s714 + $0x3c] sm:$0xf]
      %v1822 = vld [vmem:[%s717] sm:$0x1]
      %v1824 = vlaneseq
      %v1825 = vshrl.u32 %v1824, 7
      %v1826 = vsub.s32 0, %v1825
      %v1827 = vrot.slane %v1822, %v1826
      %v1845 = vunpack.c.l.b16 %v1806
      %v1846 = vunpack.c.l.b16 %v1807
      %v1847 = vunpack.c.l.b16 %v1808
      %v1848 = vunpack.c.l.b16 %v1809
      %v1849 = vunpack.c.l.b16 %v1810
      %v1850 = vunpack.c.l.b16 %v1811
      %v1851 = vunpack.c.l.b16 %v1812
      %v1852 = vunpack.c.l.b16 %v1813
      %v1853 = vunpack.c.l.b16 %v1814
      %v1854 = vunpack.c.l.b16 %v1815
      %v1855 = vunpack.c.l.b16 %v1816
      %v1856 = vunpack.c.l.b16 %v1817
      %v1857 = vunpack.c.l.b16 %v1818
      %v1858 = vunpack.c.l.b16 %v1819
      %v1859 = vunpack.c.l.b16 %v1820
      %v1860 = vunpack.c.l.b16 %v1821
      %v1861 = vpack.c.b16 %v1846, %v1845
      %v1862 = vpack.c.b16 %v1848, %v1847
      %v1863 = vpack.c.b16 %v1850, %v1849
      %v1864 = vpack.c.b16 %v1852, %v1851
      %v1865 = vpack.c.b16 %v1854, %v1853
      %v1866 = vpack.c.b16 %v1856, %v1855
      %v1867 = vpack.c.b16 %v1858, %v1857
      %v1868 = vpack.c.b16 %v1860, %v1859
      %1877 = vmatprep.subr.bf16.mxu0 0
      %1878 = vmatpush1.bf16.msra.mxu0 %v1868
      %1879 = vmatprep.subr.bf16.mxu0 0
      %1880 = vmatpush1.bf16.msra.mxu0 %v1867
      %1881 = vmatprep.subr.bf16.mxu0 0
      %1882 = vmatpush1.bf16.msra.mxu0 %v1866
      %1883 = vmatprep.subr.bf16.mxu0 0
      %1884 = vmatpush1.bf16.msra.mxu0 %v1865
      %1885 = vmatprep.subr.bf16.mxu0 0
      %1886 = vmatpush1.bf16.msra.mxu0 %v1864
      %1887 = vmatprep.subr.bf16.mxu0 0
      %1888 = vmatpush1.bf16.msra.mxu0 %v1863
      %1889 = vmatprep.subr.bf16.mxu0 0
      %1890 = vmatpush1.bf16.msra.mxu0 %v1862
      %1891 = vmatprep.subr.bf16.mxu0 0
      %1892 = vmatpush1.bf16.msra.mxu0 %v1861
      %1893 = vmatprep.subr.bf16.mxu0 0
      %1894 = vmatpush2.bf16.msra.mxu0 0
      %1895 = vmatprep.subr.bf16.mxu0 0
      %1896 = vmatpush2.bf16.msra.mxu0 0
      %1897 = vmatprep.subr.bf16.mxu0 0
      %1898 = vmatpush2.bf16.msra.mxu0 0
      %1899 = vmatprep.subr.bf16.mxu0 0
      %1900 = vmatpush2.bf16.msra.mxu0 0
      %1901 = vmatprep.subr.bf16.mxu0 0
      %1902 = vmatpush2.bf16.msra.mxu0 0
      %1903 = vmatprep.subr.bf16.mxu0 0
      %1904 = vmatpush2.bf16.msra.mxu0 0
      %1905 = vmatprep.subr.bf16.mxu0 0
      %1906 = vmatpush2.bf16.msra.mxu0 0
      %1907 = vmatprep.subr.bf16.mxu0 0
      %1908 = vmatpush2.bf16.msra.mxu0 0
      %1909 = vmatprep.mubr.bf16.mxu0 0
      %1910 = vmatmul.mubr.bf16.gmra.mxu0 %v1805
      %v1911 = vpop.f32.mrf.mxu0
      %v1912 = vadd.f32 %v1827, %v1911
      %v1913 = vpop.f32.mrf.mxu0
      %v1914 = vpop.f32.mrf.mxu0
      %v1915 = vadd.f32 %v1827, %v1914
      %v1916 = vpop.f32.mrf.mxu0
      %1917 = vdwg.mxu0
      %v1918 = vmul.f32 %v1912, 0.5
      %v1919 = vmul.f32 %v1915, 0.5
      %v1920 = vmul.f32 %v1912, 0.044715
      %v1921 = vmul.f32 %v1915, 0.044715
      %v1922 = vmul.f32 %v1920, %v1912
      %v1923 = vmul.f32 %v1921, %v1915
      %v1924 = vmul.f32 %v1922, %v1912
      %v1925 = vmul.f32 %v1923, %v1915
      %v1926 = vadd.f32 %v1912, %v1924
      %v1927 = vadd.f32 %v1915, %v1925
      %v1928 = vmul.f32 %v1926, 0.7978846
      %v1929 = vmul.f32 %v1927, 0.7978846
      %v1930 = vtanh.pop %v1928
      %v1931 = vtanh.pop %v1929
      %v1932 = vadd.f32 %v1930, 1.0
      %v1933 = vadd.f32 %v1931, 1.0
      %v1934 = vmul.f32 %v1918, %v1932
      %v1935 = vmul.f32 %v1919, %v1933
      %v1936 = vpack.c.bf16 %v1935, %v1934
      %v1937 = vld [vmem:[%s722] sm:$0xf]
      %v1938 = vld [vmem:[%s722 + $0x4] sm:$0xf]
      %v1939 = vld [vmem:[%s722 + $0x8] sm:$0xf]
      %v1940 = vld [vmem:[%s722 + $0xc] sm:$0xf]
      %v1941 = vld [vmem:[%s722 + $0x10] sm:$0xf]
      %v1942 = vld [vmem:[%s722 + $0x14] sm:$0xf]
      %v1943 = vld [vmem:[%s722 + $0x18] sm:$0xf]
      %v1944 = vld [vmem:[%s722 + $0x1c] sm:$0xf]
      %v1945 = vld [vmem:[%s722 + $0x20] sm:$0xf]
      %v1946 = vld [vmem:[%s722 + $0x24] sm:$0xf]
      %v1947 = vld [vmem:[%s722 + $0x28] sm:$0xf]
      %v1948 = vld [vmem:[%s722 + $0x2c] sm:$0xf]
      %v1949 = vld [vmem:[%s722 + $0x30] sm:$0xf]
      %v1950 = vld [vmem:[%s722 + $0x34] sm:$0xf]
      %v1951 = vld [vmem:[%s722 + $0x38] sm:$0xf]
      %v1952 = vld [vmem:[%s722 + $0x3c] sm:$0xf]
      %v1953 = vld [vmem:[%s725] sm:$0x1]
      %v1955 = vlaneseq
      %v1956 = vshrl.u32 %v1955, 7
      %v1957 = vsub.s32 0, %v1956
      %v1958 = vrot.slane %v1953, %v1957
      %v1976 = vunpack.c.l.b16 %v1937
      %v1977 = vunpack.c.l.b16 %v1938
      %v1978 = vunpack.c.l.b16 %v1939
      %v1979 = vunpack.c.l.b16 %v1940
      %v1980 = vunpack.c.l.b16 %v1941
      %v1981 = vunpack.c.l.b16 %v1942
      %v1982 = vunpack.c.l.b16 %v1943
      %v1983 = vunpack.c.l.b16 %v1944
      %v1984 = vunpack.c.l.b16 %v1945
      %v1985 = vunpack.c.l.b16 %v1946
      %v1986 = vunpack.c.l.b16 %v1947
      %v1987 = vunpack.c.l.b16 %v1948
      %v1988 = vunpack.c.l.b16 %v1949
      %v1989 = vunpack.c.l.b16 %v1950
      %v1990 = vunpack.c.l.b16 %v1951
      %v1991 = vunpack.c.l.b16 %v1952
      %v1992 = vpack.c.b16 %v1977, %v1976
      %v1993 = vpack.c.b16 %v1979, %v1978
      %v1994 = vpack.c.b16 %v1981, %v1980
      %v1995 = vpack.c.b16 %v1983, %v1982
      %v1996 = vpack.c.b16 %v1985, %v1984
      %v1997 = vpack.c.b16 %v1987, %v1986
      %v1998 = vpack.c.b16 %v1989, %v1988
      %v1999 = vpack.c.b16 %v1991, %v1990
      %2008 = vmatprep.subr.bf16.mxu0 0
      %2009 = vmatpush1.bf16.msra.mxu0 %v1999
      %2010 = vmatprep.subr.bf16.mxu0 0
      %2011 = vmatpush1.bf16.msra.mxu0 %v1998
      %2012 = vmatprep.subr.bf16.mxu0 0
      %2013 = vmatpush1.bf16.msra.mxu0 %v1997
      %2014 = vmatprep.subr.bf16.mxu0 0
      %2015 = vmatpush1.bf16.msra.mxu0 %v1996
      %2016 = vmatprep.subr.bf16.mxu0 0
      %2017 = vmatpush1.bf16.msra.mxu0 %v1995
      %2018 = vmatprep.subr.bf16.mxu0 0
      %2019 = vmatpush1.bf16.msra.mxu0 %v1994
      %2020 = vmatprep.subr.bf16.mxu0 0
      %2021 = vmatpush1.bf16.msra.mxu0 %v1993
      %2022 = vmatprep.subr.bf16.mxu0 0
      %2023 = vmatpush1.bf16.msra.mxu0 %v1992
      %2024 = vmatprep.subr.bf16.mxu0 0
      %2025 = vmatpush2.bf16.msra.mxu0 0
      %2026 = vmatprep.subr.bf16.mxu0 0
      %2027 = vmatpush2.bf16.msra.mxu0 0
      %2028 = vmatprep.subr.bf16.mxu0 0
      %2029 = vmatpush2.bf16.msra.mxu0 0
      %2030 = vmatprep.subr.bf16.mxu0 0
      %2031 = vmatpush2.bf16.msra.mxu0 0
      %2032 = vmatprep.subr.bf16.mxu0 0
      %2033 = vmatpush2.bf16.msra.mxu0 0
      %2034 = vmatprep.subr.bf16.mxu0 0
      %2035 = vmatpush2.bf16.msra.mxu0 0
      %2036 = vmatprep.subr.bf16.mxu0 0
      %2037 = vmatpush2.bf16.msra.mxu0 0
      %2038 = vmatprep.subr.bf16.mxu0 0
      %2039 = vmatpush2.bf16.msra.mxu0 0
      %2040 = vmatprep.mubr.bf16.mxu0 0
      %2041 = vmatmul.mubr.bf16.gmra.mxu0 %v1936
      %v2042 = vpop.f32.mrf.mxu0
      %v2043 = vadd.f32 %v1958, %v2042
      %v2044 = vpop.f32.mrf.mxu0
      %v2045 = vpop.f32.mrf.mxu0
      %v2046 = vadd.f32 %v1958, %v2045
      %v2047 = vpop.f32.mrf.mxu0
      %2048 = vdwg.mxu0
      %v2049 = vadd.f32 %v1761, %v2043
      %v2050 = vadd.f32 %v1762, %v2046
      %2051 = vst [vmem:[#allocation2] sm:$0xff] %v2049
      %2052 = vst [vmem:[#allocation2 + $0x8] sm:$0xff] %v2050
      %p2053 = scmp.eq.s32.totalorder %s32, 1
      // Predicated region
      $region89: #{gpt_forward.3} parent=83 // pred_check
        %p2054 = pneg %p2053
      $region90: #{gpt_forward.3} parent=83 // pred_check_branch
        %2056 = sbr.rel (%p2054) target = $region92
      $region91: #{gpt_forward.3} parent=83 // pred_region
        %v2057 = vld [vmem:[%s13] sm:$0x1]
        %v2058 = vld [vmem:[%s14] sm:$0x1]
        %2059 = vadd.xlane.f32.xlu0 %v2049
        %v2060 = vpop.xlane.xlu0 %2059
        %2061 = vadd.xlane.f32.xlu0 %v2050
        %v2062 = vpop.xlane.xlu0 %2061
        %v2063 = vmul.f32 %v2060, 0.03125
        %v2064 = vmul.f32 %v2062, 0.03125
        %v2065 = vsub.f32 %v2049, %v2063
        %v2066 = vsub.f32 %v2050, %v2064
        %v2067 = vsel %vm745, %v2065, 0.0
        %v2068 = vsel %vm745, %v2066, 0.0
        %v2069 = vmul.f32 %v2067, %v2067
        %v2070 = vmul.f32 %v2068, %v2068
        %2071 = vadd.xlane.f32.xlu0 %v2069
        %v2072 = vpop.xlane.xlu0 %2071
        %2073 = vadd.xlane.f32.xlu0 %v2070
        %v2074 = vpop.xlane.xlu0 %2073
        %v2075 = vmul.f32 %v2072, 0.03125
        %v2076 = vmul.f32 %v2074, 0.03125
        %v2077 = vadd.f32 %v2075, 1e-05
        %v2078 = vadd.f32 %v2076, 1e-05
        %v2079 = vrsqrt.pop %v2077
        %v2080 = vrsqrt.pop %v2078
        %v2081 = vmul.f32 %v2067, %v2079
        %v2082 = vmul.f32 %v2068, %v2080
        %v2084 = vlaneseq
        %v2085 = vshrl.u32 %v2084, 7
        %v2086 = vsub.s32 0, %v2085
        %v2087 = vrot.slane %v2057, %v2086
        %v2089 = vmul.f32 %v2081, %v2087
        %v2090 = vmul.f32 %v2082, %v2087
        %v2092 = vlaneseq
        %v2093 = vshrl.u32 %v2092, 7
        %v2094 = vsub.s32 0, %v2093
        %v2095 = vrot.slane %v2058, %v2094
        %v2097 = vadd.f32 %v2089, %v2095
        %v2098 = vadd.f32 %v2090, %v2095
        %v2099 = vpack.c.bf16 %v2098, %v2097
        %v2100 = vld [vmem:[%s15] sm:$0xf]
        %v2101 = vld [vmem:[%s15 + $0x4] sm:$0xf]
        %v2102 = vld [vmem:[%s15 + $0x8] sm:$0xf]
        %v2103 = vld [vmem:[%s15 + $0xc] sm:$0xf]
        %v2104 = vld [vmem:[%s15 + $0x10] sm:$0xf]
        %v2105 = vld [vmem:[%s15 + $0x14] sm:$0xf]
        %v2106 = vld [vmem:[%s15 + $0x18] sm:$0xf]
        %v2107 = vld [vmem:[%s15 + $0x1c] sm:$0xf]
        %v2108 = vld [vmem:[%s15 + $0x20] sm:$0xf]
        %v2109 = vld [vmem:[%s15 + $0x24] sm:$0xf]
        %v2110 = vld [vmem:[%s15 + $0x28] sm:$0xf]
        %v2111 = vld [vmem:[%s15 + $0x2c] sm:$0xf]
        %v2112 = vld [vmem:[%s15 + $0x30] sm:$0xf]
        %v2113 = vld [vmem:[%s15 + $0x34] sm:$0xf]
        %v2114 = vld [vmem:[%s15 + $0x38] sm:$0xf]
        %v2115 = vld [vmem:[%s15 + $0x3c] sm:$0xf]
        %v2132 = vunpack.c.l.b16 %v2100
        %v2133 = vunpack.c.l.b16 %v2101
        %v2134 = vunpack.c.l.b16 %v2102
        %v2135 = vunpack.c.l.b16 %v2103
        %v2136 = vunpack.c.l.b16 %v2104
        %v2137 = vunpack.c.l.b16 %v2105
        %v2138 = vunpack.c.l.b16 %v2106
        %v2139 = vunpack.c.l.b16 %v2107
        %v2140 = vunpack.c.l.b16 %v2108
        %v2141 = vunpack.c.l.b16 %v2109
        %v2142 = vunpack.c.l.b16 %v2110
        %v2143 = vunpack.c.l.b16 %v2111
        %v2144 = vunpack.c.l.b16 %v2112
        %v2145 = vunpack.c.l.b16 %v2113
        %v2146 = vunpack.c.l.b16 %v2114
        %v2147 = vunpack.c.l.b16 %v2115
        %v2148 = vpack.c.b16 %v2133, %v2132
        %v2149 = vpack.c.b16 %v2135, %v2134
        %v2150 = vpack.c.b16 %v2137, %v2136
        %v2151 = vpack.c.b16 %v2139, %v2138
        %v2152 = vpack.c.b16 %v2141, %v2140
        %v2153 = vpack.c.b16 %v2143, %v2142
        %v2154 = vpack.c.b16 %v2145, %v2144
        %v2155 = vpack.c.b16 %v2147, %v2146
        %2164 = vmatprep.subr.bf16.mxu0 0
        %2165 = vmatpush1.bf16.msra.mxu0 %v2155
        %2166 = vmatprep.subr.bf16.mxu0 0
        %2167 = vmatpush1.bf16.msra.mxu0 %v2154
        %2168 = vmatprep.subr.bf16.mxu0 0
        %2169 = vmatpush1.bf16.msra.mxu0 %v2153
        %2170 = vmatprep.subr.bf16.mxu0 0
        %2171 = vmatpush1.bf16.msra.mxu0 %v2152
        %2172 = vmatprep.subr.bf16.mxu0 0
        %2173 = vmatpush1.bf16.msra.mxu0 %v2151
        %2174 = vmatprep.subr.bf16.mxu0 0
        %2175 = vmatpush1.bf16.msra.mxu0 %v2150
        %2176 = vmatprep.subr.bf16.mxu0 0
        %2177 = vmatpush1.bf16.msra.mxu0 %v2149
        %2178 = vmatprep.subr.bf16.mxu0 0
        %2179 = vmatpush1.bf16.msra.mxu0 %v2148
        %2180 = vmatprep.subr.bf16.mxu0 0
        %2181 = vmatpush2.bf16.msra.mxu0 0
        %2182 = vmatprep.subr.bf16.mxu0 0
        %2183 = vmatpush2.bf16.msra.mxu0 0
        %2184 = vmatprep.subr.bf16.mxu0 0
        %2185 = vmatpush2.bf16.msra.mxu0 0
        %2186 = vmatprep.subr.bf16.mxu0 0
        %2187 = vmatpush2.bf16.msra.mxu0 0
        %2188 = vmatprep.subr.bf16.mxu0 0
        %2189 = vmatpush2.bf16.msra.mxu0 0
        %2190 = vmatprep.subr.bf16.mxu0 0
        %2191 = vmatpush2.bf16.msra.mxu0 0
        %2192 = vmatprep.subr.bf16.mxu0 0
        %2193 = vmatpush2.bf16.msra.mxu0 0
        %2194 = vmatprep.subr.bf16.mxu0 0
        %2195 = vmatpush2.bf16.msra.mxu0 0
        %2196 = vmatprep.mubr.bf16.mxu0 0
        %2197 = vmatmul.mubr.bf16.gmra.mxu0 %v2099
        %v2198 = vpop.f32.mrf.mxu0
        %v2199 = vadd.f32 0.0, %v2198
        %v2200 = vpop.f32.mrf.mxu0
        %v2201 = vpop.f32.mrf.mxu0
        %v2202 = vadd.f32 0.0, %v2201
        %v2203 = vpop.f32.mrf.mxu0
        %2204 = vdwg.mxu0
        %2205 = vst [vmem:[%s730] sm:$0xff] %v2199
        %2206 = vst [vmem:[%s730 + $0x8] sm:$0xff] %v2202
      $region92: #{gpt_forward.3} parent=83 // pred_fallthru
        _
      %s2207 = smul.u32 2, %s31
      %p2208 = scmp.lt.s32.totalorder %s2207, 3
      %s2209 = scalar_select %p2208, %s2207, 3
      %s2210 = smul.addr %s2209, 8
      %s2211 = scalar_lea.vmem %s16, %s2210
      // Predicated region
      $region93: #{gpt_forward.3} parent=83 // pred_check
        %p2212 = pneg %p458
      $region94: #{gpt_forward.3} parent=83 // pred_check_branch
        %2214 = sbr.rel (%p2212) target = $region96
      $region95: #{gpt_forward.3} parent=83 // pred_region
        %s2215 = smul.u32 2, %s31
      $region96: #{gpt_forward.3} parent=83 // pred_fallthru
        _
    $region84: #{gpt_forward.3} parent=5 // pred_fallthru
      _
    %p2216 = scmp.le.s32.totalorder 2, %s22
    // Predicated region
    $region97: #{gpt_forward.3} parent=5 // pred_check
      %p2217 = pneg %p2216
    $region98: #{gpt_forward.3} parent=5 // pred_check_branch
      %2219 = sbr.rel (%p2217) target = $region100
    $region99: #{gpt_forward.3} parent=5 // pred_region
      %s2220 = ssub.s32 %s22, 2
      // Predicated region
      $region101: #{gpt_forward.3} parent=99 // pred_check
        %p2221 = pneg %p464
      $region102: #{gpt_forward.3} parent=99 // pred_check_branch
        %2223 = sbr.rel (%p2221) target = $region104
      $region103: #{gpt_forward.3} parent=99 // pred_region
        %s2224 = smul.u32 2, %s33
        %p2225 = scmp.lt.s32.totalorder %s2224, 3
        %s2226 = scalar_select %p2225, %s2224, 3
        %s2227 = smul.addr %s2226, 8
        %s2228 = scalar_lea.vmem %s16, %s2227
      $region104: #{gpt_forward.3} parent=99 // pred_fallthru
        _
    $region100: #{gpt_forward.3} parent=5 // pred_fallthru
      _
  $region6: #{gpt_forward.3} parent=0 // loop_footer
    %s26 = sadd.s32 1, %s22
  $region7: #{gpt_forward.3} parent=0 // loop_footer_branch
    %21 = sbr.rel target = $region3
  $region8: #{gpt_forward.3} parent=0 // loop_exit
    _

</llo_original>
